<compile_context>
chip_gen: v7x
topology: tpu7x:2x2x1
jax: 0.10.0
libtpu: 0.0.40
codegen_flags: <defaults>
</compile_context>

<pallas_src>
import math
import jax
import jax.numpy as jnp
from jax.experimental import pallas as pl
from jax.experimental.pallas import tpu as pltpu


_PARALLEL_1D = pltpu.CompilerParams(dimension_semantics=("parallel",))


# ---------------------------------------------------------------------------
# In-kernel helpers
# ---------------------------------------------------------------------------
def _erf(x):
    # Abramowitz & Stegun 7.1.26 rational approximation (|err| < 1.5e-7);
    # uses only exp / mul / add / where so it always lowers on Mosaic.
    a1, a2, a3, a4, a5 = 0.254829592, -0.284496736, 1.421413741, -1.453152027, 1.061405429
    p = 0.3275911
    sgn = jnp.where(x >= 0.0, 1.0, -1.0)
    ax = jnp.abs(x)
    t = 1.0 / (1.0 + p * ax)
    poly = ((((a5 * t + a4) * t + a3) * t + a2) * t + a1) * t
    return sgn * (1.0 - poly * jnp.exp(-ax * ax))


def _gelu_exact(x):
    # Matches torch.nn.functional.gelu (erf form) to ~1e-7.
    return 0.5 * x * (1.0 + _erf(x * 0.7071067811865476))


# ---------------------------------------------------------------------------
# Pallas kernels (channels on sublanes, pixels on lanes -> lane-dense stores)
# ---------------------------------------------------------------------------
def _fc0_kernel(x_ref, w_ref, b_ref, o_ref):
    # x: (1, Cin, S), w: (Cout, Cin), b: (Cout, 1) -> o: (1, Cout, S)
    o_ref[0] = (jnp.dot(w_ref[...], x_ref[0], preferred_element_type=jnp.float32)
                + b_ref[...])


def _layer_kernel_gelu(h_ref, s_ref, w_ref, b_ref, o_ref):
    # gelu( spectral_branch + W @ h + b ), all (C, S) tiles
    y = (jnp.dot(w_ref[...], h_ref[0], preferred_element_type=jnp.float32)
         + b_ref[...] + s_ref[0])
    o_ref[0] = _gelu_exact(y)


def _layer_kernel_nogelu(h_ref, s_ref, w_ref, b_ref, o_ref):
    # last Fourier layer: no activation
    o_ref[0] = (jnp.dot(w_ref[...], h_ref[0], preferred_element_type=jnp.float32)
                + b_ref[...] + s_ref[0])


def _head_kernel(x_ref, w1_ref, b1_ref, w2_ref, b2_ref, o_ref):
    # fc1 -> gelu -> fc2 fused; output (1, S) is lane-dense.
    h = (jnp.dot(w1_ref[...], x_ref[0], preferred_element_type=jnp.float32)
         + b1_ref[...])
    h = _gelu_exact(h)
    o_ref[0] = (jnp.dot(w2_ref[...], h, preferred_element_type=jnp.float32)
                + b2_ref[...])


def _spectral_kernel(x_ref, w_ref, o_ref):
    # Stacked complex channel mix: one batched MXU contraction with the mode
    # index m as the batch dim; w holds [[wr, wi], [-wi, wr]] per mode.
    o_ref[...] = jnp.einsum("mbi,mio->mbo", x_ref[...], w_ref[...],
                            preferred_element_type=jnp.float32)


# ---------------------------------------------------------------------------
# pallas_call wrappers
# ---------------------------------------------------------------------------
def _fc0(x, w, b):
    B, cin, S = x.shape
    cout = w.shape[0]
    return pl.pallas_call(
        _fc0_kernel,
        grid=(B,),
        in_specs=[pl.BlockSpec((1, cin, S), lambda i: (i, 0, 0)),
                  pl.BlockSpec((cout, cin), lambda i: (0, 0)),
                  pl.BlockSpec((cout, 1), lambda i: (0, 0))],
        out_specs=pl.BlockSpec((1, cout, S), lambda i: (i, 0, 0)),
        out_shape=jax.ShapeDtypeStruct((B, cout, S), jnp.float32),
        compiler_params=_PARALLEL_1D,
    )(x, w, b)


def _fourier_layer(h, s, w, b, apply_gelu):
    B, c, S = h.shape
    kern = _layer_kernel_gelu if apply_gelu else _layer_kernel_nogelu
    return pl.pallas_call(
        kern,
        grid=(B,),
        in_specs=[pl.BlockSpec((1, c, S), lambda i: (i, 0, 0)),
                  pl.BlockSpec((1, c, S), lambda i: (i, 0, 0)),
                  pl.BlockSpec((c, c), lambda i: (0, 0)),
                  pl.BlockSpec((c, 1), lambda i: (0, 0))],
        out_specs=pl.BlockSpec((1, c, S), lambda i: (i, 0, 0)),
        out_shape=jax.ShapeDtypeStruct((B, c, S), jnp.float32),
        compiler_params=_PARALLEL_1D,
    )(h, s, w, b)


def _head(x, w1, b1, w2, b2):
    B, c, S = x.shape
    hdim = w1.shape[0]
    return pl.pallas_call(
        _head_kernel,
        grid=(B,),
        in_specs=[pl.BlockSpec((1, c, S), lambda i: (i, 0, 0)),
                  pl.BlockSpec((hdim, c), lambda i: (0, 0)),
                  pl.BlockSpec((hdim, 1), lambda i: (0, 0)),
                  pl.BlockSpec((1, hdim), lambda i: (0, 0)),
                  pl.BlockSpec((1, 1), lambda i: (0, 0))],
        out_specs=pl.BlockSpec((1, 1, S), lambda i: (i, 0, 0)),
        out_shape=jax.ShapeDtypeStruct((B, 1, S), jnp.float32),
        compiler_params=_PARALLEL_1D,
    )(x, w1, b1, w2, b2)


def _spectral_mix(xs, ws):
    # xs: (M, B, 2Ci) stacked [real | imag];  ws: (M, 2Ci, 2Co) -> (M, B, 2Co)
    M, B, K = xs.shape
    N = ws.shape[2]
    mb = M // 2 if (M % 2 == 0 and M >= 2) else M   # >= 2 grid steps for v7x
    return pl.pallas_call(
        _spectral_kernel,
        grid=(M // mb,),
        in_specs=[pl.BlockSpec((mb, B, K), lambda i: (i, 0, 0)),
                  pl.BlockSpec((mb, K, N), lambda i: (i, 0, 0))],
        out_specs=pl.BlockSpec((mb, B, N), lambda i: (i, 0, 0)),
        out_shape=jax.ShapeDtypeStruct((M, B, N), jnp.float32),
        compiler_params=_PARALLEL_1D,
    )(xs, ws)


# ---------------------------------------------------------------------------
# Truncated DFT (exactly the retained modes of rfft2 / irfft2)
# ---------------------------------------------------------------------------
def _dft_matrices(Hp, Wp, m1, m2):
    kw = jnp.arange(m2)
    w = jnp.arange(Wp)
    ang_w = 2.0 * jnp.pi * ((w[:, None] * kw[None, :]) % Wp).astype(jnp.float32) / Wp
    fwc, fws = jnp.cos(ang_w), jnp.sin(ang_w)                       # (Wp, m2)

    rf = jnp.concatenate([jnp.arange(m1), jnp.arange(Hp - m1, Hp)])
    h = jnp.arange(Hp)
    ang_h = 2.0 * jnp.pi * ((rf[:, None] * h[None, :]) % Hp).astype(jnp.float32) / Hp
    fhc, fhs = jnp.cos(ang_h), jnp.sin(ang_h)                       # (2*m1, Hp)

    herm = jnp.where(kw == 0, 1.0, 2.0)
    if Wp % 2 == 0:
        herm = jnp.where(kw == Wp // 2, 1.0, herm)
    scale = (herm / float(Hp * Wp)).astype(jnp.float32)[:, None]
    ang_iw = 2.0 * jnp.pi * ((kw[:, None] * w[None, :]) % Wp).astype(jnp.float32) / Wp
    icw = scale * jnp.cos(ang_iw)                                   # (m2, Wp)
    isw = scale * jnp.sin(ang_iw)
    return fwc, fws, fhc, fhs, icw, isw


def _spectral_conv(h, w_stacked, dft, m1, m2):
    # h: (B, C, Hp, Wp) real.  Equivalent to rfft2 -> complex channel mix
    # (weights1 on rows [0, m1), weights2 on rows [Hp-m1, Hp)) -> irfft2,
    # but only the retained modes are computed / synthesised.
    fwc, fws, fhc, fhs, icw, isw = dft
    B, C = h.shape[0], h.shape[1]

    # forward truncated DFT (XLA einsums; see TODO in header)
    tr = jnp.einsum("bchw,wk->bchk", h, fwc)
    ti = -jnp.einsum("bchw,wk->bchk", h, fws)
    xr = jnp.einsum("rh,bchk->rkbc", fhc, tr) + jnp.einsum("rh,bchk->rkbc", fhs, ti)
    xi = jnp.einsum("rh,bchk->rkbc", fhc, ti) - jnp.einsum("rh,bchk->rkbc", fhs, tr)

    M = 2 * m1 * m2
    xs = jnp.concatenate([xr, xi], axis=-1).reshape(M, B, 2 * C)

    ys = _spectral_mix(xs, w_stacked)                 # (M, B, 2C) — Pallas/MXU

    y = ys.reshape(2 * m1, m2, B, 2 * C)
    yr, yi = y[..., :C], y[..., C:]

    # inverse truncated DFT back to the full (Hp, Wp) grid
    zr = jnp.einsum("rh,rkbc->bchk", fhc, yr) - jnp.einsum("rh,rkbc->bchk", fhs, yi)
    zi = jnp.einsum("rh,rkbc->bchk", fhs, yr) + jnp.einsum("rh,rkbc->bchk", fhc, yi)
    return jnp.einsum("bchk,kw->bchw", zr, icw) - jnp.einsum("bchk,kw->bchw", zi, isw)


# ---------------------------------------------------------------------------
# Parameter init (deterministic; shapes mirror the PyTorch module, stored in
# the layouts the kernels consume: weights as (out, in), biases as (out, 1),
# spectral weights pre-stacked as [[wr, wi], [-wi, wr]]).
# ---------------------------------------------------------------------------
def init_params(key, width, modes1, modes2):
    keys = iter(jax.random.split(key, 64))
    M = modes1 * modes2
    scale = 1.0 / (width * width)
    p = {}
    p["fc0_w"] = jax.random.normal(next(keys), (width, 4), jnp.float32) / math.sqrt(4)
    p["fc0_b"] = jax.random.normal(next(keys), (width, 1), jnp.float32) * 0.01
    for l in range(4):
        stacks = []
        for _ in range(2):                      # weights1 (top rows), weights2 (bottom rows)
            wr = scale * jax.random.uniform(next(keys), (M, width, width), jnp.float32)
            wi = scale * jax.random.uniform(next(keys), (M, width, width), jnp.float32)
            top = jnp.concatenate([wr, wi], axis=-1)
            bot = jnp.concatenate([-wi, wr], axis=-1)
            stacks.append(jnp.concatenate([top, bot], axis=-2))    # (M, 2C, 2C)
        p[f"sc{l}_w"] = jnp.concatenate(stacks, axis=0)            # (2M, 2C, 2C)
        p[f"w{l}_w"] = jax.random.normal(next(keys), (width, width), jnp.float32) / math.sqrt(width)
        p[f"w{l}_b"] = jax.random.normal(next(keys), (width, 1), jnp.float32) * 0.01
    p["fc1_w"] = jax.random.normal(next(keys), (128, width), jnp.float32) / math.sqrt(width)
    p["fc1_b"] = jax.random.normal(next(keys), (128, 1), jnp.float32) * 0.01
    p["fc2_w"] = jax.random.normal(next(keys), (1, 128), jnp.float32) / math.sqrt(128)
    p["fc2_b"] = jax.random.normal(next(keys), (1, 1), jnp.float32) * 0.01
    return p


# ---------------------------------------------------------------------------
# FNO forward (channels-first, pixels lane-dense)
# ---------------------------------------------------------------------------
def fno_forward(params, x, time, modes1, modes2, padding=2):
    B, X, Y, _ = x.shape
    width = params["fc0_w"].shape[0]           # static (derived from shape)
    Hp, Wp = X + padding, Y + padding
    assert Hp >= 2 * modes1 and modes2 <= Wp // 2 + 1
    f32 = jnp.float32

    # get_grid + time channel, built directly channel-first: (B, 4, X, Y)
    u = x.astype(f32).reshape(B, 1, X, Y)
    gridx = jnp.broadcast_to(
        jnp.linspace(0.0, 1.0 - 1.0 / X, X, dtype=f32).reshape(1, 1, X, 1),
        (B, 1, X, Y))
    gridy = jnp.broadcast_to(
        jnp.linspace(0.0, 1.0 - 1.0 / Y, Y, dtype=f32).reshape(1, 1, 1, Y),
        (B, 1, X, Y))
    tch = jnp.broadcast_to((0.1 * time).astype(f32).reshape(B, 1, 1, 1),
                           (B, 1, X, Y))
    xin = jnp.concatenate([u, gridx, gridy, tch], axis=1)          # (B, 4, X, Y)

    # fc0 (Pallas, pixels on lanes), then pad spatial dims
    h = _fc0(xin.reshape(B, 4, X * Y), params["fc0_w"], params["fc0_b"])
    h = h.reshape(B, width, X, Y)
    h = jnp.pad(h, ((0, 0), (0, 0), (0, padding), (0, padding)))   # (B, C, Hp, Wp)

    dft = _dft_matrices(Hp, Wp, modes1, modes2)
    S = Hp * Wp
    for l in range(4):
        x1 = _spectral_conv(h, params[f"sc{l}_w"], dft, modes1, modes2)
        hf = _fourier_layer(h.reshape(B, width, S), x1.reshape(B, width, S),
                            params[f"w{l}_w"], params[f"w{l}_b"],
                            apply_gelu=(l < 3))
        h = hf.reshape(B, width, Hp, Wp)

    # crop padding, then fused fc1 -> gelu -> fc2 head (Pallas)
    h = h[:, :, :X, :Y].reshape(B, width, X * Y)
    out = _head(h, params["fc1_w"], params["fc1_b"],
                params["fc2_w"], params["fc2_b"])                  # (B, 1, X*Y)
    return out.reshape(B, X, Y, 1)


# ---------------------------------------------------------------------------
if __name__ == "__main__":
    modes1, modes2, width = 6, 6, 16
    B, X, Y = 2, 16, 16

    key = jax.random.PRNGKey(0)
    k_param, k_x, k_t = jax.random.split(key, 3)
    params = init_params(k_param, width, modes1, modes2)
    x = jax.random.normal(k_x, (B, X, Y, 1), jnp.float32)
    time = jax.random.uniform(k_t, (B,), jnp.float32)

    fwd = jax.jit(lambda p, xx, tt: fno_forward(p, xx, tt, modes1, modes2))
    out = fwd(params, x, time)
    jax.block_until_ready(out)
    assert out.shape == (B, X, Y, 1)
    assert bool(jnp.all(jnp.isfinite(out)))
    print("KERNEL_OK")
</pallas_src>

<mosaic_0001>
module attributes {stable_mosaic.version = 11 : i64} {
  func.func @_fc0_kernel(%arg0: i32, %arg1: memref<1x4x256xf32, #tpu.memory_space<vmem>>, %arg2: memref<16x4xf32, #tpu.memory_space<vmem>>, %arg3: memref<16x1xf32, #tpu.memory_space<vmem>>, %arg4: memref<1x16x256xf32, #tpu.memory_space<vmem>>) attributes {dimension_semantics = [#tpu.dimension_semantics<parallel>], iteration_bounds = array<i64: 2>, scalar_prefetch = 0 : i64, scratch_operands = 0 : i64, tpu.core_type = #tpu.core_type<tc>, window_params = [{transform_indices = @transform_0, window_bounds = array<i64: 1, 4, 256>}, {pipeline_mode = #tpu.pipeline_mode<synchronous>, transform_indices = @transform_1, window_bounds = array<i64: 16, 4>}, {pipeline_mode = #tpu.pipeline_mode<synchronous>, transform_indices = @transform_2, window_bounds = array<i64: 16, 1>}, {transform_indices = @transform_3, window_bounds = array<i64: 1, 16, 256>}]} {
    %c0 = arith.constant 0 : index
    %c0_0 = arith.constant 0 : index
    %0 = vector.load %arg2[%c0, %c0_0] : memref<16x4xf32, #tpu.memory_space<vmem>>, vector<16x4xf32>
    %c0_1 = arith.constant 0 : index
    %c0_2 = arith.constant 0 : index
    %c0_3 = arith.constant 0 : index
    %1 = vector.load %arg1[%c0_1, %c0_2, %c0_3] : memref<1x4x256xf32, #tpu.memory_space<vmem>>, vector<1x4x256xf32>
    %2 = vector.shape_cast %1 : vector<1x4x256xf32> to vector<4x256xf32>
    %cst = arith.constant dense<0.000000e+00> : vector<16x256xf32>
    %3 = tpu.matmul %0, %2, %cst {dimension_numbers = #tpu.dot_dimension_numbers<[1], [0], [0], [1], [0, 0, 1, 1], [], []>} : vector<16x4xf32>, vector<4x256xf32>, vector<16x256xf32> -> vector<16x256xf32>
    %c0_4 = arith.constant 0 : index
    %c0_5 = arith.constant 0 : index
    %4 = vector.load %arg3[%c0_4, %c0_5] : memref<16x1xf32, #tpu.memory_space<vmem>>, vector<16x1xf32>
    %5 = vector.broadcast %4 : vector<16x1xf32> to vector<16x256xf32>
    %6 = arith.addf %3, %5 : vector<16x256xf32>
    %c0_6 = arith.constant 0 : index
    %c0_7 = arith.constant 0 : index
    %c0_8 = arith.constant 0 : index
    %7 = vector.load %arg4[%c0_6, %c0_7, %c0_8] : memref<1x16x256xf32, #tpu.memory_space<vmem>>, vector<1x16x256xf32>
    %8 = vector.shape_cast %7 : vector<1x16x256xf32> to vector<16x256xf32>
    %9 = vector.shape_cast %6 : vector<16x256xf32> to vector<1x16x256xf32>
    tpu.vector_store %arg4[%c0_6, %c0_7, %c0_8], %9 {strides = array<i32>} : memref<1x16x256xf32, #tpu.memory_space<vmem>>, vector<1x16x256xf32>,
    return
  }
  func.func @transform_0(%arg0: i32) -> (i32, i32, i32) {
    %c0_i32 = arith.constant 0 : i32
    %c0_i32_0 = arith.constant 0 : i32
    %c0_i32_1 = arith.constant 0 : i32
    return %arg0, %c0_i32, %c0_i32_0 : i32, i32, i32
  }
  func.func @transform_1(%arg0: i32) -> (i32, i32) {
    %c0_i32 = arith.constant 0 : i32
    %c0_i32_0 = arith.constant 0 : i32
    %c0_i32_1 = arith.constant 0 : i32
    return %c0_i32, %c0_i32_0 : i32, i32
  }
  func.func @transform_2(%arg0: i32) -> (i32, i32) {
    %c0_i32 = arith.constant 0 : i32
    %c0_i32_0 = arith.constant 0 : i32
    %c0_i32_1 = arith.constant 0 : i32
    return %c0_i32, %c0_i32_0 : i32, i32
  }
  func.func @transform_3(%arg0: i32) -> (i32, i32, i32) {
    %c0_i32 = arith.constant 0 : i32
    %c0_i32_0 = arith.constant 0 : i32
    %c0_i32_1 = arith.constant 0 : i32
    return %arg0, %c0_i32, %c0_i32_0 : i32, i32, i32
  }
}

module attributes {stable_mosaic.version = 11 : i64} {
  func.func @_spectral_kernel(%arg0: i32, %arg1: memref<36x2x32xf32, #tpu.memory_space<vmem>>, %arg2: memref<36x32x32xf32, #tpu.memory_space<vmem>>, %arg3: memref<36x2x32xf32, #tpu.memory_space<vmem>>) attributes {dimension_semantics = [#tpu.dimension_semantics<parallel>], iteration_bounds = array<i64: 2>, scalar_prefetch = 0 : i64, scratch_operands = 0 : i64, tpu.core_type = #tpu.core_type<tc>, window_params = [{transform_indices = @transform_0, window_bounds = array<i64: 36, 2, 32>}, {transform_indices = @transform_1, window_bounds = array<i64: 36, 32, 32>}, {transform_indices = @transform_2, window_bounds = array<i64: 36, 2, 32>}]} {
    %c0 = arith.constant 0 : index
    %c0_0 = arith.constant 0 : index
    %c0_1 = arith.constant 0 : index
    %0 = vector.load %arg1[%c0, %c0_0, %c0_1] : memref<36x2x32xf32, #tpu.memory_space<vmem>>, vector<36x2x32xf32>
    %c0_2 = arith.constant 0 : index
    %c0_3 = arith.constant 0 : index
    %c0_4 = arith.constant 0 : index
    %1 = vector.load %arg2[%c0_2, %c0_3, %c0_4] : memref<36x32x32xf32, #tpu.memory_space<vmem>>, vector<36x32x32xf32>
    "tpu.trace_start"() <{level = 10 : i32, message = "mbi,mio->mbo"}> : () -> ()
    %cst = arith.constant dense<0.000000e+00> : vector<36x2x32xf32>
    %2 = tpu.matmul %0, %1, %cst {dimension_numbers = #tpu.dot_dimension_numbers<[2], [1], [1], [2], [0, 0, 0, 1, 1, 2], [0], [0]>} : vector<36x2x32xf32>, vector<36x32x32xf32>, vector<36x2x32xf32> -> vector<36x2x32xf32>
    "tpu.trace_stop"() : () -> ()
    %c0_5 = arith.constant 0 : index
    %c0_6 = arith.constant 0 : index
    %c0_7 = arith.constant 0 : index
    %3 = vector.load %arg3[%c0_5, %c0_6, %c0_7] : memref<36x2x32xf32, #tpu.memory_space<vmem>>, vector<36x2x32xf32>
    tpu.vector_store %arg3[%c0_5, %c0_6, %c0_7], %2 {strides = array<i32>} : memref<36x2x32xf32, #tpu.memory_space<vmem>>, vector<36x2x32xf32>,
    return
  }
  func.func @transform_0(%arg0: i32) -> (i32, i32, i32) {
    %c0_i32 = arith.constant 0 : i32
    %c0_i32_0 = arith.constant 0 : i32
    %c0_i32_1 = arith.constant 0 : i32
    return %arg0, %c0_i32, %c0_i32_0 : i32, i32, i32
  }
  func.func @transform_1(%arg0: i32) -> (i32, i32, i32) {
    %c0_i32 = arith.constant 0 : i32
    %c0_i32_0 = arith.constant 0 : i32
    %c0_i32_1 = arith.constant 0 : i32
    return %arg0, %c0_i32, %c0_i32_0 : i32, i32, i32
  }
  func.func @transform_2(%arg0: i32) -> (i32, i32, i32) {
    %c0_i32 = arith.constant 0 : i32
    %c0_i32_0 = arith.constant 0 : i32
    %c0_i32_1 = arith.constant 0 : i32
    return %arg0, %c0_i32, %c0_i32_0 : i32, i32, i32
  }
}

module attributes {stable_mosaic.version = 11 : i64} {
  func.func @_layer_kernel_gelu(%arg0: i32, %arg1: memref<1x16x324xf32, #tpu.memory_space<vmem>>, %arg2: memref<1x16x324xf32, #tpu.memory_space<vmem>>, %arg3: memref<16x16xf32, #tpu.memory_space<vmem>>, %arg4: memref<16x1xf32, #tpu.memory_space<vmem>>, %arg5: memref<1x16x324xf32, #tpu.memory_space<vmem>>) attributes {dimension_semantics = [#tpu.dimension_semantics<parallel>], iteration_bounds = array<i64: 2>, scalar_prefetch = 0 : i64, scratch_operands = 0 : i64, tpu.core_type = #tpu.core_type<tc>, window_params = [{transform_indices = @transform_0, window_bounds = array<i64: 1, 16, 324>}, {transform_indices = @transform_1, window_bounds = array<i64: 1, 16, 324>}, {pipeline_mode = #tpu.pipeline_mode<synchronous>, transform_indices = @transform_2, window_bounds = array<i64: 16, 16>}, {pipeline_mode = #tpu.pipeline_mode<synchronous>, transform_indices = @transform_3, window_bounds = array<i64: 16, 1>}, {transform_indices = @transform_4, window_bounds = array<i64: 1, 16, 324>}]} {
    %c0 = arith.constant 0 : index
    %c0_0 = arith.constant 0 : index
    %0 = vector.load %arg3[%c0, %c0_0] : memref<16x16xf32, #tpu.memory_space<vmem>>, vector<16x16xf32>
    %c0_1 = arith.constant 0 : index
    %c0_2 = arith.constant 0 : index
    %c0_3 = arith.constant 0 : index
    %1 = vector.load %arg1[%c0_1, %c0_2, %c0_3] : memref<1x16x324xf32, #tpu.memory_space<vmem>>, vector<1x16x324xf32>
    %2 = vector.shape_cast %1 : vector<1x16x324xf32> to vector<16x324xf32>
    %cst = arith.constant dense<0.000000e+00> : vector<16x324xf32>
    %3 = tpu.matmul %0, %2, %cst {dimension_numbers = #tpu.dot_dimension_numbers<[1], [0], [0], [1], [0, 0, 1, 1], [], []>} : vector<16x16xf32>, vector<16x324xf32>, vector<16x324xf32> -> vector<16x324xf32>
    %c0_4 = arith.constant 0 : index
    %c0_5 = arith.constant 0 : index
    %4 = vector.load %arg4[%c0_4, %c0_5] : memref<16x1xf32, #tpu.memory_space<vmem>>, vector<16x1xf32>
    %5 = vector.broadcast %4 : vector<16x1xf32> to vector<16x324xf32>
    %6 = arith.addf %3, %5 : vector<16x324xf32>
    %c0_6 = arith.constant 0 : index
    %c0_7 = arith.constant 0 : index
    %c0_8 = arith.constant 0 : index
    %7 = vector.load %arg2[%c0_6, %c0_7, %c0_8] : memref<1x16x324xf32, #tpu.memory_space<vmem>>, vector<1x16x324xf32>
    %8 = vector.shape_cast %7 : vector<1x16x324xf32> to vector<16x324xf32>
    %9 = arith.addf %6, %8 : vector<16x324xf32>
    %cst_9 = arith.constant 5.000000e-01 : f32
    %10 = vector.broadcast %cst_9 : f32 to vector<16x324xf32>
    %11 = arith.mulf %10, %9 : vector<16x324xf32>
    %cst_10 = arith.constant 0.707106769 : f32
    %12 = vector.broadcast %cst_10 : f32 to vector<16x324xf32>
    %13 = arith.mulf %9, %12 : vector<16x324xf32>
    %cst_11 = arith.constant 0.000000e+00 : f32
    %14 = vector.broadcast %cst_11 : f32 to vector<16x324xf32>
    %15 = arith.cmpf oge, %13, %14 : vector<16x324xf32>
    %cst_12 = arith.constant 1.000000e+00 : f32
    %cst_13 = arith.constant -1.000000e+00 : f32
    %16 = vector.broadcast %cst_12 : f32 to vector<16x324xf32>
    %17 = vector.broadcast %cst_13 : f32 to vector<16x324xf32>
    %18 = arith.select %15, %16, %17 : vector<16x324xi1>, vector<16x324xf32>
    %19 = math.absf %13 : vector<16x324xf32>
    %cst_14 = arith.constant 0.327591091 : f32
    %20 = vector.broadcast %cst_14 : f32 to vector<16x324xf32>
    %21 = arith.mulf %20, %19 : vector<16x324xf32>
    %cst_15 = arith.constant 1.000000e+00 : f32
    %22 = vector.broadcast %cst_15 : f32 to vector<16x324xf32>
    %23 = arith.addf %22, %21 : vector<16x324xf32>
    %cst_16 = arith.constant 1.000000e+00 : f32
    %24 = vector.broadcast %cst_16 : f32 to vector<16x324xf32>
    %25 = arith.divf %24, %23 : vector<16x324xf32>
    %cst_17 = arith.constant 1.06140542 : f32
    %26 = vector.broadcast %cst_17 : f32 to vector<16x324xf32>
    %27 = arith.mulf %26, %25 : vector<16x324xf32>
    %cst_18 = arith.constant -1.45315206 : f32
    %28 = vector.broadcast %cst_18 : f32 to vector<16x324xf32>
    %29 = arith.addf %27, %28 : vector<16x324xf32>
    %30 = arith.mulf %29, %25 : vector<16x324xf32>
    %cst_19 = arith.constant 1.42141378 : f32
    %31 = vector.broadcast %cst_19 : f32 to vector<16x324xf32>
    %32 = arith.addf %30, %31 : vector<16x324xf32>
    %33 = arith.mulf %32, %25 : vector<16x324xf32>
    %cst_20 = arith.constant -0.284496725 : f32
    %34 = vector.broadcast %cst_20 : f32 to vector<16x324xf32>
    %35 = arith.addf %33, %34 : vector<16x324xf32>
    %36 = arith.mulf %35, %25 : vector<16x324xf32>
    %cst_21 = arith.constant 0.254829586 : f32
    %37 = vector.broadcast %cst_21 : f32 to vector<16x324xf32>
    %38 = arith.addf %36, %37 : vector<16x324xf32>
    %39 = arith.mulf %38, %25 : vector<16x324xf32>
    %cst_22 = arith.constant 0.000000e+00 : f32
    %40 = vector.broadcast %cst_22 : f32 to vector<16x324xf32>
    %41 = arith.subf %40, %19 : vector<16x324xf32>
    %42 = arith.mulf %41, %19 : vector<16x324xf32>
    %43 = math.exp %42 : vector<16x324xf32>
    %44 = arith.mulf %39, %43 : vector<16x324xf32>
    %cst_23 = arith.constant 1.000000e+00 : f32
    %45 = vector.broadcast %cst_23 : f32 to vector<16x324xf32>
    %46 = arith.subf %45, %44 : vector<16x324xf32>
    %47 = arith.mulf %18, %46 : vector<16x324xf32>
    %cst_24 = arith.constant 1.000000e+00 : f32
    %48 = vector.broadcast %cst_24 : f32 to vector<16x324xf32>
    %49 = arith.addf %48, %47 : vector<16x324xf32>
    %50 = arith.mulf %11, %49 : vector<16x324xf32>
    %c0_25 = arith.constant 0 : index
    %c0_26 = arith.constant 0 : index
    %c0_27 = arith.constant 0 : index
    %51 = vector.load %arg5[%c0_25, %c0_26, %c0_27] : memref<1x16x324xf32, #tpu.memory_space<vmem>>, vector<1x16x324xf32>
    %52 = vector.shape_cast %51 : vector<1x16x324xf32> to vector<16x324xf32>
    %53 = vector.shape_cast %50 : vector<16x324xf32> to vector<1x16x324xf32>
    tpu.vector_store %arg5[%c0_25, %c0_26, %c0_27], %53 {strides = array<i32>} : memref<1x16x324xf32, #tpu.memory_space<vmem>>, vector<1x16x324xf32>,
    return
  }
  func.func @transform_0(%arg0: i32) -> (i32, i32, i32) {
    %c0_i32 = arith.constant 0 : i32
    %c0_i32_0 = arith.constant 0 : i32
    %c0_i32_1 = arith.constant 0 : i32
    return %arg0, %c0_i32, %c0_i32_0 : i32, i32, i32
  }
  func.func @transform_1(%arg0: i32) -> (i32, i32, i32) {
    %c0_i32 = arith.constant 0 : i32
    %c0_i32_0 = arith.constant 0 : i32
    %c0_i32_1 = arith.constant 0 : i32
    return %arg0, %c0_i32, %c0_i32_0 : i32, i32, i32
  }
  func.func @transform_2(%arg0: i32) -> (i32, i32) {
    %c0_i32 = arith.constant 0 : i32
    %c0_i32_0 = arith.constant 0 : i32
    %c0_i32_1 = arith.constant 0 : i32
    return %c0_i32, %c0_i32_0 : i32, i32
  }
  func.func @transform_3(%arg0: i32) -> (i32, i32) {
    %c0_i32 = arith.constant 0 : i32
    %c0_i32_0 = arith.constant 0 : i32
    %c0_i32_1 = arith.constant 0 : i32
    return %c0_i32, %c0_i32_0 : i32, i32
  }
  func.func @transform_4(%arg0: i32) -> (i32, i32, i32) {
    %c0_i32 = arith.constant 0 : i32
    %c0_i32_0 = arith.constant 0 : i32
    %c0_i32_1 = arith.constant 0 : i32
    return %arg0, %c0_i32, %c0_i32_0 : i32, i32, i32
  }
}

module attributes {stable_mosaic.version = 11 : i64} {
  func.func @_layer_kernel_nogelu(%arg0: i32, %arg1: memref<1x16x324xf32, #tpu.memory_space<vmem>>, %arg2: memref<1x16x324xf32, #tpu.memory_space<vmem>>, %arg3: memref<16x16xf32, #tpu.memory_space<vmem>>, %arg4: memref<16x1xf32, #tpu.memory_space<vmem>>, %arg5: memref<1x16x324xf32, #tpu.memory_space<vmem>>) attributes {dimension_semantics = [#tpu.dimension_semantics<parallel>], iteration_bounds = array<i64: 2>, scalar_prefetch = 0 : i64, scratch_operands = 0 : i64, tpu.core_type = #tpu.core_type<tc>, window_params = [{transform_indices = @transform_0, window_bounds = array<i64: 1, 16, 324>}, {transform_indices = @transform_1, window_bounds = array<i64: 1, 16, 324>}, {pipeline_mode = #tpu.pipeline_mode<synchronous>, transform_indices = @transform_2, window_bounds = array<i64: 16, 16>}, {pipeline_mode = #tpu.pipeline_mode<synchronous>, transform_indices = @transform_3, window_bounds = array<i64: 16, 1>}, {transform_indices = @transform_4, window_bounds = array<i64: 1, 16, 324>}]} {
    %c0 = arith.constant 0 : index
    %c0_0 = arith.constant 0 : index
    %0 = vector.load %arg3[%c0, %c0_0] : memref<16x16xf32, #tpu.memory_space<vmem>>, vector<16x16xf32>
    %c0_1 = arith.constant 0 : index
    %c0_2 = arith.constant 0 : index
    %c0_3 = arith.constant 0 : index
    %1 = vector.load %arg1[%c0_1, %c0_2, %c0_3] : memref<1x16x324xf32, #tpu.memory_space<vmem>>, vector<1x16x324xf32>
    %2 = vector.shape_cast %1 : vector<1x16x324xf32> to vector<16x324xf32>
    %cst = arith.constant dense<0.000000e+00> : vector<16x324xf32>
    %3 = tpu.matmul %0, %2, %cst {dimension_numbers = #tpu.dot_dimension_numbers<[1], [0], [0], [1], [0, 0, 1, 1], [], []>} : vector<16x16xf32>, vector<16x324xf32>, vector<16x324xf32> -> vector<16x324xf32>
    %c0_4 = arith.constant 0 : index
    %c0_5 = arith.constant 0 : index
    %4 = vector.load %arg4[%c0_4, %c0_5] : memref<16x1xf32, #tpu.memory_space<vmem>>, vector<16x1xf32>
    %5 = vector.broadcast %4 : vector<16x1xf32> to vector<16x324xf32>
    %6 = arith.addf %3, %5 : vector<16x324xf32>
    %c0_6 = arith.constant 0 : index
    %c0_7 = arith.constant 0 : index
    %c0_8 = arith.constant 0 : index
    %7 = vector.load %arg2[%c0_6, %c0_7, %c0_8] : memref<1x16x324xf32, #tpu.memory_space<vmem>>, vector<1x16x324xf32>
    %8 = vector.shape_cast %7 : vector<1x16x324xf32> to vector<16x324xf32>
    %9 = arith.addf %6, %8 : vector<16x324xf32>
    %c0_9 = arith.constant 0 : index
    %c0_10 = arith.constant 0 : index
    %c0_11 = arith.constant 0 : index
    %10 = vector.load %arg5[%c0_9, %c0_10, %c0_11] : memref<1x16x324xf32, #tpu.memory_space<vmem>>, vector<1x16x324xf32>
    %11 = vector.shape_cast %10 : vector<1x16x324xf32> to vector<16x324xf32>
    %12 = vector.shape_cast %9 : vector<16x324xf32> to vector<1x16x324xf32>
    tpu.vector_store %arg5[%c0_9, %c0_10, %c0_11], %12 {strides = array<i32>} : memref<1x16x324xf32, #tpu.memory_space<vmem>>, vector<1x16x324xf32>,
    return
  }
  func.func @transform_0(%arg0: i32) -> (i32, i32, i32) {
    %c0_i32 = arith.constant 0 : i32
    %c0_i32_0 = arith.constant 0 : i32
    %c0_i32_1 = arith.constant 0 : i32
    return %arg0, %c0_i32, %c0_i32_0 : i32, i32, i32
  }
  func.func @transform_1(%arg0: i32) -> (i32, i32, i32) {
    %c0_i32 = arith.constant 0 : i32
    %c0_i32_0 = arith.constant 0 : i32
    %c0_i32_1 = arith.constant 0 : i32
    return %arg0, %c0_i32, %c0_i32_0 : i32, i32, i32
  }
  func.func @transform_2(%arg0: i32) -> (i32, i32) {
    %c0_i32 = arith.constant 0 : i32
    %c0_i32_0 = arith.constant 0 : i32
    %c0_i32_1 = arith.constant 0 : i32
    return %c0_i32, %c0_i32_0 : i32, i32
  }
  func.func @transform_3(%arg0: i32) -> (i32, i32) {
    %c0_i32 = arith.constant 0 : i32
    %c0_i32_0 = arith.constant 0 : i32
    %c0_i32_1 = arith.constant 0 : i32
    return %c0_i32, %c0_i32_0 : i32, i32
  }
  func.func @transform_4(%arg0: i32) -> (i32, i32, i32) {
    %c0_i32 = arith.constant 0 : i32
    %c0_i32_0 = arith.constant 0 : i32
    %c0_i32_1 = arith.constant 0 : i32
    return %arg0, %c0_i32, %c0_i32_0 : i32, i32, i32
  }
}

module attributes {stable_mosaic.version = 11 : i64} {
  func.func @_head_kernel(%arg0: i32, %arg1: memref<1x16x256xf32, #tpu.memory_space<vmem>>, %arg2: memref<128x16xf32, #tpu.memory_space<vmem>>, %arg3: memref<128x1xf32, #tpu.memory_space<vmem>>, %arg4: memref<1x128xf32, #tpu.memory_space<vmem>>, %arg5: memref<1x1xf32, #tpu.memory_space<vmem>>, %arg6: memref<1x1x256xf32, #tpu.memory_space<vmem>>) attributes {dimension_semantics = [#tpu.dimension_semantics<parallel>], iteration_bounds = array<i64: 2>, scalar_prefetch = 0 : i64, scratch_operands = 0 : i64, tpu.core_type = #tpu.core_type<tc>, window_params = [{transform_indices = @transform_0, window_bounds = array<i64: 1, 16, 256>}, {pipeline_mode = #tpu.pipeline_mode<synchronous>, transform_indices = @transform_1, window_bounds = array<i64: 128, 16>}, {pipeline_mode = #tpu.pipeline_mode<synchronous>, transform_indices = @transform_2, window_bounds = array<i64: 128, 1>}, {pipeline_mode = #tpu.pipeline_mode<synchronous>, transform_indices = @transform_3, window_bounds = array<i64: 1, 128>}, {pipeline_mode = #tpu.pipeline_mode<synchronous>, transform_indices = @transform_4, window_bounds = array<i64: 1, 1>}, {transform_indices = @transform_5, window_bounds = array<i64: 1, 1, 256>}]} {
    %c0 = arith.constant 0 : index
    %c0_0 = arith.constant 0 : index
    %0 = vector.load %arg2[%c0, %c0_0] : memref<128x16xf32, #tpu.memory_space<vmem>>, vector<128x16xf32>
    %c0_1 = arith.constant 0 : index
    %c0_2 = arith.constant 0 : index
    %c0_3 = arith.constant 0 : index
    %1 = vector.load %arg1[%c0_1, %c0_2, %c0_3] : memref<1x16x256xf32, #tpu.memory_space<vmem>>, vector<1x16x256xf32>
    %2 = vector.shape_cast %1 : vector<1x16x256xf32> to vector<16x256xf32>
    %cst = arith.constant dense<0.000000e+00> : vector<128x256xf32>
    %3 = tpu.matmul %0, %2, %cst {dimension_numbers = #tpu.dot_dimension_numbers<[1], [0], [0], [1], [0, 0, 1, 1], [], []>} : vector<128x16xf32>, vector<16x256xf32>, vector<128x256xf32> -> vector<128x256xf32>
    %c0_4 = arith.constant 0 : index
    %c0_5 = arith.constant 0 : index
    %4 = vector.load %arg3[%c0_4, %c0_5] : memref<128x1xf32, #tpu.memory_space<vmem>>, vector<128x1xf32>
    %5 = vector.broadcast %4 : vector<128x1xf32> to vector<128x256xf32>
    %6 = arith.addf %3, %5 : vector<128x256xf32>
    %cst_6 = arith.constant 5.000000e-01 : f32
    %7 = vector.broadcast %cst_6 : f32 to vector<128x256xf32>
    %8 = arith.mulf %7, %6 : vector<128x256xf32>
    %cst_7 = arith.constant 0.707106769 : f32
    %9 = vector.broadcast %cst_7 : f32 to vector<128x256xf32>
    %10 = arith.mulf %6, %9 : vector<128x256xf32>
    %cst_8 = arith.constant 0.000000e+00 : f32
    %11 = vector.broadcast %cst_8 : f32 to vector<128x256xf32>
    %12 = arith.cmpf oge, %10, %11 : vector<128x256xf32>
    %cst_9 = arith.constant 1.000000e+00 : f32
    %cst_10 = arith.constant -1.000000e+00 : f32
    %13 = vector.broadcast %cst_9 : f32 to vector<128x256xf32>
    %14 = vector.broadcast %cst_10 : f32 to vector<128x256xf32>
    %15 = arith.select %12, %13, %14 : vector<128x256xi1>, vector<128x256xf32>
    %16 = math.absf %10 : vector<128x256xf32>
    %cst_11 = arith.constant 0.327591091 : f32
    %17 = vector.broadcast %cst_11 : f32 to vector<128x256xf32>
    %18 = arith.mulf %17, %16 : vector<128x256xf32>
    %cst_12 = arith.constant 1.000000e+00 : f32
    %19 = vector.broadcast %cst_12 : f32 to vector<128x256xf32>
    %20 = arith.addf %19, %18 : vector<128x256xf32>
    %cst_13 = arith.constant 1.000000e+00 : f32
    %21 = vector.broadcast %cst_13 : f32 to vector<128x256xf32>
    %22 = arith.divf %21, %20 : vector<128x256xf32>
    %cst_14 = arith.constant 1.06140542 : f32
    %23 = vector.broadcast %cst_14 : f32 to vector<128x256xf32>
    %24 = arith.mulf %23, %22 : vector<128x256xf32>
    %cst_15 = arith.constant -1.45315206 : f32
    %25 = vector.broadcast %cst_15 : f32 to vector<128x256xf32>
    %26 = arith.addf %24, %25 : vector<128x256xf32>
    %27 = arith.mulf %26, %22 : vector<128x256xf32>
    %cst_16 = arith.constant 1.42141378 : f32
    %28 = vector.broadcast %cst_16 : f32 to vector<128x256xf32>
    %29 = arith.addf %27, %28 : vector<128x256xf32>
    %30 = arith.mulf %29, %22 : vector<128x256xf32>
    %cst_17 = arith.constant -0.284496725 : f32
    %31 = vector.broadcast %cst_17 : f32 to vector<128x256xf32>
    %32 = arith.addf %30, %31 : vector<128x256xf32>
    %33 = arith.mulf %32, %22 : vector<128x256xf32>
    %cst_18 = arith.constant 0.254829586 : f32
    %34 = vector.broadcast %cst_18 : f32 to vector<128x256xf32>
    %35 = arith.addf %33, %34 : vector<128x256xf32>
    %36 = arith.mulf %35, %22 : vector<128x256xf32>
    %cst_19 = arith.constant 0.000000e+00 : f32
    %37 = vector.broadcast %cst_19 : f32 to vector<128x256xf32>
    %38 = arith.subf %37, %16 : vector<128x256xf32>
    %39 = arith.mulf %38, %16 : vector<128x256xf32>
    %40 = math.exp %39 : vector<128x256xf32>
    %41 = arith.mulf %36, %40 : vector<128x256xf32>
    %cst_20 = arith.constant 1.000000e+00 : f32
    %42 = vector.broadcast %cst_20 : f32 to vector<128x256xf32>
    %43 = arith.subf %42, %41 : vector<128x256xf32>
    %44 = arith.mulf %15, %43 : vector<128x256xf32>
    %cst_21 = arith.constant 1.000000e+00 : f32
    %45 = vector.broadcast %cst_21 : f32 to vector<128x256xf32>
    %46 = arith.addf %45, %44 : vector<128x256xf32>
    %47 = arith.mulf %8, %46 : vector<128x256xf32>
    %c0_22 = arith.constant 0 : index
    %c0_23 = arith.constant 0 : index
    %48 = vector.load %arg4[%c0_22, %c0_23] : memref<1x128xf32, #tpu.memory_space<vmem>>, vector<1x128xf32>
    %cst_24 = arith.constant dense<0.000000e+00> : vector<1x256xf32>
    %49 = tpu.matmul %48, %47, %cst_24 {dimension_numbers = #tpu.dot_dimension_numbers<[1], [0], [0], [1], [0, 0, 1, 1], [], []>} : vector<1x128xf32>, vector<128x256xf32>, vector<1x256xf32> -> vector<1x256xf32>
    %c0_25 = arith.constant 0 : index
    %c0_26 = arith.constant 0 : index
    %50 = vector.load %arg5[%c0_25, %c0_26] : memref<1x1xf32, #tpu.memory_space<vmem>>, vector<1x1xf32>
    %51 = vector.broadcast %50 : vector<1x1xf32> to vector<1x256xf32>
    %52 = arith.addf %49, %51 : vector<1x256xf32>
    %c0_27 = arith.constant 0 : index
    %c0_28 = arith.constant 0 : index
    %c0_29 = arith.constant 0 : index
    %53 = vector.load %arg6[%c0_27, %c0_28, %c0_29] : memref<1x1x256xf32, #tpu.memory_space<vmem>>, vector<1x1x256xf32>
    %54 = vector.shape_cast %53 : vector<1x1x256xf32> to vector<1x256xf32>
    %55 = vector.shape_cast %52 : vector<1x256xf32> to vector<1x1x256xf32>
    tpu.vector_store %arg6[%c0_27, %c0_28, %c0_29], %55 {strides = array<i32>} : memref<1x1x256xf32, #tpu.memory_space<vmem>>, vector<1x1x256xf32>,
    return
  }
  func.func @transform_0(%arg0: i32) -> (i32, i32, i32) {
    %c0_i32 = arith.constant 0 : i32
    %c0_i32_0 = arith.constant 0 : i32
    %c0_i32_1 = arith.constant 0 : i32
    return %arg0, %c0_i32, %c0_i32_0 : i32, i32, i32
  }
  func.func @transform_1(%arg0: i32) -> (i32, i32) {
    %c0_i32 = arith.constant 0 : i32
    %c0_i32_0 = arith.constant 0 : i32
    %c0_i32_1 = arith.constant 0 : i32
    return %c0_i32, %c0_i32_0 : i32, i32
  }
  func.func @transform_2(%arg0: i32) -> (i32, i32) {
    %c0_i32 = arith.constant 0 : i32
    %c0_i32_0 = arith.constant 0 : i32
    %c0_i32_1 = arith.constant 0 : i32
    return %c0_i32, %c0_i32_0 : i32, i32
  }
  func.func @transform_3(%arg0: i32) -> (i32, i32) {
    %c0_i32 = arith.constant 0 : i32
    %c0_i32_0 = arith.constant 0 : i32
    %c0_i32_1 = arith.constant 0 : i32
    return %c0_i32, %c0_i32_0 : i32, i32
  }
  func.func @transform_4(%arg0: i32) -> (i32, i32) {
    %c0_i32 = arith.constant 0 : i32
    %c0_i32_0 = arith.constant 0 : i32
    %c0_i32_1 = arith.constant 0 : i32
    return %c0_i32, %c0_i32_0 : i32, i32
  }
  func.func @transform_5(%arg0: i32) -> (i32, i32, i32) {
    %c0_i32 = arith.constant 0 : i32
    %c0_i32_0 = arith.constant 0 : i32
    %c0_i32_1 = arith.constant 0 : i32
    return %arg0, %c0_i32, %c0_i32_0 : i32, i32, i32
  }
}

</mosaic_0001>

<llo_original>
// kernel: _lambda_.10
$region0: #{_lambda_.10}
  #allocation0 [shape = 'u32[]', space=smem, size = 0x4, offset = 0x4, fixed_abs, tag = 'smem constant byte address 0x4 - core index']
  #allocation1 [shape = 'u32[144,128]{1,0:T(1,128)}', space=vmem, size = 0x12000, scoped, tag = 'internal scratch']
  %s0 = inlined_call_operand.vmem [shape: f32[2,4,256], index: 0, kind: input, shape index: {}]
  %s1 = inlined_call_operand.vmem [shape: f32[16,4], index: 1, kind: input, shape index: {}]
  %s2 = inlined_call_operand.vmem [shape: f32[16,1], index: 2, kind: input, shape index: {}]
  %s3 = inlined_call_operand.vmem [shape: f32[2,16,256], index: 3, kind: output, shape index: {}]
  %s4 = sld [smem:[#allocation0]]
  $region45: #{_lambda_.10} parent=0
    _
  %s6 = ssub.s32 1, %s4
  %s7 = scalar_select 0, %s6, %s4
  loop: start=0, step=1, limit=4
  $region2: #{_lambda_.10} parent=0 // loop_pre_header
    _
  $region3: #{_lambda_.10} parent=0 // loop_header
    %s9 = sphi 0, %s13
    %p10 = scmp.ge.s32.totalorder %s9, 4
    %s19 = sphi 0, %s21
    %s22 = sphi 0, %s19
    %s23 = sphi 0, %s22
    %s39 = sphi 0, %s23
    %s43 = sphi 0, %s43
    %s45 = sphi 0, %s43
    %s46 = sphi 0, %s45
    %s60 = sphi 0, %s46
    %s64 = sphi 0, %s64
    %s66 = sphi 0, %s64
    %s67 = sphi 0, %s66
    %s81 = sphi 0, %s67
    %s87 = sphi 0, %s89
    %s90 = sphi 0, %s87
    %s91 = sphi 0, %s90
    %s107 = sphi 0, %s91
  $region4: #{_lambda_.10} parent=0 // loop_header_branch
    %12 = sbr.rel (%p10) target = $region8
  $region5: #{_lambda_.10} parent=0 // loop_body
    %s14 = ssub.s32 %s9, 1
    %s15 = ssub.s32 %s9, 2
    %s16 = sadd.s32 %s9, 1
    %s17 = ssub.s32 %s9, %s16
    %p18 = scmp.eq.s32.totalorder %s17, 0
    %s20 = sadd.s32 %s19, 1
    %s21 = scalar_select %p18, %s19, %s20
    %p24 = pneg %p18
    %p25 = scmp.eq.s32.totalorder %s9, 1
    %p26 = por %p24, %p25
    %p27 = scmp.ne.s32.totalorder %s19, %s22
    %p28 = scmp.eq.s32.totalorder %s9, 0
    %p29 = por %p27, %p28
    %p30 = scmp.ne.s32.totalorder %s19, %s22
    %p31 = scmp.eq.s32.totalorder %s14, 1
    %p32 = por %p30, %p31
    %p33 = scmp.ne.s32.totalorder %s22, %s23
    %p34 = scmp.eq.s32.totalorder %s14, 0
    %p35 = por %p33, %p34
    %p36 = scmp.ne.s32.totalorder %s22, %s23
    %p37 = scmp.eq.s32.totalorder %s15, 1
    %p38 = por %p36, %p37
    %p40 = scmp.ne.s32.totalorder %s23, %s39
    %p41 = scmp.eq.s32.totalorder %s15, 0
    %p42 = por %p40, %p41
    %s44 = sadd.s32 %s43, 1
    %p47 = scmp.eq.s32.totalorder %s9, 1
    %p48 = scmp.ne.s32.totalorder %s43, %s45
    %p49 = scmp.eq.s32.totalorder %s9, 0
    %p50 = por %p48, %p49
    %p51 = scmp.ne.s32.totalorder %s43, %s45
    %p52 = scmp.eq.s32.totalorder %s14, 1
    %p53 = por %p51, %p52
    %p54 = scmp.ne.s32.totalorder %s45, %s46
    %p55 = scmp.eq.s32.totalorder %s14, 0
    %p56 = por %p54, %p55
    %p57 = scmp.ne.s32.totalorder %s45, %s46
    %p58 = scmp.eq.s32.totalorder %s15, 1
    %p59 = por %p57, %p58
    %p61 = scmp.ne.s32.totalorder %s46, %s60
    %p62 = scmp.eq.s32.totalorder %s15, 0
    %p63 = por %p61, %p62
    %s65 = sadd.s32 %s64, 1
    %p68 = scmp.eq.s32.totalorder %s9, 1
    %p69 = scmp.ne.s32.totalorder %s64, %s66
    %p70 = scmp.eq.s32.totalorder %s9, 0
    %p71 = por %p69, %p70
    %p72 = scmp.ne.s32.totalorder %s64, %s66
    %p73 = scmp.eq.s32.totalorder %s14, 1
    %p74 = por %p72, %p73
    %p75 = scmp.ne.s32.totalorder %s66, %s67
    %p76 = scmp.eq.s32.totalorder %s14, 0
    %p77 = por %p75, %p76
    %p78 = scmp.ne.s32.totalorder %s66, %s67
    %p79 = scmp.eq.s32.totalorder %s15, 1
    %p80 = por %p78, %p79
    %p82 = scmp.ne.s32.totalorder %s67, %s81
    %p83 = scmp.eq.s32.totalorder %s15, 0
    %p84 = por %p82, %p83
    %s85 = ssub.s32 %s9, %s16
    %p86 = scmp.eq.s32.totalorder %s85, 0
    %s88 = sadd.s32 %s87, 1
    %s89 = scalar_select %p86, %s87, %s88
    %p92 = pneg %p86
    %p93 = scmp.eq.s32.totalorder %s9, 1
    %p94 = por %p92, %p93
    %p95 = scmp.ne.s32.totalorder %s87, %s90
    %p96 = scmp.eq.s32.totalorder %s9, 0
    %p97 = por %p95, %p96
    %p98 = scmp.ne.s32.totalorder %s87, %s90
    %p99 = scmp.eq.s32.totalorder %s14, 1
    %p100 = por %p98, %p99
    %p101 = scmp.ne.s32.totalorder %s90, %s91
    %p102 = scmp.eq.s32.totalorder %s14, 0
    %p103 = por %p101, %p102
    %p104 = scmp.ne.s32.totalorder %s90, %s91
    %p105 = scmp.eq.s32.totalorder %s15, 1
    %p106 = por %p104, %p105
    %p108 = scmp.ne.s32.totalorder %s91, %s107
    %p109 = scmp.eq.s32.totalorder %s15, 0
    %p110 = por %p108, %p109
    %p111 = scmp.le.s32.totalorder 1, %s9
    %p112 = scmp.lt.s32.totalorder %s9, 3
    %p113 = pnand %p111, %p112
    %p114 = pneg %p113
    // Predicated region
    $region9: #{_lambda_.10} parent=5 // pred_check
      _
    $region10: #{_lambda_.10} parent=5 // pred_check_branch
      %116 = sbr.rel (%p113) target = $region12
    $region11: #{_lambda_.10} parent=5 // pred_region
      %s117 = ssub.s32 %s9, 1
      // Predicated region
      $region13: #{_lambda_.10} parent=11 // pred_check
        %p118 = pneg %p56
      $region14: #{_lambda_.10} parent=11 // pred_check_branch
        %120 = sbr.rel (%p118) target = $region16
      $region15: #{_lambda_.10} parent=11 // pred_region
        _
      $region16: #{_lambda_.10} parent=11 // pred_fallthru
        _
      // Predicated region
      $region17: #{_lambda_.10} parent=11 // pred_check
        %p121 = pneg %p77
      $region18: #{_lambda_.10} parent=11 // pred_check_branch
        %123 = sbr.rel (%p121) target = $region20
      $region19: #{_lambda_.10} parent=11 // pred_region
        _
      $region20: #{_lambda_.10} parent=11 // pred_fallthru
        _
    $region12: #{_lambda_.10} parent=5 // pred_fallthru
      _
    %p124 = scmp.lt.s32.totalorder %s9, 2
    // Predicated region
    $region21: #{_lambda_.10} parent=5 // pred_check
      %p125 = pneg %p124
    $region22: #{_lambda_.10} parent=5 // pred_check_branch
      %127 = sbr.rel (%p125) target = $region24
    $region23: #{_lambda_.10} parent=5 // pred_region
      // Predicated region
      $region25: #{_lambda_.10} parent=23 // pred_check
        %p128 = pneg %p29
      $region26: #{_lambda_.10} parent=23 // pred_check_branch
        %130 = sbr.rel (%p128) target = $region28
      $region27: #{_lambda_.10} parent=23 // pred_region
        %p131 = scmp.lt.s32.totalorder %s9, 1
        %s132 = scalar_select %p131, %s9, 1
        %s133 = smul.addr %s132, 2
        %s134 = smul.addr %s133, 4
        %s135 = scalar_lea.vmem %s0, %s134
      $region28: #{_lambda_.10} parent=23 // pred_fallthru
        _
    $region24: #{_lambda_.10} parent=5 // pred_fallthru
      _
    %p136 = scmp.le.s32.totalorder 1, %s9
    %p137 = scmp.lt.s32.totalorder %s9, 3
    %p138 = pnand %p136, %p137
    %p139 = pneg %p138
    // Predicated region
    $region29: #{_lambda_.10} parent=5 // pred_check
      _
    $region30: #{_lambda_.10} parent=5 // pred_check_branch
      %141 = sbr.rel (%p138) target = $region32
    $region31: #{_lambda_.10} parent=5 // pred_region
      %s142 = ssub.s32 %s9, 1
      %p143 = scmp.lt.s32.totalorder %s14, 1
      %s144 = scalar_select %p143, %s14, 1
      %s145 = smul.addr %s144, 2
      %s146 = smul.addr %s145, 4
      %s147 = scalar_lea.vmem %s0, %s146
      %p148 = pneg %p35
      %p149 = pneg %p32
      %p150 = pneg %p56
      %p151 = pneg %p53
      %p152 = pneg %p77
      %p153 = pneg %p74
      %p154 = pneg %p103
      %p155 = pneg %p100
      %p156 = scmp.lt.s32.totalorder %s14, 1
      %s157 = scalar_select %p156, %s14, 1
      %s158 = smul.addr %s157, 4
      %s159 = smul.addr %s158, 8
      %s160 = scalar_lea.vmem %s3, %s159
      %p161 = scmp.lt.s32.totalorder %s14, 1
      %s162 = scalar_select %p161, %s14, 1
      %s163 = smul.addr %s162, 2
      %s164 = smul.addr %s163, 4
      %s165 = scalar_lea.vmem %s0, %s164
      %p166 = scmp.lt.s32.totalorder %s14, 1
      %s167 = scalar_select %p166, %s14, 1
      %s168 = smul.addr %s167, 4
      %s169 = smul.addr %s168, 8
      %s170 = scalar_lea.vmem %s3, %s169
      %v171 = vld [vmem:[%s1] sm:$0xff]
      %v172 = vld [vmem:[%s1 + $0x8] sm:$0xff]
      %v173 = vld [vmem:[%s165] sm:$0xff]
      %v174 = vld [vmem:[%s2] sm:$0xff]
      %v175 = vld [vmem:[%s2 + $0x8] sm:$0xff]
      %177 = vset.pattern.permute.xlu0 0
      %178 = vperm.xlu0 %177, %v174
      %v179 = vpop.permute.xlu0 %178
      %182 = vset.pattern.permute.xlu0 0
      %183 = vperm.xlu0 %182, %v175
      %v184 = vpop.permute.xlu0 %183
      %v187 = vcombine.high %v173, %v173
      %vm188 = vcmask 31744
      %v190 = vsel %vm188, %v171, 0
      %v193 = vsel %vm188, %v172, 0
      %vm195 = vcmask 1043456
      %v196 = vsel %vm195, %v173, 0
      %v198 = vsel %vm195, %v187, 0
      %200 = vmatprep.subr.mxu0 %v198
      %201 = vmatpush1.msra.mxu0 %v196
      %202 = vmatprep.subr.mxu0 0.0
      %203 = vmatpush1.msra.mxu0 0.0
      %204 = vmatprep.subr.mxu0 0.0
      %205 = vmatpush1.msra.mxu0 0.0
      %206 = vmatprep.subr.mxu0 0.0
      %207 = vmatpush1.msra.mxu0 0.0
      %208 = vmatprep.subr.mxu0 0.0
      %209 = vmatpush1.msra.mxu0 0.0
      %210 = vmatprep.subr.mxu0 0.0
      %211 = vmatpush1.msra.mxu0 0.0
      %212 = vmatprep.subr.mxu0 0.0
      %213 = vmatpush1.msra.mxu0 0.0
      %214 = vmatprep.subr.mxu0 0.0
      %215 = vmatpush1.msra.mxu0 0.0
      %216 = vmatprep.subr.mxu0 0.0
      %217 = vmatpush1.msra.mxu0 0.0
      %218 = vmatprep.subr.mxu0 0.0
      %219 = vmatpush1.msra.mxu0 0.0
      %220 = vmatprep.subr.mxu0 0.0
      %221 = vmatpush1.msra.mxu0 0.0
      %222 = vmatprep.subr.mxu0 0.0
      %223 = vmatpush1.msra.mxu0 0.0
      %224 = vmatprep.subr.mxu0 0.0
      %225 = vmatpush1.msra.mxu0 0.0
      %226 = vmatprep.subr.mxu0 0.0
      %227 = vmatpush1.msra.mxu0 0.0
      %228 = vmatprep.subr.mxu0 0.0
      %229 = vmatpush1.msra.mxu0 0.0
      %230 = vmatprep.subr.mxu0 0.0
      %231 = vmatpush1.msra.mxu0 0.0
      %232 = vmatprep.subr.mxu0 0.0
      %233 = vmatpush1.msra.mxu0 0.0
      %234 = vmatprep.subr.mxu0 0.0
      %235 = vmatpush1.msra.mxu0 0.0
      %236 = vmatprep.subr.mxu0 0.0
      %237 = vmatpush1.msra.mxu0 0.0
      %238 = vmatprep.subr.mxu0 0.0
      %239 = vmatpush1.msra.mxu0 0.0
      %240 = vmatprep.subr.mxu0 0.0
      %241 = vmatpush1.msra.mxu0 0.0
      %242 = vmatprep.subr.mxu0 0.0
      %243 = vmatpush1.msra.mxu0 0.0
      %244 = vmatprep.subr.mxu0 0.0
      %245 = vmatpush1.msra.mxu0 0.0
      %246 = vmatprep.subr.mxu0 0.0
      %247 = vmatpush1.msra.mxu0 0.0
      %248 = vmatprep.subr.mxu0 0.0
      %249 = vmatpush1.msra.mxu0 0.0
      %250 = vmatprep.subr.mxu0 0.0
      %251 = vmatpush1.msra.mxu0 0.0
      %252 = vmatprep.subr.mxu0 0.0
      %253 = vmatpush1.msra.mxu0 0.0
      %254 = vmatprep.subr.mxu0 0.0
      %255 = vmatpush1.msra.mxu0 0.0
      %256 = vmatprep.subr.mxu0 0.0
      %257 = vmatpush1.msra.mxu0 0.0
      %258 = vmatprep.subr.mxu0 0.0
      %259 = vmatpush1.msra.mxu0 0.0
      %260 = vmatprep.subr.mxu0 0.0
      %261 = vmatpush1.msra.mxu0 0.0
      %262 = vmatprep.subr.mxu0 0.0
      %263 = vmatpush1.msra.mxu0 0.0
      %264 = vmatprep.mubr.f32.mxu0 0.0
      %265 = vmatmul.mubr.f32.gmra.mrb[0].mxu0 %v190
      %v266 = vpop.f32.mrb[0].mxu0
      %v267 = vadd.f32 %v179, %v266
      %v268 = vpop.f32.mrb[0].mxu0
      %v269 = vadd.f32 %v179, %v268
      %270 = vmatprep.mubr.f32.mxu0 0.0
      %271 = vmatmul.mubr.f32.gmra.mrb[0].mxu0 %v193
      %v272 = vpop.f32.mrb[0].mxu0
      %v273 = vadd.f32 %v184, %v272
      %v274 = vpop.f32.mrb[0].mxu0
      %v275 = vadd.f32 %v184, %v274
      %276 = vdwg.mxu0
      %277 = vst [vmem:[%s170] sm:$0xff] %v267
      %278 = vst [vmem:[%s170 + $0x8] sm:$0xff] %v269
      %279 = vst [vmem:[%s170 + $0x10] sm:$0xff] %v273
      %280 = vst [vmem:[%s170 + $0x18] sm:$0xff] %v275
      %p281 = scmp.lt.s32.totalorder %s14, 1
      %s282 = scalar_select %p281, %s14, 1
      %s283 = smul.addr %s282, 4
      %s284 = smul.addr %s283, 8
      %s285 = scalar_lea.vmem %s3, %s284
      // Predicated region
      $region33: #{_lambda_.10} parent=31 // pred_check
        %p286 = pneg %p100
      $region34: #{_lambda_.10} parent=31 // pred_check_branch
        %288 = sbr.rel (%p286) target = $region36
      $region35: #{_lambda_.10} parent=31 // pred_region
        _
      $region36: #{_lambda_.10} parent=31 // pred_fallthru
        _
    $region32: #{_lambda_.10} parent=5 // pred_fallthru
      _
    %p289 = scmp.le.s32.totalorder 2, %s9
    // Predicated region
    $region37: #{_lambda_.10} parent=5 // pred_check
      %p290 = pneg %p289
    $region38: #{_lambda_.10} parent=5 // pred_check_branch
      %292 = sbr.rel (%p290) target = $region40
    $region39: #{_lambda_.10} parent=5 // pred_region
      %s293 = ssub.s32 %s9, 2
      // Predicated region
      $region41: #{_lambda_.10} parent=39 // pred_check
        %p294 = pneg %p106
      $region42: #{_lambda_.10} parent=39 // pred_check_branch
        %296 = sbr.rel (%p294) target = $region44
      $region43: #{_lambda_.10} parent=39 // pred_region
        %p297 = scmp.lt.s32.totalorder %s15, 1
        %s298 = scalar_select %p297, %s15, 1
        %s299 = smul.addr %s298, 4
        %s300 = smul.addr %s299, 8
        %s301 = scalar_lea.vmem %s3, %s300
      $region44: #{_lambda_.10} parent=39 // pred_fallthru
        _
    $region40: #{_lambda_.10} parent=5 // pred_fallthru
      _
  $region6: #{_lambda_.10} parent=0 // loop_footer
    %s13 = sadd.s32 1, %s9
  $region7: #{_lambda_.10} parent=0 // loop_footer_branch
    %8 = sbr.rel target = $region3
  $region8: #{_lambda_.10} parent=0 // loop_exit
    _

// kernel: _lambda_.11
$region0: #{_lambda_.11}
  #allocation0 [shape = 'u32[]', space=smem, size = 0x4, offset = 0x4, fixed_abs, tag = 'smem constant byte address 0x4 - core index']
  #allocation1 [shape = 'u32[144,128]{1,0:T(1,128)}', space=vmem, size = 0x12000, scoped, tag = 'internal scratch']
  %s0 = inlined_call_operand.vmem [shape: f32[72,2,32], index: 0, kind: input, shape index: {}]
  %s1 = inlined_call_operand.vmem [shape: f32[72,32,32], index: 1, kind: input, shape index: {}]
  %s2 = inlined_call_operand.vmem [shape: f32[72,2,32], index: 2, kind: output, shape index: {}]
  %s3 = sld [smem:[#allocation0]]
  $region41: #{_lambda_.11} parent=0
    _
  %s5 = ssub.s32 1, %s3
  %s6 = scalar_select 0, %s5, %s3
  loop: start=0, step=1, limit=4
  $region2: #{_lambda_.11} parent=0 // loop_pre_header
    _
  $region3: #{_lambda_.11} parent=0 // loop_header
    %s8 = sphi 0, %s12
    %p9 = scmp.ge.s32.totalorder %s8, 4
    %s18 = sphi 0, %s20
    %s21 = sphi 0, %s18
    %s22 = sphi 0, %s21
    %s38 = sphi 0, %s22
    %s44 = sphi 0, %s46
    %s47 = sphi 0, %s44
    %s48 = sphi 0, %s47
    %s64 = sphi 0, %s48
    %s70 = sphi 0, %s72
    %s73 = sphi 0, %s70
    %s74 = sphi 0, %s73
    %s90 = sphi 0, %s74
  $region4: #{_lambda_.11} parent=0 // loop_header_branch
    %11 = sbr.rel (%p9) target = $region8
  $region5: #{_lambda_.11} parent=0 // loop_body
    %s13 = ssub.s32 %s8, 1
    %s14 = ssub.s32 %s8, 2
    %s15 = sadd.s32 %s8, 1
    %s16 = ssub.s32 %s8, %s15
    %p17 = scmp.eq.s32.totalorder %s16, 0
    %s19 = sadd.s32 %s18, 1
    %s20 = scalar_select %p17, %s18, %s19
    %p23 = pneg %p17
    %p24 = scmp.eq.s32.totalorder %s8, 1
    %p25 = por %p23, %p24
    %p26 = scmp.ne.s32.totalorder %s18, %s21
    %p27 = scmp.eq.s32.totalorder %s8, 0
    %p28 = por %p26, %p27
    %p29 = scmp.ne.s32.totalorder %s18, %s21
    %p30 = scmp.eq.s32.totalorder %s13, 1
    %p31 = por %p29, %p30
    %p32 = scmp.ne.s32.totalorder %s21, %s22
    %p33 = scmp.eq.s32.totalorder %s13, 0
    %p34 = por %p32, %p33
    %p35 = scmp.ne.s32.totalorder %s21, %s22
    %p36 = scmp.eq.s32.totalorder %s14, 1
    %p37 = por %p35, %p36
    %p39 = scmp.ne.s32.totalorder %s22, %s38
    %p40 = scmp.eq.s32.totalorder %s14, 0
    %p41 = por %p39, %p40
    %s42 = ssub.s32 %s8, %s15
    %p43 = scmp.eq.s32.totalorder %s42, 0
    %s45 = sadd.s32 %s44, 1
    %s46 = scalar_select %p43, %s44, %s45
    %p49 = pneg %p43
    %p50 = scmp.eq.s32.totalorder %s8, 1
    %p51 = por %p49, %p50
    %p52 = scmp.ne.s32.totalorder %s44, %s47
    %p53 = scmp.eq.s32.totalorder %s8, 0
    %p54 = por %p52, %p53
    %p55 = scmp.ne.s32.totalorder %s44, %s47
    %p56 = scmp.eq.s32.totalorder %s13, 1
    %p57 = por %p55, %p56
    %p58 = scmp.ne.s32.totalorder %s47, %s48
    %p59 = scmp.eq.s32.totalorder %s13, 0
    %p60 = por %p58, %p59
    %p61 = scmp.ne.s32.totalorder %s47, %s48
    %p62 = scmp.eq.s32.totalorder %s14, 1
    %p63 = por %p61, %p62
    %p65 = scmp.ne.s32.totalorder %s48, %s64
    %p66 = scmp.eq.s32.totalorder %s14, 0
    %p67 = por %p65, %p66
    %s68 = ssub.s32 %s8, %s15
    %p69 = scmp.eq.s32.totalorder %s68, 0
    %s71 = sadd.s32 %s70, 1
    %s72 = scalar_select %p69, %s70, %s71
    %p75 = pneg %p69
    %p76 = scmp.eq.s32.totalorder %s8, 1
    %p77 = por %p75, %p76
    %p78 = scmp.ne.s32.totalorder %s70, %s73
    %p79 = scmp.eq.s32.totalorder %s8, 0
    %p80 = por %p78, %p79
    %p81 = scmp.ne.s32.totalorder %s70, %s73
    %p82 = scmp.eq.s32.totalorder %s13, 1
    %p83 = por %p81, %p82
    %p84 = scmp.ne.s32.totalorder %s73, %s74
    %p85 = scmp.eq.s32.totalorder %s13, 0
    %p86 = por %p84, %p85
    %p87 = scmp.ne.s32.totalorder %s73, %s74
    %p88 = scmp.eq.s32.totalorder %s14, 1
    %p89 = por %p87, %p88
    %p91 = scmp.ne.s32.totalorder %s74, %s90
    %p92 = scmp.eq.s32.totalorder %s14, 0
    %p93 = por %p91, %p92
    %p94 = scmp.le.s32.totalorder 1, %s8
    %p95 = scmp.lt.s32.totalorder %s8, 3
    %p96 = pnand %p94, %p95
    %p97 = pneg %p96
    // Predicated region
    $region9: #{_lambda_.11} parent=5 // pred_check
      _
    $region10: #{_lambda_.11} parent=5 // pred_check_branch
      %99 = sbr.rel (%p96) target = $region12
    $region11: #{_lambda_.11} parent=5 // pred_region
      %s100 = ssub.s32 %s8, 1
    $region12: #{_lambda_.11} parent=5 // pred_fallthru
      _
    %p101 = scmp.lt.s32.totalorder %s8, 2
    // Predicated region
    $region13: #{_lambda_.11} parent=5 // pred_check
      %p102 = pneg %p101
    $region14: #{_lambda_.11} parent=5 // pred_check_branch
      %104 = sbr.rel (%p102) target = $region16
    $region15: #{_lambda_.11} parent=5 // pred_region
      // Predicated region
      $region17: #{_lambda_.11} parent=15 // pred_check
        %p105 = pneg %p28
      $region18: #{_lambda_.11} parent=15 // pred_check_branch
        %107 = sbr.rel (%p105) target = $region20
      $region19: #{_lambda_.11} parent=15 // pred_region
        %s108 = smul.u32 36, %s8
        %p109 = scmp.lt.s32.totalorder %s108, 71
        %s110 = scalar_select %p109, %s108, 71
        %s111 = smul.addr %s110, 2
        %s112 = scalar_lea.vmem %s0, %s111
        %s113 = smul.u32 36, %s8
      $region20: #{_lambda_.11} parent=15 // pred_fallthru
        _
      // Predicated region
      $region21: #{_lambda_.11} parent=15 // pred_check
        %p114 = pneg %p54
      $region22: #{_lambda_.11} parent=15 // pred_check_branch
        %116 = sbr.rel (%p114) target = $region24
      $region23: #{_lambda_.11} parent=15 // pred_region
        %s117 = smul.u32 36, %s8
        %p118 = scmp.lt.s32.totalorder %s117, 71
        %s119 = scalar_select %p118, %s117, 71
        %s120 = smul.addr %s119, 4
        %s121 = smul.addr %s120, 8
        %s122 = scalar_lea.vmem %s1, %s121
        %s123 = smul.u32 36, %s8
      $region24: #{_lambda_.11} parent=15 // pred_fallthru
        _
    $region16: #{_lambda_.11} parent=5 // pred_fallthru
      _
    %p124 = scmp.le.s32.totalorder 1, %s8
    %p125 = scmp.lt.s32.totalorder %s8, 3
    %p126 = pnand %p124, %p125
    %p127 = pneg %p126
    // Predicated region
    $region25: #{_lambda_.11} parent=5 // pred_check
      _
    $region26: #{_lambda_.11} parent=5 // pred_check_branch
      %129 = sbr.rel (%p126) target = $region28
    $region27: #{_lambda_.11} parent=5 // pred_region
      %s130 = ssub.s32 %s8, 1
      %s131 = smul.u32 36, %s13
      %p132 = scmp.lt.s32.totalorder %s131, 71
      %s133 = scalar_select %p132, %s131, 71
      %s134 = smul.addr %s133, 2
      %s135 = scalar_lea.vmem %s0, %s134
      %p136 = pneg %p34
      %p137 = pneg %p31
      %s138 = smul.u32 36, %s13
      %p139 = scmp.lt.s32.totalorder %s138, 71
      %s140 = scalar_select %p139, %s138, 71
      %s141 = smul.addr %s140, 4
      %s142 = smul.addr %s141, 8
      %s143 = scalar_lea.vmem %s1, %s142
      %p144 = pneg %p60
      %p145 = pneg %p57
      %p146 = pneg %p86
      %p147 = pneg %p83
      %s148 = smul.u32 36, %s13
      %p149 = scmp.lt.s32.totalorder %s148, 71
      %s150 = scalar_select %p149, %s148, 71
      %s151 = smul.addr %s150, 2
      %s152 = scalar_lea.vmem %s2, %s151
      %s153 = smul.u32 36, %s13
      %p154 = scmp.lt.s32.totalorder %s153, 71
      %s155 = scalar_select %p154, %s153, 71
      %s156 = smul.addr %s155, 2
      %s157 = scalar_lea.vmem %s0, %s156
      %s158 = smul.u32 36, %s13
      %s159 = smul.u32 36, %s13
      %p160 = scmp.lt.s32.totalorder %s159, 71
      %s161 = scalar_select %p160, %s159, 71
      %s162 = smul.addr %s161, 4
      %s163 = smul.addr %s162, 8
      %s164 = scalar_lea.vmem %s1, %s163
      %s165 = smul.u32 36, %s13
      %s166 = smul.u32 36, %s13
      %p167 = scmp.lt.s32.totalorder %s166, 71
      %s168 = scalar_select %p167, %s166, 71
      %s169 = smul.addr %s168, 2
      %s170 = scalar_lea.vmem %s2, %s169
      %s171 = smul.u32 36, %s13
      %v172 = vld [vmem:[%s157] sm:$0x3]
      %v173 = vld [vmem:[%s157 + $0x2] sm:$0x3]
      %v174 = vld [vmem:[%s157 + $0x4] sm:$0x3]
      %v175 = vld [vmem:[%s157 + $0x6] sm:$0x3]
      %v176 = vld [vmem:[%s157 + $0x8] sm:$0x3]
      %v177 = vld [vmem:[%s157 + $0xa] sm:$0x3]
      %v178 = vld [vmem:[%s157 + $0xc] sm:$0x3]
      %v179 = vld [vmem:[%s157 + $0xe] sm:$0x3]
      %v180 = vld [vmem:[%s157 + $0x10] sm:$0x3]
      %v181 = vld [vmem:[%s157 + $0x12] sm:$0x3]
      %v182 = vld [vmem:[%s157 + $0x14] sm:$0x3]
      %v183 = vld [vmem:[%s157 + $0x16] sm:$0x3]
      %v184 = vld [vmem:[%s157 + $0x18] sm:$0x3]
      %v185 = vld [vmem:[%s157 + $0x1a] sm:$0x3]
      %v186 = vld [vmem:[%s157 + $0x1c] sm:$0x3]
      %v187 = vld [vmem:[%s157 + $0x1e] sm:$0x3]
      %v188 = vld [vmem:[%s157 + $0x20] sm:$0x3]
      %v189 = vld [vmem:[%s157 + $0x22] sm:$0x3]
      %v190 = vld [vmem:[%s157 + $0x24] sm:$0x3]
      %v191 = vld [vmem:[%s157 + $0x26] sm:$0x3]
      %v192 = vld [vmem:[%s157 + $0x28] sm:$0x3]
      %v193 = vld [vmem:[%s157 + $0x2a] sm:$0x3]
      %v194 = vld [vmem:[%s157 + $0x2c] sm:$0x3]
      %v195 = vld [vmem:[%s157 + $0x2e] sm:$0x3]
      %v196 = vld [vmem:[%s157 + $0x30] sm:$0x3]
      %v197 = vld [vmem:[%s157 + $0x32] sm:$0x3]
      %v198 = vld [vmem:[%s157 + $0x34] sm:$0x3]
      %v199 = vld [vmem:[%s157 + $0x36] sm:$0x3]
      %v200 = vld [vmem:[%s157 + $0x38] sm:$0x3]
      %v201 = vld [vmem:[%s157 + $0x3a] sm:$0x3]
      %v202 = vld [vmem:[%s157 + $0x3c] sm:$0x3]
      %v203 = vld [vmem:[%s157 + $0x3e] sm:$0x3]
      %v204 = vld [vmem:[%s157 + $0x40] sm:$0x3]
      %v205 = vld [vmem:[%s157 + $0x42] sm:$0x3]
      %v206 = vld [vmem:[%s157 + $0x44] sm:$0x3]
      %v207 = vld [vmem:[%s157 + $0x46] sm:$0x3]
      %v208 = vld [vmem:[%s164] sm:$0xff]
      %v209 = vld [vmem:[%s164 + $0x8] sm:$0xff]
      %v210 = vld [vmem:[%s164 + $0x10] sm:$0xff]
      %v211 = vld [vmem:[%s164 + $0x18] sm:$0xff]
      %v212 = vld [vmem:[%s164 + $0x20] sm:$0xff]
      %v213 = vld [vmem:[%s164 + $0x28] sm:$0xff]
      %v214 = vld [vmem:[%s164 + $0x30] sm:$0xff]
      %v215 = vld [vmem:[%s164 + $0x38] sm:$0xff]
      %v216 = vld [vmem:[%s164 + $0x40] sm:$0xff]
      %v217 = vld [vmem:[%s164 + $0x48] sm:$0xff]
      %v218 = vld [vmem:[%s164 + $0x50] sm:$0xff]
      %v219 = vld [vmem:[%s164 + $0x58] sm:$0xff]
      %v220 = vld [vmem:[%s164 + $0x60] sm:$0xff]
      %v221 = vld [vmem:[%s164 + $0x68] sm:$0xff]
      %v222 = vld [vmem:[%s164 + $0x70] sm:$0xff]
      %v223 = vld [vmem:[%s164 + $0x78] sm:$0xff]
      %v224 = vld [vmem:[%s164 + $0x80] sm:$0xff]
      %v225 = vld [vmem:[%s164 + $0x88] sm:$0xff]
      %v226 = vld [vmem:[%s164 + $0x90] sm:$0xff]
      %v227 = vld [vmem:[%s164 + $0x98] sm:$0xff]
      %v228 = vld [vmem:[%s164 + $0xa0] sm:$0xff]
      %v229 = vld [vmem:[%s164 + $0xa8] sm:$0xff]
      %v230 = vld [vmem:[%s164 + $0xb0] sm:$0xff]
      %v231 = vld [vmem:[%s164 + $0xb8] sm:$0xff]
      %v232 = vld [vmem:[%s164 + $0xc0] sm:$0xff]
      %v233 = vld [vmem:[%s164 + $0xc8] sm:$0xff]
      %v234 = vld [vmem:[%s164 + $0xd0] sm:$0xff]
      %v235 = vld [vmem:[%s164 + $0xd8] sm:$0xff]
      %v236 = vld [vmem:[%s164 + $0xe0] sm:$0xff]
      %v237 = vld [vmem:[%s164 + $0xe8] sm:$0xff]
      %v238 = vld [vmem:[%s164 + $0xf0] sm:$0xff]
      %v239 = vld [vmem:[%s164 + $0xf8] sm:$0xff]
      %v240 = vld [vmem:[%s164 + $0x100] sm:$0xff]
      %v241 = vld [vmem:[%s164 + $0x108] sm:$0xff]
      %v242 = vld [vmem:[%s164 + $0x110] sm:$0xff]
      %v243 = vld [vmem:[%s164 + $0x118] sm:$0xff]
      %v244 = vld [vmem:[%s164 + $0x120] sm:$0xff]
      %v245 = vld [vmem:[%s164 + $0x128] sm:$0xff]
      %v246 = vld [vmem:[%s164 + $0x130] sm:$0xff]
      %v247 = vld [vmem:[%s164 + $0x138] sm:$0xff]
      %v248 = vld [vmem:[%s164 + $0x140] sm:$0xff]
      %v249 = vld [vmem:[%s164 + $0x148] sm:$0xff]
      %v250 = vld [vmem:[%s164 + $0x150] sm:$0xff]
      %v251 = vld [vmem:[%s164 + $0x158] sm:$0xff]
      %v252 = vld [vmem:[%s164 + $0x160] sm:$0xff]
      %v253 = vld [vmem:[%s164 + $0x168] sm:$0xff]
      %v254 = vld [vmem:[%s164 + $0x170] sm:$0xff]
      %v255 = vld [vmem:[%s164 + $0x178] sm:$0xff]
      %v256 = vld [vmem:[%s164 + $0x180] sm:$0xff]
      %v257 = vld [vmem:[%s164 + $0x188] sm:$0xff]
      %v258 = vld [vmem:[%s164 + $0x190] sm:$0xff]
      %v259 = vld [vmem:[%s164 + $0x198] sm:$0xff]
      %v260 = vld [vmem:[%s164 + $0x1a0] sm:$0xff]
      %v261 = vld [vmem:[%s164 + $0x1a8] sm:$0xff]
      %v262 = vld [vmem:[%s164 + $0x1b0] sm:$0xff]
      %v263 = vld [vmem:[%s164 + $0x1b8] sm:$0xff]
      %v264 = vld [vmem:[%s164 + $0x1c0] sm:$0xff]
      %v265 = vld [vmem:[%s164 + $0x1c8] sm:$0xff]
      %v266 = vld [vmem:[%s164 + $0x1d0] sm:$0xff]
      %v267 = vld [vmem:[%s164 + $0x1d8] sm:$0xff]
      %v268 = vld [vmem:[%s164 + $0x1e0] sm:$0xff]
      %v269 = vld [vmem:[%s164 + $0x1e8] sm:$0xff]
      %v270 = vld [vmem:[%s164 + $0x1f0] sm:$0xff]
      %v271 = vld [vmem:[%s164 + $0x1f8] sm:$0xff]
      %v272 = vld [vmem:[%s164 + $0x200] sm:$0xff]
      %v273 = vld [vmem:[%s164 + $0x208] sm:$0xff]
      %v274 = vld [vmem:[%s164 + $0x210] sm:$0xff]
      %v275 = vld [vmem:[%s164 + $0x218] sm:$0xff]
      %v276 = vld [vmem:[%s164 + $0x220] sm:$0xff]
      %v277 = vld [vmem:[%s164 + $0x228] sm:$0xff]
      %v278 = vld [vmem:[%s164 + $0x230] sm:$0xff]
      %v279 = vld [vmem:[%s164 + $0x238] sm:$0xff]
      %v280 = vld [vmem:[%s164 + $0x240] sm:$0xff]
      %v281 = vld [vmem:[%s164 + $0x248] sm:$0xff]
      %v282 = vld [vmem:[%s164 + $0x250] sm:$0xff]
      %v283 = vld [vmem:[%s164 + $0x258] sm:$0xff]
      %v284 = vld [vmem:[%s164 + $0x260] sm:$0xff]
      %v285 = vld [vmem:[%s164 + $0x268] sm:$0xff]
      %v286 = vld [vmem:[%s164 + $0x270] sm:$0xff]
      %v287 = vld [vmem:[%s164 + $0x278] sm:$0xff]
      %v288 = vld [vmem:[%s164 + $0x280] sm:$0xff]
      %v289 = vld [vmem:[%s164 + $0x288] sm:$0xff]
      %v290 = vld [vmem:[%s164 + $0x290] sm:$0xff]
      %v291 = vld [vmem:[%s164 + $0x298] sm:$0xff]
      %v292 = vld [vmem:[%s164 + $0x2a0] sm:$0xff]
      %v293 = vld [vmem:[%s164 + $0x2a8] sm:$0xff]
      %v294 = vld [vmem:[%s164 + $0x2b0] sm:$0xff]
      %v295 = vld [vmem:[%s164 + $0x2b8] sm:$0xff]
      %v296 = vld [vmem:[%s164 + $0x2c0] sm:$0xff]
      %v297 = vld [vmem:[%s164 + $0x2c8] sm:$0xff]
      %v298 = vld [vmem:[%s164 + $0x2d0] sm:$0xff]
      %v299 = vld [vmem:[%s164 + $0x2d8] sm:$0xff]
      %v300 = vld [vmem:[%s164 + $0x2e0] sm:$0xff]
      %v301 = vld [vmem:[%s164 + $0x2e8] sm:$0xff]
      %v302 = vld [vmem:[%s164 + $0x2f0] sm:$0xff]
      %v303 = vld [vmem:[%s164 + $0x2f8] sm:$0xff]
      %v304 = vld [vmem:[%s164 + $0x300] sm:$0xff]
      %v305 = vld [vmem:[%s164 + $0x308] sm:$0xff]
      %v306 = vld [vmem:[%s164 + $0x310] sm:$0xff]
      %v307 = vld [vmem:[%s164 + $0x318] sm:$0xff]
      %v308 = vld [vmem:[%s164 + $0x320] sm:$0xff]
      %v309 = vld [vmem:[%s164 + $0x328] sm:$0xff]
      %v310 = vld [vmem:[%s164 + $0x330] sm:$0xff]
      %v311 = vld [vmem:[%s164 + $0x338] sm:$0xff]
      %v312 = vld [vmem:[%s164 + $0x340] sm:$0xff]
      %v313 = vld [vmem:[%s164 + $0x348] sm:$0xff]
      %v314 = vld [vmem:[%s164 + $0x350] sm:$0xff]
      %v315 = vld [vmem:[%s164 + $0x358] sm:$0xff]
      %v316 = vld [vmem:[%s164 + $0x360] sm:$0xff]
      %v317 = vld [vmem:[%s164 + $0x368] sm:$0xff]
      %v318 = vld [vmem:[%s164 + $0x370] sm:$0xff]
      %v319 = vld [vmem:[%s164 + $0x378] sm:$0xff]
      %v320 = vld [vmem:[%s164 + $0x380] sm:$0xff]
      %v321 = vld [vmem:[%s164 + $0x388] sm:$0xff]
      %v322 = vld [vmem:[%s164 + $0x390] sm:$0xff]
      %v323 = vld [vmem:[%s164 + $0x398] sm:$0xff]
      %v324 = vld [vmem:[%s164 + $0x3a0] sm:$0xff]
      %v325 = vld [vmem:[%s164 + $0x3a8] sm:$0xff]
      %v326 = vld [vmem:[%s164 + $0x3b0] sm:$0xff]
      %v327 = vld [vmem:[%s164 + $0x3b8] sm:$0xff]
      %v328 = vld [vmem:[%s164 + $0x3c0] sm:$0xff]
      %v329 = vld [vmem:[%s164 + $0x3c8] sm:$0xff]
      %v330 = vld [vmem:[%s164 + $0x3d0] sm:$0xff]
      %v331 = vld [vmem:[%s164 + $0x3d8] sm:$0xff]
      %v332 = vld [vmem:[%s164 + $0x3e0] sm:$0xff]
      %v333 = vld [vmem:[%s164 + $0x3e8] sm:$0xff]
      %v334 = vld [vmem:[%s164 + $0x3f0] sm:$0xff]
      %v335 = vld [vmem:[%s164 + $0x3f8] sm:$0xff]
      %v336 = vld [vmem:[%s164 + $0x400] sm:$0xff]
      %v337 = vld [vmem:[%s164 + $0x408] sm:$0xff]
      %v338 = vld [vmem:[%s164 + $0x410] sm:$0xff]
      %v339 = vld [vmem:[%s164 + $0x418] sm:$0xff]
      %v340 = vld [vmem:[%s164 + $0x420] sm:$0xff]
      %v341 = vld [vmem:[%s164 + $0x428] sm:$0xff]
      %v342 = vld [vmem:[%s164 + $0x430] sm:$0xff]
      %v343 = vld [vmem:[%s164 + $0x438] sm:$0xff]
      %v344 = vld [vmem:[%s164 + $0x440] sm:$0xff]
      %v345 = vld [vmem:[%s164 + $0x448] sm:$0xff]
      %v346 = vld [vmem:[%s164 + $0x450] sm:$0xff]
      %v347 = vld [vmem:[%s164 + $0x458] sm:$0xff]
      %v348 = vld [vmem:[%s164 + $0x460] sm:$0xff]
      %v349 = vld [vmem:[%s164 + $0x468] sm:$0xff]
      %v350 = vld [vmem:[%s164 + $0x470] sm:$0xff]
      %v351 = vld [vmem:[%s164 + $0x478] sm:$0xff]
      %vm352 = vcmask 261120
      %v354 = vsel %vm352, %v172, 0
      %356 = vmatprep.subr.mxu0 0.0
      %357 = vmatpush1.msra.mxu0 %v208
      %358 = vmatprep.subr.mxu0 0.0
      %359 = vmatpush1.msra.mxu0 %v209
      %360 = vmatprep.subr.mxu0 0.0
      %361 = vmatpush1.msra.mxu0 %v210
      %362 = vmatprep.subr.mxu0 0.0
      %363 = vmatpush1.msra.mxu0 %v211
      %364 = vmatprep.subr.mxu0 0.0
      %365 = vmatpush1.msra.mxu0 0.0
      %366 = vmatprep.subr.mxu0 0.0
      %367 = vmatpush1.msra.mxu0 0.0
      %368 = vmatprep.subr.mxu0 0.0
      %369 = vmatpush1.msra.mxu0 0.0
      %370 = vmatprep.subr.mxu0 0.0
      %371 = vmatpush1.msra.mxu0 0.0
      %372 = vmatprep.subr.mxu0 0.0
      %373 = vmatpush1.msra.mxu0 0.0
      %374 = vmatprep.subr.mxu0 0.0
      %375 = vmatpush1.msra.mxu0 0.0
      %376 = vmatprep.subr.mxu0 0.0
      %377 = vmatpush1.msra.mxu0 0.0
      %378 = vmatprep.subr.mxu0 0.0
      %379 = vmatpush1.msra.mxu0 0.0
      %380 = vmatprep.subr.mxu0 0.0
      %381 = vmatpush1.msra.mxu0 0.0
      %382 = vmatprep.subr.mxu0 0.0
      %383 = vmatpush1.msra.mxu0 0.0
      %384 = vmatprep.subr.mxu0 0.0
      %385 = vmatpush1.msra.mxu0 0.0
      %386 = vmatprep.subr.mxu0 0.0
      %387 = vmatpush1.msra.mxu0 0.0
      %388 = vmatprep.subr.mxu0 0.0
      %389 = vmatpush1.msra.mxu0 0.0
      %390 = vmatprep.subr.mxu0 0.0
      %391 = vmatpush1.msra.mxu0 0.0
      %392 = vmatprep.subr.mxu0 0.0
      %393 = vmatpush1.msra.mxu0 0.0
      %394 = vmatprep.subr.mxu0 0.0
      %395 = vmatpush1.msra.mxu0 0.0
      %396 = vmatprep.subr.mxu0 0.0
      %397 = vmatpush1.msra.mxu0 0.0
      %398 = vmatprep.subr.mxu0 0.0
      %399 = vmatpush1.msra.mxu0 0.0
      %400 = vmatprep.subr.mxu0 0.0
      %401 = vmatpush1.msra.mxu0 0.0
      %402 = vmatprep.subr.mxu0 0.0
      %403 = vmatpush1.msra.mxu0 0.0
      %404 = vmatprep.subr.mxu0 0.0
      %405 = vmatpush1.msra.mxu0 0.0
      %406 = vmatprep.subr.mxu0 0.0
      %407 = vmatpush1.msra.mxu0 0.0
      %408 = vmatprep.subr.mxu0 0.0
      %409 = vmatpush1.msra.mxu0 0.0
      %410 = vmatprep.subr.mxu0 0.0
      %411 = vmatpush1.msra.mxu0 0.0
      %412 = vmatprep.subr.mxu0 0.0
      %413 = vmatpush1.msra.mxu0 0.0
      %414 = vmatprep.subr.mxu0 0.0
      %415 = vmatpush1.msra.mxu0 0.0
      %416 = vmatprep.subr.mxu0 0.0
      %417 = vmatpush1.msra.mxu0 0.0
      %418 = vmatprep.subr.mxu0 0.0
      %419 = vmatpush1.msra.mxu0 0.0
      %420 = vmatprep.mubr.f32.mxu0 0.0
      %421 = vmatmul.mubr.f32.gmra.mrb[0].mxu0 %v354
      %v422 = vpop.f32.mrb[0].mxu0
      %v423 = vadd.f32 0.0, %v422
      %v424 = vpop.f32.mrb[0].mxu0
      %425 = vdwg.mxu0
      %v427 = vsel %vm352, %v173, 0
      %429 = vmatprep.subr.mxu0 0.0
      %430 = vmatpush1.msra.mxu0 %v212
      %431 = vmatprep.subr.mxu0 0.0
      %432 = vmatpush1.msra.mxu0 %v213
      %433 = vmatprep.subr.mxu0 0.0
      %434 = vmatpush1.msra.mxu0 %v214
      %435 = vmatprep.subr.mxu0 0.0
      %436 = vmatpush1.msra.mxu0 %v215
      %437 = vmatprep.subr.mxu0 0.0
      %438 = vmatpush1.msra.mxu0 0.0
      %439 = vmatprep.subr.mxu0 0.0
      %440 = vmatpush1.msra.mxu0 0.0
      %441 = vmatprep.subr.mxu0 0.0
      %442 = vmatpush1.msra.mxu0 0.0
      %443 = vmatprep.subr.mxu0 0.0
      %444 = vmatpush1.msra.mxu0 0.0
      %445 = vmatprep.subr.mxu0 0.0
      %446 = vmatpush1.msra.mxu0 0.0
      %447 = vmatprep.subr.mxu0 0.0
      %448 = vmatpush1.msra.mxu0 0.0
      %449 = vmatprep.subr.mxu0 0.0
      %450 = vmatpush1.msra.mxu0 0.0
      %451 = vmatprep.subr.mxu0 0.0
      %452 = vmatpush1.msra.mxu0 0.0
      %453 = vmatprep.subr.mxu0 0.0
      %454 = vmatpush1.msra.mxu0 0.0
      %455 = vmatprep.subr.mxu0 0.0
      %456 = vmatpush1.msra.mxu0 0.0
      %457 = vmatprep.subr.mxu0 0.0
      %458 = vmatpush1.msra.mxu0 0.0
      %459 = vmatprep.subr.mxu0 0.0
      %460 = vmatpush1.msra.mxu0 0.0
      %461 = vmatprep.subr.mxu0 0.0
      %462 = vmatpush1.msra.mxu0 0.0
      %463 = vmatprep.subr.mxu0 0.0
      %464 = vmatpush1.msra.mxu0 0.0
      %465 = vmatprep.subr.mxu0 0.0
      %466 = vmatpush1.msra.mxu0 0.0
      %467 = vmatprep.subr.mxu0 0.0
      %468 = vmatpush1.msra.mxu0 0.0
      %469 = vmatprep.subr.mxu0 0.0
      %470 = vmatpush1.msra.mxu0 0.0
      %471 = vmatprep.subr.mxu0 0.0
      %472 = vmatpush1.msra.mxu0 0.0
      %473 = vmatprep.subr.mxu0 0.0
      %474 = vmatpush1.msra.mxu0 0.0
      %475 = vmatprep.subr.mxu0 0.0
      %476 = vmatpush1.msra.mxu0 0.0
      %477 = vmatprep.subr.mxu0 0.0
      %478 = vmatpush1.msra.mxu0 0.0
      %479 = vmatprep.subr.mxu0 0.0
      %480 = vmatpush1.msra.mxu0 0.0
      %481 = vmatprep.subr.mxu0 0.0
      %482 = vmatpush1.msra.mxu0 0.0
      %483 = vmatprep.subr.mxu0 0.0
      %484 = vmatpush1.msra.mxu0 0.0
      %485 = vmatprep.subr.mxu0 0.0
      %486 = vmatpush1.msra.mxu0 0.0
      %487 = vmatprep.subr.mxu0 0.0
      %488 = vmatpush1.msra.mxu0 0.0
      %489 = vmatprep.subr.mxu0 0.0
      %490 = vmatpush1.msra.mxu0 0.0
      %491 = vmatprep.subr.mxu0 0.0
      %492 = vmatpush1.msra.mxu0 0.0
      %493 = vmatprep.mubr.f32.mxu0 0.0
      %494 = vmatmul.mubr.f32.gmra.mrb[0].mxu0 %v427
      %v495 = vpop.f32.mrb[0].mxu0
      %v496 = vadd.f32 0.0, %v495
      %v497 = vpop.f32.mrb[0].mxu0
      %498 = vdwg.mxu0
      %v500 = vsel %vm352, %v174, 0
      %502 = vmatprep.subr.mxu0 0.0
      %503 = vmatpush1.msra.mxu0 %v216
      %504 = vmatprep.subr.mxu0 0.0
      %505 = vmatpush1.msra.mxu0 %v217
      %506 = vmatprep.subr.mxu0 0.0
      %507 = vmatpush1.msra.mxu0 %v218
      %508 = vmatprep.subr.mxu0 0.0
      %509 = vmatpush1.msra.mxu0 %v219
      %510 = vmatprep.subr.mxu0 0.0
      %511 = vmatpush1.msra.mxu0 0.0
      %512 = vmatprep.subr.mxu0 0.0
      %513 = vmatpush1.msra.mxu0 0.0
      %514 = vmatprep.subr.mxu0 0.0
      %515 = vmatpush1.msra.mxu0 0.0
      %516 = vmatprep.subr.mxu0 0.0
      %517 = vmatpush1.msra.mxu0 0.0
      %518 = vmatprep.subr.mxu0 0.0
      %519 = vmatpush1.msra.mxu0 0.0
      %520 = vmatprep.subr.mxu0 0.0
      %521 = vmatpush1.msra.mxu0 0.0
      %522 = vmatprep.subr.mxu0 0.0
      %523 = vmatpush1.msra.mxu0 0.0
      %524 = vmatprep.subr.mxu0 0.0
      %525 = vmatpush1.msra.mxu0 0.0
      %526 = vmatprep.subr.mxu0 0.0
      %527 = vmatpush1.msra.mxu0 0.0
      %528 = vmatprep.subr.mxu0 0.0
      %529 = vmatpush1.msra.mxu0 0.0
      %530 = vmatprep.subr.mxu0 0.0
      %531 = vmatpush1.msra.mxu0 0.0
      %532 = vmatprep.subr.mxu0 0.0
      %533 = vmatpush1.msra.mxu0 0.0
      %534 = vmatprep.subr.mxu0 0.0
      %535 = vmatpush1.msra.mxu0 0.0
      %536 = vmatprep.subr.mxu0 0.0
      %537 = vmatpush1.msra.mxu0 0.0
      %538 = vmatprep.subr.mxu0 0.0
      %539 = vmatpush1.msra.mxu0 0.0
      %540 = vmatprep.subr.mxu0 0.0
      %541 = vmatpush1.msra.mxu0 0.0
      %542 = vmatprep.subr.mxu0 0.0
      %543 = vmatpush1.msra.mxu0 0.0
      %544 = vmatprep.subr.mxu0 0.0
      %545 = vmatpush1.msra.mxu0 0.0
      %546 = vmatprep.subr.mxu0 0.0
      %547 = vmatpush1.msra.mxu0 0.0
      %548 = vmatprep.subr.mxu0 0.0
      %549 = vmatpush1.msra.mxu0 0.0
      %550 = vmatprep.subr.mxu0 0.0
      %551 = vmatpush1.msra.mxu0 0.0
      %552 = vmatprep.subr.mxu0 0.0
      %553 = vmatpush1.msra.mxu0 0.0
      %554 = vmatprep.subr.mxu0 0.0
      %555 = vmatpush1.msra.mxu0 0.0
      %556 = vmatprep.subr.mxu0 0.0
      %557 = vmatpush1.msra.mxu0 0.0
      %558 = vmatprep.subr.mxu0 0.0
      %559 = vmatpush1.msra.mxu0 0.0
      %560 = vmatprep.subr.mxu0 0.0
      %561 = vmatpush1.msra.mxu0 0.0
      %562 = vmatprep.subr.mxu0 0.0
      %563 = vmatpush1.msra.mxu0 0.0
      %564 = vmatprep.subr.mxu0 0.0
      %565 = vmatpush1.msra.mxu0 0.0
      %566 = vmatprep.mubr.f32.mxu0 0.0
      %567 = vmatmul.mubr.f32.gmra.mrb[0].mxu0 %v500
      %v568 = vpop.f32.mrb[0].mxu0
      %v569 = vadd.f32 0.0, %v568
      %v570 = vpop.f32.mrb[0].mxu0
      %571 = vdwg.mxu0
      %v573 = vsel %vm352, %v175, 0
      %575 = vmatprep.subr.mxu0 0.0
      %576 = vmatpush1.msra.mxu0 %v220
      %577 = vmatprep.subr.mxu0 0.0
      %578 = vmatpush1.msra.mxu0 %v221
      %579 = vmatprep.subr.mxu0 0.0
      %580 = vmatpush1.msra.mxu0 %v222
      %581 = vmatprep.subr.mxu0 0.0
      %582 = vmatpush1.msra.mxu0 %v223
      %583 = vmatprep.subr.mxu0 0.0
      %584 = vmatpush1.msra.mxu0 0.0
      %585 = vmatprep.subr.mxu0 0.0
      %586 = vmatpush1.msra.mxu0 0.0
      %587 = vmatprep.subr.mxu0 0.0
      %588 = vmatpush1.msra.mxu0 0.0
      %589 = vmatprep.subr.mxu0 0.0
      %590 = vmatpush1.msra.mxu0 0.0
      %591 = vmatprep.subr.mxu0 0.0
      %592 = vmatpush1.msra.mxu0 0.0
      %593 = vmatprep.subr.mxu0 0.0
      %594 = vmatpush1.msra.mxu0 0.0
      %595 = vmatprep.subr.mxu0 0.0
      %596 = vmatpush1.msra.mxu0 0.0
      %597 = vmatprep.subr.mxu0 0.0
      %598 = vmatpush1.msra.mxu0 0.0
      %599 = vmatprep.subr.mxu0 0.0
      %600 = vmatpush1.msra.mxu0 0.0
      %601 = vmatprep.subr.mxu0 0.0
      %602 = vmatpush1.msra.mxu0 0.0
      %603 = vmatprep.subr.mxu0 0.0
      %604 = vmatpush1.msra.mxu0 0.0
      %605 = vmatprep.subr.mxu0 0.0
      %606 = vmatpush1.msra.mxu0 0.0
      %607 = vmatprep.subr.mxu0 0.0
      %608 = vmatpush1.msra.mxu0 0.0
      %609 = vmatprep.subr.mxu0 0.0
      %610 = vmatpush1.msra.mxu0 0.0
      %611 = vmatprep.subr.mxu0 0.0
      %612 = vmatpush1.msra.mxu0 0.0
      %613 = vmatprep.subr.mxu0 0.0
      %614 = vmatpush1.msra.mxu0 0.0
      %615 = vmatprep.subr.mxu0 0.0
      %616 = vmatpush1.msra.mxu0 0.0
      %617 = vmatprep.subr.mxu0 0.0
      %618 = vmatpush1.msra.mxu0 0.0
      %619 = vmatprep.subr.mxu0 0.0
      %620 = vmatpush1.msra.mxu0 0.0
      %621 = vmatprep.subr.mxu0 0.0
      %622 = vmatpush1.msra.mxu0 0.0
      %623 = vmatprep.subr.mxu0 0.0
      %624 = vmatpush1.msra.mxu0 0.0
      %625 = vmatprep.subr.mxu0 0.0
      %626 = vmatpush1.msra.mxu0 0.0
      %627 = vmatprep.subr.mxu0 0.0
      %628 = vmatpush1.msra.mxu0 0.0
      %629 = vmatprep.subr.mxu0 0.0
      %630 = vmatpush1.msra.mxu0 0.0
      %631 = vmatprep.subr.mxu0 0.0
      %632 = vmatpush1.msra.mxu0 0.0
      %633 = vmatprep.subr.mxu0 0.0
      %634 = vmatpush1.msra.mxu0 0.0
      %635 = vmatprep.subr.mxu0 0.0
      %636 = vmatpush1.msra.mxu0 0.0
      %637 = vmatprep.subr.mxu0 0.0
      %638 = vmatpush1.msra.mxu0 0.0
      %639 = vmatprep.mubr.f32.mxu0 0.0
      %640 = vmatmul.mubr.f32.gmra.mrb[0].mxu0 %v573
      %v641 = vpop.f32.mrb[0].mxu0
      %v642 = vadd.f32 0.0, %v641
      %v643 = vpop.f32.mrb[0].mxu0
      %644 = vdwg.mxu0
      %v646 = vsel %vm352, %v176, 0
      %648 = vmatprep.subr.mxu0 0.0
      %649 = vmatpush1.msra.mxu0 %v224
      %650 = vmatprep.subr.mxu0 0.0
      %651 = vmatpush1.msra.mxu0 %v225
      %652 = vmatprep.subr.mxu0 0.0
      %653 = vmatpush1.msra.mxu0 %v226
      %654 = vmatprep.subr.mxu0 0.0
      %655 = vmatpush1.msra.mxu0 %v227
      %656 = vmatprep.subr.mxu0 0.0
      %657 = vmatpush1.msra.mxu0 0.0
      %658 = vmatprep.subr.mxu0 0.0
      %659 = vmatpush1.msra.mxu0 0.0
      %660 = vmatprep.subr.mxu0 0.0
      %661 = vmatpush1.msra.mxu0 0.0
      %662 = vmatprep.subr.mxu0 0.0
      %663 = vmatpush1.msra.mxu0 0.0
      %664 = vmatprep.subr.mxu0 0.0
      %665 = vmatpush1.msra.mxu0 0.0
      %666 = vmatprep.subr.mxu0 0.0
      %667 = vmatpush1.msra.mxu0 0.0
      %668 = vmatprep.subr.mxu0 0.0
      %669 = vmatpush1.msra.mxu0 0.0
      %670 = vmatprep.subr.mxu0 0.0
      %671 = vmatpush1.msra.mxu0 0.0
      %672 = vmatprep.subr.mxu0 0.0
      %673 = vmatpush1.msra.mxu0 0.0
      %674 = vmatprep.subr.mxu0 0.0
      %675 = vmatpush1.msra.mxu0 0.0
      %676 = vmatprep.subr.mxu0 0.0
      %677 = vmatpush1.msra.mxu0 0.0
      %678 = vmatprep.subr.mxu0 0.0
      %679 = vmatpush1.msra.mxu0 0.0
      %680 = vmatprep.subr.mxu0 0.0
      %681 = vmatpush1.msra.mxu0 0.0
      %682 = vmatprep.subr.mxu0 0.0
      %683 = vmatpush1.msra.mxu0 0.0
      %684 = vmatprep.subr.mxu0 0.0
      %685 = vmatpush1.msra.mxu0 0.0
      %686 = vmatprep.subr.mxu0 0.0
      %687 = vmatpush1.msra.mxu0 0.0
      %688 = vmatprep.subr.mxu0 0.0
      %689 = vmatpush1.msra.mxu0 0.0
      %690 = vmatprep.subr.mxu0 0.0
      %691 = vmatpush1.msra.mxu0 0.0
      %692 = vmatprep.subr.mxu0 0.0
      %693 = vmatpush1.msra.mxu0 0.0
      %694 = vmatprep.subr.mxu0 0.0
      %695 = vmatpush1.msra.mxu0 0.0
      %696 = vmatprep.subr.mxu0 0.0
      %697 = vmatpush1.msra.mxu0 0.0
      %698 = vmatprep.subr.mxu0 0.0
      %699 = vmatpush1.msra.mxu0 0.0
      %700 = vmatprep.subr.mxu0 0.0
      %701 = vmatpush1.msra.mxu0 0.0
      %702 = vmatprep.subr.mxu0 0.0
      %703 = vmatpush1.msra.mxu0 0.0
      %704 = vmatprep.subr.mxu0 0.0
      %705 = vmatpush1.msra.mxu0 0.0
      %706 = vmatprep.subr.mxu0 0.0
      %707 = vmatpush1.msra.mxu0 0.0
      %708 = vmatprep.subr.mxu0 0.0
      %709 = vmatpush1.msra.mxu0 0.0
      %710 = vmatprep.subr.mxu0 0.0
      %711 = vmatpush1.msra.mxu0 0.0
      %712 = vmatprep.mubr.f32.mxu0 0.0
      %713 = vmatmul.mubr.f32.gmra.mrb[0].mxu0 %v646
      %v714 = vpop.f32.mrb[0].mxu0
      %v715 = vadd.f32 0.0, %v714
      %v716 = vpop.f32.mrb[0].mxu0
      %717 = vdwg.mxu0
      %v719 = vsel %vm352, %v177, 0
      %721 = vmatprep.subr.mxu0 0.0
      %722 = vmatpush1.msra.mxu0 %v228
      %723 = vmatprep.subr.mxu0 0.0
      %724 = vmatpush1.msra.mxu0 %v229
      %725 = vmatprep.subr.mxu0 0.0
      %726 = vmatpush1.msra.mxu0 %v230
      %727 = vmatprep.subr.mxu0 0.0
      %728 = vmatpush1.msra.mxu0 %v231
      %729 = vmatprep.subr.mxu0 0.0
      %730 = vmatpush1.msra.mxu0 0.0
      %731 = vmatprep.subr.mxu0 0.0
      %732 = vmatpush1.msra.mxu0 0.0
      %733 = vmatprep.subr.mxu0 0.0
      %734 = vmatpush1.msra.mxu0 0.0
      %735 = vmatprep.subr.mxu0 0.0
      %736 = vmatpush1.msra.mxu0 0.0
      %737 = vmatprep.subr.mxu0 0.0
      %738 = vmatpush1.msra.mxu0 0.0
      %739 = vmatprep.subr.mxu0 0.0
      %740 = vmatpush1.msra.mxu0 0.0
      %741 = vmatprep.subr.mxu0 0.0
      %742 = vmatpush1.msra.mxu0 0.0
      %743 = vmatprep.subr.mxu0 0.0
      %744 = vmatpush1.msra.mxu0 0.0
      %745 = vmatprep.subr.mxu0 0.0
      %746 = vmatpush1.msra.mxu0 0.0
      %747 = vmatprep.subr.mxu0 0.0
      %748 = vmatpush1.msra.mxu0 0.0
      %749 = vmatprep.subr.mxu0 0.0
      %750 = vmatpush1.msra.mxu0 0.0
      %751 = vmatprep.subr.mxu0 0.0
      %752 = vmatpush1.msra.mxu0 0.0
      %753 = vmatprep.subr.mxu0 0.0
      %754 = vmatpush1.msra.mxu0 0.0
      %755 = vmatprep.subr.mxu0 0.0
      %756 = vmatpush1.msra.mxu0 0.0
      %757 = vmatprep.subr.mxu0 0.0
      %758 = vmatpush1.msra.mxu0 0.0
      %759 = vmatprep.subr.mxu0 0.0
      %760 = vmatpush1.msra.mxu0 0.0
      %761 = vmatprep.subr.mxu0 0.0
      %762 = vmatpush1.msra.mxu0 0.0
      %763 = vmatprep.subr.mxu0 0.0
      %764 = vmatpush1.msra.mxu0 0.0
      %765 = vmatprep.subr.mxu0 0.0
      %766 = vmatpush1.msra.mxu0 0.0
      %767 = vmatprep.subr.mxu0 0.0
      %768 = vmatpush1.msra.mxu0 0.0
      %769 = vmatprep.subr.mxu0 0.0
      %770 = vmatpush1.msra.mxu0 0.0
      %771 = vmatprep.subr.mxu0 0.0
      %772 = vmatpush1.msra.mxu0 0.0
      %773 = vmatprep.subr.mxu0 0.0
      %774 = vmatpush1.msra.mxu0 0.0
      %775 = vmatprep.subr.mxu0 0.0
      %776 = vmatpush1.msra.mxu0 0.0
      %777 = vmatprep.subr.mxu0 0.0
      %778 = vmatpush1.msra.mxu0 0.0
      %779 = vmatprep.subr.mxu0 0.0
      %780 = vmatpush1.msra.mxu0 0.0
      %781 = vmatprep.subr.mxu0 0.0
      %782 = vmatpush1.msra.mxu0 0.0
      %783 = vmatprep.subr.mxu0 0.0
      %784 = vmatpush1.msra.mxu0 0.0
      %785 = vmatprep.mubr.f32.mxu0 0.0
      %786 = vmatmul.mubr.f32.gmra.mrb[0].mxu0 %v719
      %v787 = vpop.f32.mrb[0].mxu0
      %v788 = vadd.f32 0.0, %v787
      %v789 = vpop.f32.mrb[0].mxu0
      %790 = vdwg.mxu0
      %v792 = vsel %vm352, %v178, 0
      %794 = vmatprep.subr.mxu0 0.0
      %795 = vmatpush1.msra.mxu0 %v232
      %796 = vmatprep.subr.mxu0 0.0
      %797 = vmatpush1.msra.mxu0 %v233
      %798 = vmatprep.subr.mxu0 0.0
      %799 = vmatpush1.msra.mxu0 %v234
      %800 = vmatprep.subr.mxu0 0.0
      %801 = vmatpush1.msra.mxu0 %v235
      %802 = vmatprep.subr.mxu0 0.0
      %803 = vmatpush1.msra.mxu0 0.0
      %804 = vmatprep.subr.mxu0 0.0
      %805 = vmatpush1.msra.mxu0 0.0
      %806 = vmatprep.subr.mxu0 0.0
      %807 = vmatpush1.msra.mxu0 0.0
      %808 = vmatprep.subr.mxu0 0.0
      %809 = vmatpush1.msra.mxu0 0.0
      %810 = vmatprep.subr.mxu0 0.0
      %811 = vmatpush1.msra.mxu0 0.0
      %812 = vmatprep.subr.mxu0 0.0
      %813 = vmatpush1.msra.mxu0 0.0
      %814 = vmatprep.subr.mxu0 0.0
      %815 = vmatpush1.msra.mxu0 0.0
      %816 = vmatprep.subr.mxu0 0.0
      %817 = vmatpush1.msra.mxu0 0.0
      %818 = vmatprep.subr.mxu0 0.0
      %819 = vmatpush1.msra.mxu0 0.0
      %820 = vmatprep.subr.mxu0 0.0
      %821 = vmatpush1.msra.mxu0 0.0
      %822 = vmatprep.subr.mxu0 0.0
      %823 = vmatpush1.msra.mxu0 0.0
      %824 = vmatprep.subr.mxu0 0.0
      %825 = vmatpush1.msra.mxu0 0.0
      %826 = vmatprep.subr.mxu0 0.0
      %827 = vmatpush1.msra.mxu0 0.0
      %828 = vmatprep.subr.mxu0 0.0
      %829 = vmatpush1.msra.mxu0 0.0
      %830 = vmatprep.subr.mxu0 0.0
      %831 = vmatpush1.msra.mxu0 0.0
      %832 = vmatprep.subr.mxu0 0.0
      %833 = vmatpush1.msra.mxu0 0.0
      %834 = vmatprep.subr.mxu0 0.0
      %835 = vmatpush1.msra.mxu0 0.0
      %836 = vmatprep.subr.mxu0 0.0
      %837 = vmatpush1.msra.mxu0 0.0
      %838 = vmatprep.subr.mxu0 0.0
      %839 = vmatpush1.msra.mxu0 0.0
      %840 = vmatprep.subr.mxu0 0.0
      %841 = vmatpush1.msra.mxu0 0.0
      %842 = vmatprep.subr.mxu0 0.0
      %843 = vmatpush1.msra.mxu0 0.0
      %844 = vmatprep.subr.mxu0 0.0
      %845 = vmatpush1.msra.mxu0 0.0
      %846 = vmatprep.subr.mxu0 0.0
      %847 = vmatpush1.msra.mxu0 0.0
      %848 = vmatprep.subr.mxu0 0.0
      %849 = vmatpush1.msra.mxu0 0.0
      %850 = vmatprep.subr.mxu0 0.0
      %851 = vmatpush1.msra.mxu0 0.0
      %852 = vmatprep.subr.mxu0 0.0
      %853 = vmatpush1.msra.mxu0 0.0
      %854 = vmatprep.subr.mxu0 0.0
      %855 = vmatpush1.msra.mxu0 0.0
      %856 = vmatprep.subr.mxu0 0.0
      %857 = vmatpush1.msra.mxu0 0.0
      %858 = vmatprep.mubr.f32.mxu0 0.0
      %859 = vmatmul.mubr.f32.gmra.mrb[0].mxu0 %v792
      %v860 = vpop.f32.mrb[0].mxu0
      %v861 = vadd.f32 0.0, %v860
      %v862 = vpop.f32.mrb[0].mxu0
      %863 = vdwg.mxu0
      %v865 = vsel %vm352, %v179, 0
      %867 = vmatprep.subr.mxu0 0.0
      %868 = vmatpush1.msra.mxu0 %v236
      %869 = vmatprep.subr.mxu0 0.0
      %870 = vmatpush1.msra.mxu0 %v237
      %871 = vmatprep.subr.mxu0 0.0
      %872 = vmatpush1.msra.mxu0 %v238
      %873 = vmatprep.subr.mxu0 0.0
      %874 = vmatpush1.msra.mxu0 %v239
      %875 = vmatprep.subr.mxu0 0.0
      %876 = vmatpush1.msra.mxu0 0.0
      %877 = vmatprep.subr.mxu0 0.0
      %878 = vmatpush1.msra.mxu0 0.0
      %879 = vmatprep.subr.mxu0 0.0
      %880 = vmatpush1.msra.mxu0 0.0
      %881 = vmatprep.subr.mxu0 0.0
      %882 = vmatpush1.msra.mxu0 0.0
      %883 = vmatprep.subr.mxu0 0.0
      %884 = vmatpush1.msra.mxu0 0.0
      %885 = vmatprep.subr.mxu0 0.0
      %886 = vmatpush1.msra.mxu0 0.0
      %887 = vmatprep.subr.mxu0 0.0
      %888 = vmatpush1.msra.mxu0 0.0
      %889 = vmatprep.subr.mxu0 0.0
      %890 = vmatpush1.msra.mxu0 0.0
      %891 = vmatprep.subr.mxu0 0.0
      %892 = vmatpush1.msra.mxu0 0.0
      %893 = vmatprep.subr.mxu0 0.0
      %894 = vmatpush1.msra.mxu0 0.0
      %895 = vmatprep.subr.mxu0 0.0
      %896 = vmatpush1.msra.mxu0 0.0
      %897 = vmatprep.subr.mxu0 0.0
      %898 = vmatpush1.msra.mxu0 0.0
      %899 = vmatprep.subr.mxu0 0.0
      %900 = vmatpush1.msra.mxu0 0.0
      %901 = vmatprep.subr.mxu0 0.0
      %902 = vmatpush1.msra.mxu0 0.0
      %903 = vmatprep.subr.mxu0 0.0
      %904 = vmatpush1.msra.mxu0 0.0
      %905 = vmatprep.subr.mxu0 0.0
      %906 = vmatpush1.msra.mxu0 0.0
      %907 = vmatprep.subr.mxu0 0.0
      %908 = vmatpush1.msra.mxu0 0.0
      %909 = vmatprep.subr.mxu0 0.0
      %910 = vmatpush1.msra.mxu0 0.0
      %911 = vmatprep.subr.mxu0 0.0
      %912 = vmatpush1.msra.mxu0 0.0
      %913 = vmatprep.subr.mxu0 0.0
      %914 = vmatpush1.msra.mxu0 0.0
      %915 = vmatprep.subr.mxu0 0.0
      %916 = vmatpush1.msra.mxu0 0.0
      %917 = vmatprep.subr.mxu0 0.0
      %918 = vmatpush1.msra.mxu0 0.0
      %919 = vmatprep.subr.mxu0 0.0
      %920 = vmatpush1.msra.mxu0 0.0
      %921 = vmatprep.subr.mxu0 0.0
      %922 = vmatpush1.msra.mxu0 0.0
      %923 = vmatprep.subr.mxu0 0.0
      %924 = vmatpush1.msra.mxu0 0.0
      %925 = vmatprep.subr.mxu0 0.0
      %926 = vmatpush1.msra.mxu0 0.0
      %927 = vmatprep.subr.mxu0 0.0
      %928 = vmatpush1.msra.mxu0 0.0
      %929 = vmatprep.subr.mxu0 0.0
      %930 = vmatpush1.msra.mxu0 0.0
      %931 = vmatprep.mubr.f32.mxu0 0.0
      %932 = vmatmul.mubr.f32.gmra.mrb[0].mxu0 %v865
      %v933 = vpop.f32.mrb[0].mxu0
      %v934 = vadd.f32 0.0, %v933
      %v935 = vpop.f32.mrb[0].mxu0
      %936 = vdwg.mxu0
      %v938 = vsel %vm352, %v180, 0
      %940 = vmatprep.subr.mxu0 0.0
      %941 = vmatpush1.msra.mxu0 %v240
      %942 = vmatprep.subr.mxu0 0.0
      %943 = vmatpush1.msra.mxu0 %v241
      %944 = vmatprep.subr.mxu0 0.0
      %945 = vmatpush1.msra.mxu0 %v242
      %946 = vmatprep.subr.mxu0 0.0
      %947 = vmatpush1.msra.mxu0 %v243
      %948 = vmatprep.subr.mxu0 0.0
      %949 = vmatpush1.msra.mxu0 0.0
      %950 = vmatprep.subr.mxu0 0.0
      %951 = vmatpush1.msra.mxu0 0.0
      %952 = vmatprep.subr.mxu0 0.0
      %953 = vmatpush1.msra.mxu0 0.0
      %954 = vmatprep.subr.mxu0 0.0
      %955 = vmatpush1.msra.mxu0 0.0
      %956 = vmatprep.subr.mxu0 0.0
      %957 = vmatpush1.msra.mxu0 0.0
      %958 = vmatprep.subr.mxu0 0.0
      %959 = vmatpush1.msra.mxu0 0.0
      %960 = vmatprep.subr.mxu0 0.0
      %961 = vmatpush1.msra.mxu0 0.0
      %962 = vmatprep.subr.mxu0 0.0
      %963 = vmatpush1.msra.mxu0 0.0
      %964 = vmatprep.subr.mxu0 0.0
      %965 = vmatpush1.msra.mxu0 0.0
      %966 = vmatprep.subr.mxu0 0.0
      %967 = vmatpush1.msra.mxu0 0.0
      %968 = vmatprep.subr.mxu0 0.0
      %969 = vmatpush1.msra.mxu0 0.0
      %970 = vmatprep.subr.mxu0 0.0
      %971 = vmatpush1.msra.mxu0 0.0
      %972 = vmatprep.subr.mxu0 0.0
      %973 = vmatpush1.msra.mxu0 0.0
      %974 = vmatprep.subr.mxu0 0.0
      %975 = vmatpush1.msra.mxu0 0.0
      %976 = vmatprep.subr.mxu0 0.0
      %977 = vmatpush1.msra.mxu0 0.0
      %978 = vmatprep.subr.mxu0 0.0
      %979 = vmatpush1.msra.mxu0 0.0
      %980 = vmatprep.subr.mxu0 0.0
      %981 = vmatpush1.msra.mxu0 0.0
      %982 = vmatprep.subr.mxu0 0.0
      %983 = vmatpush1.msra.mxu0 0.0
      %984 = vmatprep.subr.mxu0 0.0
      %985 = vmatpush1.msra.mxu0 0.0
      %986 = vmatprep.subr.mxu0 0.0
      %987 = vmatpush1.msra.mxu0 0.0
      %988 = vmatprep.subr.mxu0 0.0
      %989 = vmatpush1.msra.mxu0 0.0
      %990 = vmatprep.subr.mxu0 0.0
      %991 = vmatpush1.msra.mxu0 0.0
      %992 = vmatprep.subr.mxu0 0.0
      %993 = vmatpush1.msra.mxu0 0.0
      %994 = vmatprep.subr.mxu0 0.0
      %995 = vmatpush1.msra.mxu0 0.0
      %996 = vmatprep.subr.mxu0 0.0
      %997 = vmatpush1.msra.mxu0 0.0
      %998 = vmatprep.subr.mxu0 0.0
      %999 = vmatpush1.msra.mxu0 0.0
      %1000 = vmatprep.subr.mxu0 0.0
      %1001 = vmatpush1.msra.mxu0 0.0
      %1002 = vmatprep.subr.mxu0 0.0
      %1003 = vmatpush1.msra.mxu0 0.0
      %1004 = vmatprep.mubr.f32.mxu0 0.0
      %1005 = vmatmul.mubr.f32.gmra.mrb[0].mxu0 %v938
      %v1006 = vpop.f32.mrb[0].mxu0
      %v1007 = vadd.f32 0.0, %v1006
      %v1008 = vpop.f32.mrb[0].mxu0
      %1009 = vdwg.mxu0
      %v1011 = vsel %vm352, %v181, 0
      %1013 = vmatprep.subr.mxu0 0.0
      %1014 = vmatpush1.msra.mxu0 %v244
      %1015 = vmatprep.subr.mxu0 0.0
      %1016 = vmatpush1.msra.mxu0 %v245
      %1017 = vmatprep.subr.mxu0 0.0
      %1018 = vmatpush1.msra.mxu0 %v246
      %1019 = vmatprep.subr.mxu0 0.0
      %1020 = vmatpush1.msra.mxu0 %v247
      %1021 = vmatprep.subr.mxu0 0.0
      %1022 = vmatpush1.msra.mxu0 0.0
      %1023 = vmatprep.subr.mxu0 0.0
      %1024 = vmatpush1.msra.mxu0 0.0
      %1025 = vmatprep.subr.mxu0 0.0
      %1026 = vmatpush1.msra.mxu0 0.0
      %1027 = vmatprep.subr.mxu0 0.0
      %1028 = vmatpush1.msra.mxu0 0.0
      %1029 = vmatprep.subr.mxu0 0.0
      %1030 = vmatpush1.msra.mxu0 0.0
      %1031 = vmatprep.subr.mxu0 0.0
      %1032 = vmatpush1.msra.mxu0 0.0
      %1033 = vmatprep.subr.mxu0 0.0
      %1034 = vmatpush1.msra.mxu0 0.0
      %1035 = vmatprep.subr.mxu0 0.0
      %1036 = vmatpush1.msra.mxu0 0.0
      %1037 = vmatprep.subr.mxu0 0.0
      %1038 = vmatpush1.msra.mxu0 0.0
      %1039 = vmatprep.subr.mxu0 0.0
      %1040 = vmatpush1.msra.mxu0 0.0
      %1041 = vmatprep.subr.mxu0 0.0
      %1042 = vmatpush1.msra.mxu0 0.0
      %1043 = vmatprep.subr.mxu0 0.0
      %1044 = vmatpush1.msra.mxu0 0.0
      %1045 = vmatprep.subr.mxu0 0.0
      %1046 = vmatpush1.msra.mxu0 0.0
      %1047 = vmatprep.subr.mxu0 0.0
      %1048 = vmatpush1.msra.mxu0 0.0
      %1049 = vmatprep.subr.mxu0 0.0
      %1050 = vmatpush1.msra.mxu0 0.0
      %1051 = vmatprep.subr.mxu0 0.0
      %1052 = vmatpush1.msra.mxu0 0.0
      %1053 = vmatprep.subr.mxu0 0.0
      %1054 = vmatpush1.msra.mxu0 0.0
      %1055 = vmatprep.subr.mxu0 0.0
      %1056 = vmatpush1.msra.mxu0 0.0
      %1057 = vmatprep.subr.mxu0 0.0
      %1058 = vmatpush1.msra.mxu0 0.0
      %1059 = vmatprep.subr.mxu0 0.0
      %1060 = vmatpush1.msra.mxu0 0.0
      %1061 = vmatprep.subr.mxu0 0.0
      %1062 = vmatpush1.msra.mxu0 0.0
      %1063 = vmatprep.subr.mxu0 0.0
      %1064 = vmatpush1.msra.mxu0 0.0
      %1065 = vmatprep.subr.mxu0 0.0
      %1066 = vmatpush1.msra.mxu0 0.0
      %1067 = vmatprep.subr.mxu0 0.0
      %1068 = vmatpush1.msra.mxu0 0.0
      %1069 = vmatprep.subr.mxu0 0.0
      %1070 = vmatpush1.msra.mxu0 0.0
      %1071 = vmatprep.subr.mxu0 0.0
      %1072 = vmatpush1.msra.mxu0 0.0
      %1073 = vmatprep.subr.mxu0 0.0
      %1074 = vmatpush1.msra.mxu0 0.0
      %1075 = vmatprep.subr.mxu0 0.0
      %1076 = vmatpush1.msra.mxu0 0.0
      %1077 = vmatprep.mubr.f32.mxu0 0.0
      %1078 = vmatmul.mubr.f32.gmra.mrb[0].mxu0 %v1011
      %v1079 = vpop.f32.mrb[0].mxu0
      %v1080 = vadd.f32 0.0, %v1079
      %v1081 = vpop.f32.mrb[0].mxu0
      %1082 = vdwg.mxu0
      %v1084 = vsel %vm352, %v182, 0
      %1086 = vmatprep.subr.mxu0 0.0
      %1087 = vmatpush1.msra.mxu0 %v248
      %1088 = vmatprep.subr.mxu0 0.0
      %1089 = vmatpush1.msra.mxu0 %v249
      %1090 = vmatprep.subr.mxu0 0.0
      %1091 = vmatpush1.msra.mxu0 %v250
      %1092 = vmatprep.subr.mxu0 0.0
      %1093 = vmatpush1.msra.mxu0 %v251
      %1094 = vmatprep.subr.mxu0 0.0
      %1095 = vmatpush1.msra.mxu0 0.0
      %1096 = vmatprep.subr.mxu0 0.0
      %1097 = vmatpush1.msra.mxu0 0.0
      %1098 = vmatprep.subr.mxu0 0.0
      %1099 = vmatpush1.msra.mxu0 0.0
      %1100 = vmatprep.subr.mxu0 0.0
      %1101 = vmatpush1.msra.mxu0 0.0
      %1102 = vmatprep.subr.mxu0 0.0
      %1103 = vmatpush1.msra.mxu0 0.0
      %1104 = vmatprep.subr.mxu0 0.0
      %1105 = vmatpush1.msra.mxu0 0.0
      %1106 = vmatprep.subr.mxu0 0.0
      %1107 = vmatpush1.msra.mxu0 0.0
      %1108 = vmatprep.subr.mxu0 0.0
      %1109 = vmatpush1.msra.mxu0 0.0
      %1110 = vmatprep.subr.mxu0 0.0
      %1111 = vmatpush1.msra.mxu0 0.0
      %1112 = vmatprep.subr.mxu0 0.0
      %1113 = vmatpush1.msra.mxu0 0.0
      %1114 = vmatprep.subr.mxu0 0.0
      %1115 = vmatpush1.msra.mxu0 0.0
      %1116 = vmatprep.subr.mxu0 0.0
      %1117 = vmatpush1.msra.mxu0 0.0
      %1118 = vmatprep.subr.mxu0 0.0
      %1119 = vmatpush1.msra.mxu0 0.0
      %1120 = vmatprep.subr.mxu0 0.0
      %1121 = vmatpush1.msra.mxu0 0.0
      %1122 = vmatprep.subr.mxu0 0.0
      %1123 = vmatpush1.msra.mxu0 0.0
      %1124 = vmatprep.subr.mxu0 0.0
      %1125 = vmatpush1.msra.mxu0 0.0
      %1126 = vmatprep.subr.mxu0 0.0
      %1127 = vmatpush1.msra.mxu0 0.0
      %1128 = vmatprep.subr.mxu0 0.0
      %1129 = vmatpush1.msra.mxu0 0.0
      %1130 = vmatprep.subr.mxu0 0.0
      %1131 = vmatpush1.msra.mxu0 0.0
      %1132 = vmatprep.subr.mxu0 0.0
      %1133 = vmatpush1.msra.mxu0 0.0
      %1134 = vmatprep.subr.mxu0 0.0
      %1135 = vmatpush1.msra.mxu0 0.0
      %1136 = vmatprep.subr.mxu0 0.0
      %1137 = vmatpush1.msra.mxu0 0.0
      %1138 = vmatprep.subr.mxu0 0.0
      %1139 = vmatpush1.msra.mxu0 0.0
      %1140 = vmatprep.subr.mxu0 0.0
      %1141 = vmatpush1.msra.mxu0 0.0
      %1142 = vmatprep.subr.mxu0 0.0
      %1143 = vmatpush1.msra.mxu0 0.0
      %1144 = vmatprep.subr.mxu0 0.0
      %1145 = vmatpush1.msra.mxu0 0.0
      %1146 = vmatprep.subr.mxu0 0.0
      %1147 = vmatpush1.msra.mxu0 0.0
      %1148 = vmatprep.subr.mxu0 0.0
      %1149 = vmatpush1.msra.mxu0 0.0
      %1150 = vmatprep.mubr.f32.mxu0 0.0
      %1151 = vmatmul.mubr.f32.gmra.mrb[0].mxu0 %v1084
      %v1152 = vpop.f32.mrb[0].mxu0
      %v1153 = vadd.f32 0.0, %v1152
      %v1154 = vpop.f32.mrb[0].mxu0
      %1155 = vdwg.mxu0
      %v1157 = vsel %vm352, %v183, 0
      %1159 = vmatprep.subr.mxu0 0.0
      %1160 = vmatpush1.msra.mxu0 %v252
      %1161 = vmatprep.subr.mxu0 0.0
      %1162 = vmatpush1.msra.mxu0 %v253
      %1163 = vmatprep.subr.mxu0 0.0
      %1164 = vmatpush1.msra.mxu0 %v254
      %1165 = vmatprep.subr.mxu0 0.0
      %1166 = vmatpush1.msra.mxu0 %v255
      %1167 = vmatprep.subr.mxu0 0.0
      %1168 = vmatpush1.msra.mxu0 0.0
      %1169 = vmatprep.subr.mxu0 0.0
      %1170 = vmatpush1.msra.mxu0 0.0
      %1171 = vmatprep.subr.mxu0 0.0
      %1172 = vmatpush1.msra.mxu0 0.0
      %1173 = vmatprep.subr.mxu0 0.0
      %1174 = vmatpush1.msra.mxu0 0.0
      %1175 = vmatprep.subr.mxu0 0.0
      %1176 = vmatpush1.msra.mxu0 0.0
      %1177 = vmatprep.subr.mxu0 0.0
      %1178 = vmatpush1.msra.mxu0 0.0
      %1179 = vmatprep.subr.mxu0 0.0
      %1180 = vmatpush1.msra.mxu0 0.0
      %1181 = vmatprep.subr.mxu0 0.0
      %1182 = vmatpush1.msra.mxu0 0.0
      %1183 = vmatprep.subr.mxu0 0.0
      %1184 = vmatpush1.msra.mxu0 0.0
      %1185 = vmatprep.subr.mxu0 0.0
      %1186 = vmatpush1.msra.mxu0 0.0
      %1187 = vmatprep.subr.mxu0 0.0
      %1188 = vmatpush1.msra.mxu0 0.0
      %1189 = vmatprep.subr.mxu0 0.0
      %1190 = vmatpush1.msra.mxu0 0.0
      %1191 = vmatprep.subr.mxu0 0.0
      %1192 = vmatpush1.msra.mxu0 0.0
      %1193 = vmatprep.subr.mxu0 0.0
      %1194 = vmatpush1.msra.mxu0 0.0
      %1195 = vmatprep.subr.mxu0 0.0
      %1196 = vmatpush1.msra.mxu0 0.0
      %1197 = vmatprep.subr.mxu0 0.0
      %1198 = vmatpush1.msra.mxu0 0.0
      %1199 = vmatprep.subr.mxu0 0.0
      %1200 = vmatpush1.msra.mxu0 0.0
      %1201 = vmatprep.subr.mxu0 0.0
      %1202 = vmatpush1.msra.mxu0 0.0
      %1203 = vmatprep.subr.mxu0 0.0
      %1204 = vmatpush1.msra.mxu0 0.0
      %1205 = vmatprep.subr.mxu0 0.0
      %1206 = vmatpush1.msra.mxu0 0.0
      %1207 = vmatprep.subr.mxu0 0.0
      %1208 = vmatpush1.msra.mxu0 0.0
      %1209 = vmatprep.subr.mxu0 0.0
      %1210 = vmatpush1.msra.mxu0 0.0
      %1211 = vmatprep.subr.mxu0 0.0
      %1212 = vmatpush1.msra.mxu0 0.0
      %1213 = vmatprep.subr.mxu0 0.0
      %1214 = vmatpush1.msra.mxu0 0.0
      %1215 = vmatprep.subr.mxu0 0.0
      %1216 = vmatpush1.msra.mxu0 0.0
      %1217 = vmatprep.subr.mxu0 0.0
      %1218 = vmatpush1.msra.mxu0 0.0
      %1219 = vmatprep.subr.mxu0 0.0
      %1220 = vmatpush1.msra.mxu0 0.0
      %1221 = vmatprep.subr.mxu0 0.0
      %1222 = vmatpush1.msra.mxu0 0.0
      %1223 = vmatprep.mubr.f32.mxu0 0.0
      %1224 = vmatmul.mubr.f32.gmra.mrb[0].mxu0 %v1157
      %v1225 = vpop.f32.mrb[0].mxu0
      %v1226 = vadd.f32 0.0, %v1225
      %v1227 = vpop.f32.mrb[0].mxu0
      %1228 = vdwg.mxu0
      %v1230 = vsel %vm352, %v184, 0
      %1232 = vmatprep.subr.mxu0 0.0
      %1233 = vmatpush1.msra.mxu0 %v256
      %1234 = vmatprep.subr.mxu0 0.0
      %1235 = vmatpush1.msra.mxu0 %v257
      %1236 = vmatprep.subr.mxu0 0.0
      %1237 = vmatpush1.msra.mxu0 %v258
      %1238 = vmatprep.subr.mxu0 0.0
      %1239 = vmatpush1.msra.mxu0 %v259
      %1240 = vmatprep.subr.mxu0 0.0
      %1241 = vmatpush1.msra.mxu0 0.0
      %1242 = vmatprep.subr.mxu0 0.0
      %1243 = vmatpush1.msra.mxu0 0.0
      %1244 = vmatprep.subr.mxu0 0.0
      %1245 = vmatpush1.msra.mxu0 0.0
      %1246 = vmatprep.subr.mxu0 0.0
      %1247 = vmatpush1.msra.mxu0 0.0
      %1248 = vmatprep.subr.mxu0 0.0
      %1249 = vmatpush1.msra.mxu0 0.0
      %1250 = vmatprep.subr.mxu0 0.0
      %1251 = vmatpush1.msra.mxu0 0.0
      %1252 = vmatprep.subr.mxu0 0.0
      %1253 = vmatpush1.msra.mxu0 0.0
      %1254 = vmatprep.subr.mxu0 0.0
      %1255 = vmatpush1.msra.mxu0 0.0
      %1256 = vmatprep.subr.mxu0 0.0
      %1257 = vmatpush1.msra.mxu0 0.0
      %1258 = vmatprep.subr.mxu0 0.0
      %1259 = vmatpush1.msra.mxu0 0.0
      %1260 = vmatprep.subr.mxu0 0.0
      %1261 = vmatpush1.msra.mxu0 0.0
      %1262 = vmatprep.subr.mxu0 0.0
      %1263 = vmatpush1.msra.mxu0 0.0
      %1264 = vmatprep.subr.mxu0 0.0
      %1265 = vmatpush1.msra.mxu0 0.0
      %1266 = vmatprep.subr.mxu0 0.0
      %1267 = vmatpush1.msra.mxu0 0.0
      %1268 = vmatprep.subr.mxu0 0.0
      %1269 = vmatpush1.msra.mxu0 0.0
      %1270 = vmatprep.subr.mxu0 0.0
      %1271 = vmatpush1.msra.mxu0 0.0
      %1272 = vmatprep.subr.mxu0 0.0
      %1273 = vmatpush1.msra.mxu0 0.0
      %1274 = vmatprep.subr.mxu0 0.0
      %1275 = vmatpush1.msra.mxu0 0.0
      %1276 = vmatprep.subr.mxu0 0.0
      %1277 = vmatpush1.msra.mxu0 0.0
      %1278 = vmatprep.subr.mxu0 0.0
      %1279 = vmatpush1.msra.mxu0 0.0
      %1280 = vmatprep.subr.mxu0 0.0
      %1281 = vmatpush1.msra.mxu0 0.0
      %1282 = vmatprep.subr.mxu0 0.0
      %1283 = vmatpush1.msra.mxu0 0.0
      %1284 = vmatprep.subr.mxu0 0.0
      %1285 = vmatpush1.msra.mxu0 0.0
      %1286 = vmatprep.subr.mxu0 0.0
      %1287 = vmatpush1.msra.mxu0 0.0
      %1288 = vmatprep.subr.mxu0 0.0
      %1289 = vmatpush1.msra.mxu0 0.0
      %1290 = vmatprep.subr.mxu0 0.0
      %1291 = vmatpush1.msra.mxu0 0.0
      %1292 = vmatprep.subr.mxu0 0.0
      %1293 = vmatpush1.msra.mxu0 0.0
      %1294 = vmatprep.subr.mxu0 0.0
      %1295 = vmatpush1.msra.mxu0 0.0
      %1296 = vmatprep.mubr.f32.mxu0 0.0
      %1297 = vmatmul.mubr.f32.gmra.mrb[0].mxu0 %v1230
      %v1298 = vpop.f32.mrb[0].mxu0
      %v1299 = vadd.f32 0.0, %v1298
      %v1300 = vpop.f32.mrb[0].mxu0
      %1301 = vdwg.mxu0
      %v1303 = vsel %vm352, %v185, 0
      %1305 = vmatprep.subr.mxu0 0.0
      %1306 = vmatpush1.msra.mxu0 %v260
      %1307 = vmatprep.subr.mxu0 0.0
      %1308 = vmatpush1.msra.mxu0 %v261
      %1309 = vmatprep.subr.mxu0 0.0
      %1310 = vmatpush1.msra.mxu0 %v262
      %1311 = vmatprep.subr.mxu0 0.0
      %1312 = vmatpush1.msra.mxu0 %v263
      %1313 = vmatprep.subr.mxu0 0.0
      %1314 = vmatpush1.msra.mxu0 0.0
      %1315 = vmatprep.subr.mxu0 0.0
      %1316 = vmatpush1.msra.mxu0 0.0
      %1317 = vmatprep.subr.mxu0 0.0
      %1318 = vmatpush1.msra.mxu0 0.0
      %1319 = vmatprep.subr.mxu0 0.0
      %1320 = vmatpush1.msra.mxu0 0.0
      %1321 = vmatprep.subr.mxu0 0.0
      %1322 = vmatpush1.msra.mxu0 0.0
      %1323 = vmatprep.subr.mxu0 0.0
      %1324 = vmatpush1.msra.mxu0 0.0
      %1325 = vmatprep.subr.mxu0 0.0
      %1326 = vmatpush1.msra.mxu0 0.0
      %1327 = vmatprep.subr.mxu0 0.0
      %1328 = vmatpush1.msra.mxu0 0.0
      %1329 = vmatprep.subr.mxu0 0.0
      %1330 = vmatpush1.msra.mxu0 0.0
      %1331 = vmatprep.subr.mxu0 0.0
      %1332 = vmatpush1.msra.mxu0 0.0
      %1333 = vmatprep.subr.mxu0 0.0
      %1334 = vmatpush1.msra.mxu0 0.0
      %1335 = vmatprep.subr.mxu0 0.0
      %1336 = vmatpush1.msra.mxu0 0.0
      %1337 = vmatprep.subr.mxu0 0.0
      %1338 = vmatpush1.msra.mxu0 0.0
      %1339 = vmatprep.subr.mxu0 0.0
      %1340 = vmatpush1.msra.mxu0 0.0
      %1341 = vmatprep.subr.mxu0 0.0
      %1342 = vmatpush1.msra.mxu0 0.0
      %1343 = vmatprep.subr.mxu0 0.0
      %1344 = vmatpush1.msra.mxu0 0.0
      %1345 = vmatprep.subr.mxu0 0.0
      %1346 = vmatpush1.msra.mxu0 0.0
      %1347 = vmatprep.subr.mxu0 0.0
      %1348 = vmatpush1.msra.mxu0 0.0
      %1349 = vmatprep.subr.mxu0 0.0
      %1350 = vmatpush1.msra.mxu0 0.0
      %1351 = vmatprep.subr.mxu0 0.0
      %1352 = vmatpush1.msra.mxu0 0.0
      %1353 = vmatprep.subr.mxu0 0.0
      %1354 = vmatpush1.msra.mxu0 0.0
      %1355 = vmatprep.subr.mxu0 0.0
      %1356 = vmatpush1.msra.mxu0 0.0
      %1357 = vmatprep.subr.mxu0 0.0
      %1358 = vmatpush1.msra.mxu0 0.0
      %1359 = vmatprep.subr.mxu0 0.0
      %1360 = vmatpush1.msra.mxu0 0.0
      %1361 = vmatprep.subr.mxu0 0.0
      %1362 = vmatpush1.msra.mxu0 0.0
      %1363 = vmatprep.subr.mxu0 0.0
      %1364 = vmatpush1.msra.mxu0 0.0
      %1365 = vmatprep.subr.mxu0 0.0
      %1366 = vmatpush1.msra.mxu0 0.0
      %1367 = vmatprep.subr.mxu0 0.0
      %1368 = vmatpush1.msra.mxu0 0.0
      %1369 = vmatprep.mubr.f32.mxu0 0.0
      %1370 = vmatmul.mubr.f32.gmra.mrb[0].mxu0 %v1303
      %v1371 = vpop.f32.mrb[0].mxu0
      %v1372 = vadd.f32 0.0, %v1371
      %v1373 = vpop.f32.mrb[0].mxu0
      %1374 = vdwg.mxu0
      %v1376 = vsel %vm352, %v186, 0
      %1378 = vmatprep.subr.mxu0 0.0
      %1379 = vmatpush1.msra.mxu0 %v264
      %1380 = vmatprep.subr.mxu0 0.0
      %1381 = vmatpush1.msra.mxu0 %v265
      %1382 = vmatprep.subr.mxu0 0.0
      %1383 = vmatpush1.msra.mxu0 %v266
      %1384 = vmatprep.subr.mxu0 0.0
      %1385 = vmatpush1.msra.mxu0 %v267
      %1386 = vmatprep.subr.mxu0 0.0
      %1387 = vmatpush1.msra.mxu0 0.0
      %1388 = vmatprep.subr.mxu0 0.0
      %1389 = vmatpush1.msra.mxu0 0.0
      %1390 = vmatprep.subr.mxu0 0.0
      %1391 = vmatpush1.msra.mxu0 0.0
      %1392 = vmatprep.subr.mxu0 0.0
      %1393 = vmatpush1.msra.mxu0 0.0
      %1394 = vmatprep.subr.mxu0 0.0
      %1395 = vmatpush1.msra.mxu0 0.0
      %1396 = vmatprep.subr.mxu0 0.0
      %1397 = vmatpush1.msra.mxu0 0.0
      %1398 = vmatprep.subr.mxu0 0.0
      %1399 = vmatpush1.msra.mxu0 0.0
      %1400 = vmatprep.subr.mxu0 0.0
      %1401 = vmatpush1.msra.mxu0 0.0
      %1402 = vmatprep.subr.mxu0 0.0
      %1403 = vmatpush1.msra.mxu0 0.0
      %1404 = vmatprep.subr.mxu0 0.0
      %1405 = vmatpush1.msra.mxu0 0.0
      %1406 = vmatprep.subr.mxu0 0.0
      %1407 = vmatpush1.msra.mxu0 0.0
      %1408 = vmatprep.subr.mxu0 0.0
      %1409 = vmatpush1.msra.mxu0 0.0
      %1410 = vmatprep.subr.mxu0 0.0
      %1411 = vmatpush1.msra.mxu0 0.0
      %1412 = vmatprep.subr.mxu0 0.0
      %1413 = vmatpush1.msra.mxu0 0.0
      %1414 = vmatprep.subr.mxu0 0.0
      %1415 = vmatpush1.msra.mxu0 0.0
      %1416 = vmatprep.subr.mxu0 0.0
      %1417 = vmatpush1.msra.mxu0 0.0
      %1418 = vmatprep.subr.mxu0 0.0
      %1419 = vmatpush1.msra.mxu0 0.0
      %1420 = vmatprep.subr.mxu0 0.0
      %1421 = vmatpush1.msra.mxu0 0.0
      %1422 = vmatprep.subr.mxu0 0.0
      %1423 = vmatpush1.msra.mxu0 0.0
      %1424 = vmatprep.subr.mxu0 0.0
      %1425 = vmatpush1.msra.mxu0 0.0
      %1426 = vmatprep.subr.mxu0 0.0
      %1427 = vmatpush1.msra.mxu0 0.0
      %1428 = vmatprep.subr.mxu0 0.0
      %1429 = vmatpush1.msra.mxu0 0.0
      %1430 = vmatprep.subr.mxu0 0.0
      %1431 = vmatpush1.msra.mxu0 0.0
      %1432 = vmatprep.subr.mxu0 0.0
      %1433 = vmatpush1.msra.mxu0 0.0
      %1434 = vmatprep.subr.mxu0 0.0
      %1435 = vmatpush1.msra.mxu0 0.0
      %1436 = vmatprep.subr.mxu0 0.0
      %1437 = vmatpush1.msra.mxu0 0.0
      %1438 = vmatprep.subr.mxu0 0.0
      %1439 = vmatpush1.msra.mxu0 0.0
      %1440 = vmatprep.subr.mxu0 0.0
      %1441 = vmatpush1.msra.mxu0 0.0
      %1442 = vmatprep.mubr.f32.mxu0 0.0
      %1443 = vmatmul.mubr.f32.gmra.mrb[0].mxu0 %v1376
      %v1444 = vpop.f32.mrb[0].mxu0
      %v1445 = vadd.f32 0.0, %v1444
      %v1446 = vpop.f32.mrb[0].mxu0
      %1447 = vdwg.mxu0
      %v1449 = vsel %vm352, %v187, 0
      %1451 = vmatprep.subr.mxu0 0.0
      %1452 = vmatpush1.msra.mxu0 %v268
      %1453 = vmatprep.subr.mxu0 0.0
      %1454 = vmatpush1.msra.mxu0 %v269
      %1455 = vmatprep.subr.mxu0 0.0
      %1456 = vmatpush1.msra.mxu0 %v270
      %1457 = vmatprep.subr.mxu0 0.0
      %1458 = vmatpush1.msra.mxu0 %v271
      %1459 = vmatprep.subr.mxu0 0.0
      %1460 = vmatpush1.msra.mxu0 0.0
      %1461 = vmatprep.subr.mxu0 0.0
      %1462 = vmatpush1.msra.mxu0 0.0
      %1463 = vmatprep.subr.mxu0 0.0
      %1464 = vmatpush1.msra.mxu0 0.0
      %1465 = vmatprep.subr.mxu0 0.0
      %1466 = vmatpush1.msra.mxu0 0.0
      %1467 = vmatprep.subr.mxu0 0.0
      %1468 = vmatpush1.msra.mxu0 0.0
      %1469 = vmatprep.subr.mxu0 0.0
      %1470 = vmatpush1.msra.mxu0 0.0
      %1471 = vmatprep.subr.mxu0 0.0
      %1472 = vmatpush1.msra.mxu0 0.0
      %1473 = vmatprep.subr.mxu0 0.0
      %1474 = vmatpush1.msra.mxu0 0.0
      %1475 = vmatprep.subr.mxu0 0.0
      %1476 = vmatpush1.msra.mxu0 0.0
      %1477 = vmatprep.subr.mxu0 0.0
      %1478 = vmatpush1.msra.mxu0 0.0
      %1479 = vmatprep.subr.mxu0 0.0
      %1480 = vmatpush1.msra.mxu0 0.0
      %1481 = vmatprep.subr.mxu0 0.0
      %1482 = vmatpush1.msra.mxu0 0.0
      %1483 = vmatprep.subr.mxu0 0.0
      %1484 = vmatpush1.msra.mxu0 0.0
      %1485 = vmatprep.subr.mxu0 0.0
      %1486 = vmatpush1.msra.mxu0 0.0
      %1487 = vmatprep.subr.mxu0 0.0
      %1488 = vmatpush1.msra.mxu0 0.0
      %1489 = vmatprep.subr.mxu0 0.0
      %1490 = vmatpush1.msra.mxu0 0.0
      %1491 = vmatprep.subr.mxu0 0.0
      %1492 = vmatpush1.msra.mxu0 0.0
      %1493 = vmatprep.subr.mxu0 0.0
      %1494 = vmatpush1.msra.mxu0 0.0
      %1495 = vmatprep.subr.mxu0 0.0
      %1496 = vmatpush1.msra.mxu0 0.0
      %1497 = vmatprep.subr.mxu0 0.0
      %1498 = vmatpush1.msra.mxu0 0.0
      %1499 = vmatprep.subr.mxu0 0.0
      %1500 = vmatpush1.msra.mxu0 0.0
      %1501 = vmatprep.subr.mxu0 0.0
      %1502 = vmatpush1.msra.mxu0 0.0
      %1503 = vmatprep.subr.mxu0 0.0
      %1504 = vmatpush1.msra.mxu0 0.0
      %1505 = vmatprep.subr.mxu0 0.0
      %1506 = vmatpush1.msra.mxu0 0.0
      %1507 = vmatprep.subr.mxu0 0.0
      %1508 = vmatpush1.msra.mxu0 0.0
      %1509 = vmatprep.subr.mxu0 0.0
      %1510 = vmatpush1.msra.mxu0 0.0
      %1511 = vmatprep.subr.mxu0 0.0
      %1512 = vmatpush1.msra.mxu0 0.0
      %1513 = vmatprep.subr.mxu0 0.0
      %1514 = vmatpush1.msra.mxu0 0.0
      %1515 = vmatprep.mubr.f32.mxu0 0.0
      %1516 = vmatmul.mubr.f32.gmra.mrb[0].mxu0 %v1449
      %v1517 = vpop.f32.mrb[0].mxu0
      %v1518 = vadd.f32 0.0, %v1517
      %v1519 = vpop.f32.mrb[0].mxu0
      %1520 = vdwg.mxu0
      %v1522 = vsel %vm352, %v188, 0
      %1524 = vmatprep.subr.mxu0 0.0
      %1525 = vmatpush1.msra.mxu0 %v272
      %1526 = vmatprep.subr.mxu0 0.0
      %1527 = vmatpush1.msra.mxu0 %v273
      %1528 = vmatprep.subr.mxu0 0.0
      %1529 = vmatpush1.msra.mxu0 %v274
      %1530 = vmatprep.subr.mxu0 0.0
      %1531 = vmatpush1.msra.mxu0 %v275
      %1532 = vmatprep.subr.mxu0 0.0
      %1533 = vmatpush1.msra.mxu0 0.0
      %1534 = vmatprep.subr.mxu0 0.0
      %1535 = vmatpush1.msra.mxu0 0.0
      %1536 = vmatprep.subr.mxu0 0.0
      %1537 = vmatpush1.msra.mxu0 0.0
      %1538 = vmatprep.subr.mxu0 0.0
      %1539 = vmatpush1.msra.mxu0 0.0
      %1540 = vmatprep.subr.mxu0 0.0
      %1541 = vmatpush1.msra.mxu0 0.0
      %1542 = vmatprep.subr.mxu0 0.0
      %1543 = vmatpush1.msra.mxu0 0.0
      %1544 = vmatprep.subr.mxu0 0.0
      %1545 = vmatpush1.msra.mxu0 0.0
      %1546 = vmatprep.subr.mxu0 0.0
      %1547 = vmatpush1.msra.mxu0 0.0
      %1548 = vmatprep.subr.mxu0 0.0
      %1549 = vmatpush1.msra.mxu0 0.0
      %1550 = vmatprep.subr.mxu0 0.0
      %1551 = vmatpush1.msra.mxu0 0.0
      %1552 = vmatprep.subr.mxu0 0.0
      %1553 = vmatpush1.msra.mxu0 0.0
      %1554 = vmatprep.subr.mxu0 0.0
      %1555 = vmatpush1.msra.mxu0 0.0
      %1556 = vmatprep.subr.mxu0 0.0
      %1557 = vmatpush1.msra.mxu0 0.0
      %1558 = vmatprep.subr.mxu0 0.0
      %1559 = vmatpush1.msra.mxu0 0.0
      %1560 = vmatprep.subr.mxu0 0.0
      %1561 = vmatpush1.msra.mxu0 0.0
      %1562 = vmatprep.subr.mxu0 0.0
      %1563 = vmatpush1.msra.mxu0 0.0
      %1564 = vmatprep.subr.mxu0 0.0
      %1565 = vmatpush1.msra.mxu0 0.0
      %1566 = vmatprep.subr.mxu0 0.0
      %1567 = vmatpush1.msra.mxu0 0.0
      %1568 = vmatprep.subr.mxu0 0.0
      %1569 = vmatpush1.msra.mxu0 0.0
      %1570 = vmatprep.subr.mxu0 0.0
      %1571 = vmatpush1.msra.mxu0 0.0
      %1572 = vmatprep.subr.mxu0 0.0
      %1573 = vmatpush1.msra.mxu0 0.0
      %1574 = vmatprep.subr.mxu0 0.0
      %1575 = vmatpush1.msra.mxu0 0.0
      %1576 = vmatprep.subr.mxu0 0.0
      %1577 = vmatpush1.msra.mxu0 0.0
      %1578 = vmatprep.subr.mxu0 0.0
      %1579 = vmatpush1.msra.mxu0 0.0
      %1580 = vmatprep.subr.mxu0 0.0
      %1581 = vmatpush1.msra.mxu0 0.0
      %1582 = vmatprep.subr.mxu0 0.0
      %1583 = vmatpush1.msra.mxu0 0.0
      %1584 = vmatprep.subr.mxu0 0.0
      %1585 = vmatpush1.msra.mxu0 0.0
      %1586 = vmatprep.subr.mxu0 0.0
      %1587 = vmatpush1.msra.mxu0 0.0
      %1588 = vmatprep.mubr.f32.mxu0 0.0
      %1589 = vmatmul.mubr.f32.gmra.mrb[0].mxu0 %v1522
      %v1590 = vpop.f32.mrb[0].mxu0
      %v1591 = vadd.f32 0.0, %v1590
      %v1592 = vpop.f32.mrb[0].mxu0
      %1593 = vdwg.mxu0
      %v1595 = vsel %vm352, %v189, 0
      %1597 = vmatprep.subr.mxu0 0.0
      %1598 = vmatpush1.msra.mxu0 %v276
      %1599 = vmatprep.subr.mxu0 0.0
      %1600 = vmatpush1.msra.mxu0 %v277
      %1601 = vmatprep.subr.mxu0 0.0
      %1602 = vmatpush1.msra.mxu0 %v278
      %1603 = vmatprep.subr.mxu0 0.0
      %1604 = vmatpush1.msra.mxu0 %v279
      %1605 = vmatprep.subr.mxu0 0.0
      %1606 = vmatpush1.msra.mxu0 0.0
      %1607 = vmatprep.subr.mxu0 0.0
      %1608 = vmatpush1.msra.mxu0 0.0
      %1609 = vmatprep.subr.mxu0 0.0
      %1610 = vmatpush1.msra.mxu0 0.0
      %1611 = vmatprep.subr.mxu0 0.0
      %1612 = vmatpush1.msra.mxu0 0.0
      %1613 = vmatprep.subr.mxu0 0.0
      %1614 = vmatpush1.msra.mxu0 0.0
      %1615 = vmatprep.subr.mxu0 0.0
      %1616 = vmatpush1.msra.mxu0 0.0
      %1617 = vmatprep.subr.mxu0 0.0
      %1618 = vmatpush1.msra.mxu0 0.0
      %1619 = vmatprep.subr.mxu0 0.0
      %1620 = vmatpush1.msra.mxu0 0.0
      %1621 = vmatprep.subr.mxu0 0.0
      %1622 = vmatpush1.msra.mxu0 0.0
      %1623 = vmatprep.subr.mxu0 0.0
      %1624 = vmatpush1.msra.mxu0 0.0
      %1625 = vmatprep.subr.mxu0 0.0
      %1626 = vmatpush1.msra.mxu0 0.0
      %1627 = vmatprep.subr.mxu0 0.0
      %1628 = vmatpush1.msra.mxu0 0.0
      %1629 = vmatprep.subr.mxu0 0.0
      %1630 = vmatpush1.msra.mxu0 0.0
      %1631 = vmatprep.subr.mxu0 0.0
      %1632 = vmatpush1.msra.mxu0 0.0
      %1633 = vmatprep.subr.mxu0 0.0
      %1634 = vmatpush1.msra.mxu0 0.0
      %1635 = vmatprep.subr.mxu0 0.0
      %1636 = vmatpush1.msra.mxu0 0.0
      %1637 = vmatprep.subr.mxu0 0.0
      %1638 = vmatpush1.msra.mxu0 0.0
      %1639 = vmatprep.subr.mxu0 0.0
      %1640 = vmatpush1.msra.mxu0 0.0
      %1641 = vmatprep.subr.mxu0 0.0
      %1642 = vmatpush1.msra.mxu0 0.0
      %1643 = vmatprep.subr.mxu0 0.0
      %1644 = vmatpush1.msra.mxu0 0.0
      %1645 = vmatprep.subr.mxu0 0.0
      %1646 = vmatpush1.msra.mxu0 0.0
      %1647 = vmatprep.subr.mxu0 0.0
      %1648 = vmatpush1.msra.mxu0 0.0
      %1649 = vmatprep.subr.mxu0 0.0
      %1650 = vmatpush1.msra.mxu0 0.0
      %1651 = vmatprep.subr.mxu0 0.0
      %1652 = vmatpush1.msra.mxu0 0.0
      %1653 = vmatprep.subr.mxu0 0.0
      %1654 = vmatpush1.msra.mxu0 0.0
      %1655 = vmatprep.subr.mxu0 0.0
      %1656 = vmatpush1.msra.mxu0 0.0
      %1657 = vmatprep.subr.mxu0 0.0
      %1658 = vmatpush1.msra.mxu0 0.0
      %1659 = vmatprep.subr.mxu0 0.0
      %1660 = vmatpush1.msra.mxu0 0.0
      %1661 = vmatprep.mubr.f32.mxu0 0.0
      %1662 = vmatmul.mubr.f32.gmra.mrb[0].mxu0 %v1595
      %v1663 = vpop.f32.mrb[0].mxu0
      %v1664 = vadd.f32 0.0, %v1663
      %v1665 = vpop.f32.mrb[0].mxu0
      %1666 = vdwg.mxu0
      %v1668 = vsel %vm352, %v190, 0
      %1670 = vmatprep.subr.mxu0 0.0
      %1671 = vmatpush1.msra.mxu0 %v280
      %1672 = vmatprep.subr.mxu0 0.0
      %1673 = vmatpush1.msra.mxu0 %v281
      %1674 = vmatprep.subr.mxu0 0.0
      %1675 = vmatpush1.msra.mxu0 %v282
      %1676 = vmatprep.subr.mxu0 0.0
      %1677 = vmatpush1.msra.mxu0 %v283
      %1678 = vmatprep.subr.mxu0 0.0
      %1679 = vmatpush1.msra.mxu0 0.0
      %1680 = vmatprep.subr.mxu0 0.0
      %1681 = vmatpush1.msra.mxu0 0.0
      %1682 = vmatprep.subr.mxu0 0.0
      %1683 = vmatpush1.msra.mxu0 0.0
      %1684 = vmatprep.subr.mxu0 0.0
      %1685 = vmatpush1.msra.mxu0 0.0
      %1686 = vmatprep.subr.mxu0 0.0
      %1687 = vmatpush1.msra.mxu0 0.0
      %1688 = vmatprep.subr.mxu0 0.0
      %1689 = vmatpush1.msra.mxu0 0.0
      %1690 = vmatprep.subr.mxu0 0.0
      %1691 = vmatpush1.msra.mxu0 0.0
      %1692 = vmatprep.subr.mxu0 0.0
      %1693 = vmatpush1.msra.mxu0 0.0
      %1694 = vmatprep.subr.mxu0 0.0
      %1695 = vmatpush1.msra.mxu0 0.0
      %1696 = vmatprep.subr.mxu0 0.0
      %1697 = vmatpush1.msra.mxu0 0.0
      %1698 = vmatprep.subr.mxu0 0.0
      %1699 = vmatpush1.msra.mxu0 0.0
      %1700 = vmatprep.subr.mxu0 0.0
      %1701 = vmatpush1.msra.mxu0 0.0
      %1702 = vmatprep.subr.mxu0 0.0
      %1703 = vmatpush1.msra.mxu0 0.0
      %1704 = vmatprep.subr.mxu0 0.0
      %1705 = vmatpush1.msra.mxu0 0.0
      %1706 = vmatprep.subr.mxu0 0.0
      %1707 = vmatpush1.msra.mxu0 0.0
      %1708 = vmatprep.subr.mxu0 0.0
      %1709 = vmatpush1.msra.mxu0 0.0
      %1710 = vmatprep.subr.mxu0 0.0
      %1711 = vmatpush1.msra.mxu0 0.0
      %1712 = vmatprep.subr.mxu0 0.0
      %1713 = vmatpush1.msra.mxu0 0.0
      %1714 = vmatprep.subr.mxu0 0.0
      %1715 = vmatpush1.msra.mxu0 0.0
      %1716 = vmatprep.subr.mxu0 0.0
      %1717 = vmatpush1.msra.mxu0 0.0
      %1718 = vmatprep.subr.mxu0 0.0
      %1719 = vmatpush1.msra.mxu0 0.0
      %1720 = vmatprep.subr.mxu0 0.0
      %1721 = vmatpush1.msra.mxu0 0.0
      %1722 = vmatprep.subr.mxu0 0.0
      %1723 = vmatpush1.msra.mxu0 0.0
      %1724 = vmatprep.subr.mxu0 0.0
      %1725 = vmatpush1.msra.mxu0 0.0
      %1726 = vmatprep.subr.mxu0 0.0
      %1727 = vmatpush1.msra.mxu0 0.0
      %1728 = vmatprep.subr.mxu0 0.0
      %1729 = vmatpush1.msra.mxu0 0.0
      %1730 = vmatprep.subr.mxu0 0.0
      %1731 = vmatpush1.msra.mxu0 0.0
      %1732 = vmatprep.subr.mxu0 0.0
      %1733 = vmatpush1.msra.mxu0 0.0
      %1734 = vmatprep.mubr.f32.mxu0 0.0
      %1735 = vmatmul.mubr.f32.gmra.mrb[0].mxu0 %v1668
      %v1736 = vpop.f32.mrb[0].mxu0
      %v1737 = vadd.f32 0.0, %v1736
      %v1738 = vpop.f32.mrb[0].mxu0
      %1739 = vdwg.mxu0
      %v1741 = vsel %vm352, %v191, 0
      %1743 = vmatprep.subr.mxu0 0.0
      %1744 = vmatpush1.msra.mxu0 %v284
      %1745 = vmatprep.subr.mxu0 0.0
      %1746 = vmatpush1.msra.mxu0 %v285
      %1747 = vmatprep.subr.mxu0 0.0
      %1748 = vmatpush1.msra.mxu0 %v286
      %1749 = vmatprep.subr.mxu0 0.0
      %1750 = vmatpush1.msra.mxu0 %v287
      %1751 = vmatprep.subr.mxu0 0.0
      %1752 = vmatpush1.msra.mxu0 0.0
      %1753 = vmatprep.subr.mxu0 0.0
      %1754 = vmatpush1.msra.mxu0 0.0
      %1755 = vmatprep.subr.mxu0 0.0
      %1756 = vmatpush1.msra.mxu0 0.0
      %1757 = vmatprep.subr.mxu0 0.0
      %1758 = vmatpush1.msra.mxu0 0.0
      %1759 = vmatprep.subr.mxu0 0.0
      %1760 = vmatpush1.msra.mxu0 0.0
      %1761 = vmatprep.subr.mxu0 0.0
      %1762 = vmatpush1.msra.mxu0 0.0
      %1763 = vmatprep.subr.mxu0 0.0
      %1764 = vmatpush1.msra.mxu0 0.0
      %1765 = vmatprep.subr.mxu0 0.0
      %1766 = vmatpush1.msra.mxu0 0.0
      %1767 = vmatprep.subr.mxu0 0.0
      %1768 = vmatpush1.msra.mxu0 0.0
      %1769 = vmatprep.subr.mxu0 0.0
      %1770 = vmatpush1.msra.mxu0 0.0
      %1771 = vmatprep.subr.mxu0 0.0
      %1772 = vmatpush1.msra.mxu0 0.0
      %1773 = vmatprep.subr.mxu0 0.0
      %1774 = vmatpush1.msra.mxu0 0.0
      %1775 = vmatprep.subr.mxu0 0.0
      %1776 = vmatpush1.msra.mxu0 0.0
      %1777 = vmatprep.subr.mxu0 0.0
      %1778 = vmatpush1.msra.mxu0 0.0
      %1779 = vmatprep.subr.mxu0 0.0
      %1780 = vmatpush1.msra.mxu0 0.0
      %1781 = vmatprep.subr.mxu0 0.0
      %1782 = vmatpush1.msra.mxu0 0.0
      %1783 = vmatprep.subr.mxu0 0.0
      %1784 = vmatpush1.msra.mxu0 0.0
      %1785 = vmatprep.subr.mxu0 0.0
      %1786 = vmatpush1.msra.mxu0 0.0
      %1787 = vmatprep.subr.mxu0 0.0
      %1788 = vmatpush1.msra.mxu0 0.0
      %1789 = vmatprep.subr.mxu0 0.0
      %1790 = vmatpush1.msra.mxu0 0.0
      %1791 = vmatprep.subr.mxu0 0.0
      %1792 = vmatpush1.msra.mxu0 0.0
      %1793 = vmatprep.subr.mxu0 0.0
      %1794 = vmatpush1.msra.mxu0 0.0
      %1795 = vmatprep.subr.mxu0 0.0
      %1796 = vmatpush1.msra.mxu0 0.0
      %1797 = vmatprep.subr.mxu0 0.0
      %1798 = vmatpush1.msra.mxu0 0.0
      %1799 = vmatprep.subr.mxu0 0.0
      %1800 = vmatpush1.msra.mxu0 0.0
      %1801 = vmatprep.subr.mxu0 0.0
      %1802 = vmatpush1.msra.mxu0 0.0
      %1803 = vmatprep.subr.mxu0 0.0
      %1804 = vmatpush1.msra.mxu0 0.0
      %1805 = vmatprep.subr.mxu0 0.0
      %1806 = vmatpush1.msra.mxu0 0.0
      %1807 = vmatprep.mubr.f32.mxu0 0.0
      %1808 = vmatmul.mubr.f32.gmra.mrb[0].mxu0 %v1741
      %v1809 = vpop.f32.mrb[0].mxu0
      %v1810 = vadd.f32 0.0, %v1809
      %v1811 = vpop.f32.mrb[0].mxu0
      %1812 = vdwg.mxu0
      %v1814 = vsel %vm352, %v192, 0
      %1816 = vmatprep.subr.mxu0 0.0
      %1817 = vmatpush1.msra.mxu0 %v288
      %1818 = vmatprep.subr.mxu0 0.0
      %1819 = vmatpush1.msra.mxu0 %v289
      %1820 = vmatprep.subr.mxu0 0.0
      %1821 = vmatpush1.msra.mxu0 %v290
      %1822 = vmatprep.subr.mxu0 0.0
      %1823 = vmatpush1.msra.mxu0 %v291
      %1824 = vmatprep.subr.mxu0 0.0
      %1825 = vmatpush1.msra.mxu0 0.0
      %1826 = vmatprep.subr.mxu0 0.0
      %1827 = vmatpush1.msra.mxu0 0.0
      %1828 = vmatprep.subr.mxu0 0.0
      %1829 = vmatpush1.msra.mxu0 0.0
      %1830 = vmatprep.subr.mxu0 0.0
      %1831 = vmatpush1.msra.mxu0 0.0
      %1832 = vmatprep.subr.mxu0 0.0
      %1833 = vmatpush1.msra.mxu0 0.0
      %1834 = vmatprep.subr.mxu0 0.0
      %1835 = vmatpush1.msra.mxu0 0.0
      %1836 = vmatprep.subr.mxu0 0.0
      %1837 = vmatpush1.msra.mxu0 0.0
      %1838 = vmatprep.subr.mxu0 0.0
      %1839 = vmatpush1.msra.mxu0 0.0
      %1840 = vmatprep.subr.mxu0 0.0
      %1841 = vmatpush1.msra.mxu0 0.0
      %1842 = vmatprep.subr.mxu0 0.0
      %1843 = vmatpush1.msra.mxu0 0.0
      %1844 = vmatprep.subr.mxu0 0.0
      %1845 = vmatpush1.msra.mxu0 0.0
      %1846 = vmatprep.subr.mxu0 0.0
      %1847 = vmatpush1.msra.mxu0 0.0
      %1848 = vmatprep.subr.mxu0 0.0
      %1849 = vmatpush1.msra.mxu0 0.0
      %1850 = vmatprep.subr.mxu0 0.0
      %1851 = vmatpush1.msra.mxu0 0.0
      %1852 = vmatprep.subr.mxu0 0.0
      %1853 = vmatpush1.msra.mxu0 0.0
      %1854 = vmatprep.subr.mxu0 0.0
      %1855 = vmatpush1.msra.mxu0 0.0
      %1856 = vmatprep.subr.mxu0 0.0
      %1857 = vmatpush1.msra.mxu0 0.0
      %1858 = vmatprep.subr.mxu0 0.0
      %1859 = vmatpush1.msra.mxu0 0.0
      %1860 = vmatprep.subr.mxu0 0.0
      %1861 = vmatpush1.msra.mxu0 0.0
      %1862 = vmatprep.subr.mxu0 0.0
      %1863 = vmatpush1.msra.mxu0 0.0
      %1864 = vmatprep.subr.mxu0 0.0
      %1865 = vmatpush1.msra.mxu0 0.0
      %1866 = vmatprep.subr.mxu0 0.0
      %1867 = vmatpush1.msra.mxu0 0.0
      %1868 = vmatprep.subr.mxu0 0.0
      %1869 = vmatpush1.msra.mxu0 0.0
      %1870 = vmatprep.subr.mxu0 0.0
      %1871 = vmatpush1.msra.mxu0 0.0
      %1872 = vmatprep.subr.mxu0 0.0
      %1873 = vmatpush1.msra.mxu0 0.0
      %1874 = vmatprep.subr.mxu0 0.0
      %1875 = vmatpush1.msra.mxu0 0.0
      %1876 = vmatprep.subr.mxu0 0.0
      %1877 = vmatpush1.msra.mxu0 0.0
      %1878 = vmatprep.subr.mxu0 0.0
      %1879 = vmatpush1.msra.mxu0 0.0
      %1880 = vmatprep.mubr.f32.mxu0 0.0
      %1881 = vmatmul.mubr.f32.gmra.mrb[0].mxu0 %v1814
      %v1882 = vpop.f32.mrb[0].mxu0
      %v1883 = vadd.f32 0.0, %v1882
      %v1884 = vpop.f32.mrb[0].mxu0
      %1885 = vdwg.mxu0
      %v1887 = vsel %vm352, %v193, 0
      %1889 = vmatprep.subr.mxu0 0.0
      %1890 = vmatpush1.msra.mxu0 %v292
      %1891 = vmatprep.subr.mxu0 0.0
      %1892 = vmatpush1.msra.mxu0 %v293
      %1893 = vmatprep.subr.mxu0 0.0
      %1894 = vmatpush1.msra.mxu0 %v294
      %1895 = vmatprep.subr.mxu0 0.0
      %1896 = vmatpush1.msra.mxu0 %v295
      %1897 = vmatprep.subr.mxu0 0.0
      %1898 = vmatpush1.msra.mxu0 0.0
      %1899 = vmatprep.subr.mxu0 0.0
      %1900 = vmatpush1.msra.mxu0 0.0
      %1901 = vmatprep.subr.mxu0 0.0
      %1902 = vmatpush1.msra.mxu0 0.0
      %1903 = vmatprep.subr.mxu0 0.0
      %1904 = vmatpush1.msra.mxu0 0.0
      %1905 = vmatprep.subr.mxu0 0.0
      %1906 = vmatpush1.msra.mxu0 0.0
      %1907 = vmatprep.subr.mxu0 0.0
      %1908 = vmatpush1.msra.mxu0 0.0
      %1909 = vmatprep.subr.mxu0 0.0
      %1910 = vmatpush1.msra.mxu0 0.0
      %1911 = vmatprep.subr.mxu0 0.0
      %1912 = vmatpush1.msra.mxu0 0.0
      %1913 = vmatprep.subr.mxu0 0.0
      %1914 = vmatpush1.msra.mxu0 0.0
      %1915 = vmatprep.subr.mxu0 0.0
      %1916 = vmatpush1.msra.mxu0 0.0
      %1917 = vmatprep.subr.mxu0 0.0
      %1918 = vmatpush1.msra.mxu0 0.0
      %1919 = vmatprep.subr.mxu0 0.0
      %1920 = vmatpush1.msra.mxu0 0.0
      %1921 = vmatprep.subr.mxu0 0.0
      %1922 = vmatpush1.msra.mxu0 0.0
      %1923 = vmatprep.subr.mxu0 0.0
      %1924 = vmatpush1.msra.mxu0 0.0
      %1925 = vmatprep.subr.mxu0 0.0
      %1926 = vmatpush1.msra.mxu0 0.0
      %1927 = vmatprep.subr.mxu0 0.0
      %1928 = vmatpush1.msra.mxu0 0.0
      %1929 = vmatprep.subr.mxu0 0.0
      %1930 = vmatpush1.msra.mxu0 0.0
      %1931 = vmatprep.subr.mxu0 0.0
      %1932 = vmatpush1.msra.mxu0 0.0
      %1933 = vmatprep.subr.mxu0 0.0
      %1934 = vmatpush1.msra.mxu0 0.0
      %1935 = vmatprep.subr.mxu0 0.0
      %1936 = vmatpush1.msra.mxu0 0.0
      %1937 = vmatprep.subr.mxu0 0.0
      %1938 = vmatpush1.msra.mxu0 0.0
      %1939 = vmatprep.subr.mxu0 0.0
      %1940 = vmatpush1.msra.mxu0 0.0
      %1941 = vmatprep.subr.mxu0 0.0
      %1942 = vmatpush1.msra.mxu0 0.0
      %1943 = vmatprep.subr.mxu0 0.0
      %1944 = vmatpush1.msra.mxu0 0.0
      %1945 = vmatprep.subr.mxu0 0.0
      %1946 = vmatpush1.msra.mxu0 0.0
      %1947 = vmatprep.subr.mxu0 0.0
      %1948 = vmatpush1.msra.mxu0 0.0
      %1949 = vmatprep.subr.mxu0 0.0
      %1950 = vmatpush1.msra.mxu0 0.0
      %1951 = vmatprep.subr.mxu0 0.0
      %1952 = vmatpush1.msra.mxu0 0.0
      %1953 = vmatprep.mubr.f32.mxu0 0.0
      %1954 = vmatmul.mubr.f32.gmra.mrb[0].mxu0 %v1887
      %v1955 = vpop.f32.mrb[0].mxu0
      %v1956 = vadd.f32 0.0, %v1955
      %v1957 = vpop.f32.mrb[0].mxu0
      %1958 = vdwg.mxu0
      %v1960 = vsel %vm352, %v194, 0
      %1962 = vmatprep.subr.mxu0 0.0
      %1963 = vmatpush1.msra.mxu0 %v296
      %1964 = vmatprep.subr.mxu0 0.0
      %1965 = vmatpush1.msra.mxu0 %v297
      %1966 = vmatprep.subr.mxu0 0.0
      %1967 = vmatpush1.msra.mxu0 %v298
      %1968 = vmatprep.subr.mxu0 0.0
      %1969 = vmatpush1.msra.mxu0 %v299
      %1970 = vmatprep.subr.mxu0 0.0
      %1971 = vmatpush1.msra.mxu0 0.0
      %1972 = vmatprep.subr.mxu0 0.0
      %1973 = vmatpush1.msra.mxu0 0.0
      %1974 = vmatprep.subr.mxu0 0.0
      %1975 = vmatpush1.msra.mxu0 0.0
      %1976 = vmatprep.subr.mxu0 0.0
      %1977 = vmatpush1.msra.mxu0 0.0
      %1978 = vmatprep.subr.mxu0 0.0
      %1979 = vmatpush1.msra.mxu0 0.0
      %1980 = vmatprep.subr.mxu0 0.0
      %1981 = vmatpush1.msra.mxu0 0.0
      %1982 = vmatprep.subr.mxu0 0.0
      %1983 = vmatpush1.msra.mxu0 0.0
      %1984 = vmatprep.subr.mxu0 0.0
      %1985 = vmatpush1.msra.mxu0 0.0
      %1986 = vmatprep.subr.mxu0 0.0
      %1987 = vmatpush1.msra.mxu0 0.0
      %1988 = vmatprep.subr.mxu0 0.0
      %1989 = vmatpush1.msra.mxu0 0.0
      %1990 = vmatprep.subr.mxu0 0.0
      %1991 = vmatpush1.msra.mxu0 0.0
      %1992 = vmatprep.subr.mxu0 0.0
      %1993 = vmatpush1.msra.mxu0 0.0
      %1994 = vmatprep.subr.mxu0 0.0
      %1995 = vmatpush1.msra.mxu0 0.0
      %1996 = vmatprep.subr.mxu0 0.0
      %1997 = vmatpush1.msra.mxu0 0.0
      %1998 = vmatprep.subr.mxu0 0.0
      %1999 = vmatpush1.msra.mxu0 0.0
      %2000 = vmatprep.subr.mxu0 0.0
      %2001 = vmatpush1.msra.mxu0 0.0
      %2002 = vmatprep.subr.mxu0 0.0
      %2003 = vmatpush1.msra.mxu0 0.0
      %2004 = vmatprep.subr.mxu0 0.0
      %2005 = vmatpush1.msra.mxu0 0.0
      %2006 = vmatprep.subr.mxu0 0.0
      %2007 = vmatpush1.msra.mxu0 0.0
      %2008 = vmatprep.subr.mxu0 0.0
      %2009 = vmatpush1.msra.mxu0 0.0
      %2010 = vmatprep.subr.mxu0 0.0
      %2011 = vmatpush1.msra.mxu0 0.0
      %2012 = vmatprep.subr.mxu0 0.0
      %2013 = vmatpush1.msra.mxu0 0.0
      %2014 = vmatprep.subr.mxu0 0.0
      %2015 = vmatpush1.msra.mxu0 0.0
      %2016 = vmatprep.subr.mxu0 0.0
      %2017 = vmatpush1.msra.mxu0 0.0
      %2018 = vmatprep.subr.mxu0 0.0
      %2019 = vmatpush1.msra.mxu0 0.0
      %2020 = vmatprep.subr.mxu0 0.0
      %2021 = vmatpush1.msra.mxu0 0.0
      %2022 = vmatprep.subr.mxu0 0.0
      %2023 = vmatpush1.msra.mxu0 0.0
      %2024 = vmatprep.subr.mxu0 0.0
      %2025 = vmatpush1.msra.mxu0 0.0
      %2026 = vmatprep.mubr.f32.mxu0 0.0
      %2027 = vmatmul.mubr.f32.gmra.mrb[0].mxu0 %v1960
      %v2028 = vpop.f32.mrb[0].mxu0
      %v2029 = vadd.f32 0.0, %v2028
      %v2030 = vpop.f32.mrb[0].mxu0
      %2031 = vdwg.mxu0
      %v2033 = vsel %vm352, %v195, 0
      %2035 = vmatprep.subr.mxu0 0.0
      %2036 = vmatpush1.msra.mxu0 %v300
      %2037 = vmatprep.subr.mxu0 0.0
      %2038 = vmatpush1.msra.mxu0 %v301
      %2039 = vmatprep.subr.mxu0 0.0
      %2040 = vmatpush1.msra.mxu0 %v302
      %2041 = vmatprep.subr.mxu0 0.0
      %2042 = vmatpush1.msra.mxu0 %v303
      %2043 = vmatprep.subr.mxu0 0.0
      %2044 = vmatpush1.msra.mxu0 0.0
      %2045 = vmatprep.subr.mxu0 0.0
      %2046 = vmatpush1.msra.mxu0 0.0
      %2047 = vmatprep.subr.mxu0 0.0
      %2048 = vmatpush1.msra.mxu0 0.0
      %2049 = vmatprep.subr.mxu0 0.0
      %2050 = vmatpush1.msra.mxu0 0.0
      %2051 = vmatprep.subr.mxu0 0.0
      %2052 = vmatpush1.msra.mxu0 0.0
      %2053 = vmatprep.subr.mxu0 0.0
      %2054 = vmatpush1.msra.mxu0 0.0
      %2055 = vmatprep.subr.mxu0 0.0
      %2056 = vmatpush1.msra.mxu0 0.0
      %2057 = vmatprep.subr.mxu0 0.0
      %2058 = vmatpush1.msra.mxu0 0.0
      %2059 = vmatprep.subr.mxu0 0.0
      %2060 = vmatpush1.msra.mxu0 0.0
      %2061 = vmatprep.subr.mxu0 0.0
      %2062 = vmatpush1.msra.mxu0 0.0
      %2063 = vmatprep.subr.mxu0 0.0
      %2064 = vmatpush1.msra.mxu0 0.0
      %2065 = vmatprep.subr.mxu0 0.0
      %2066 = vmatpush1.msra.mxu0 0.0
      %2067 = vmatprep.subr.mxu0 0.0
      %2068 = vmatpush1.msra.mxu0 0.0
      %2069 = vmatprep.subr.mxu0 0.0
      %2070 = vmatpush1.msra.mxu0 0.0
      %2071 = vmatprep.subr.mxu0 0.0
      %2072 = vmatpush1.msra.mxu0 0.0
      %2073 = vmatprep.subr.mxu0 0.0
      %2074 = vmatpush1.msra.mxu0 0.0
      %2075 = vmatprep.subr.mxu0 0.0
      %2076 = vmatpush1.msra.mxu0 0.0
      %2077 = vmatprep.subr.mxu0 0.0
      %2078 = vmatpush1.msra.mxu0 0.0
      %2079 = vmatprep.subr.mxu0 0.0
      %2080 = vmatpush1.msra.mxu0 0.0
      %2081 = vmatprep.subr.mxu0 0.0
      %2082 = vmatpush1.msra.mxu0 0.0
      %2083 = vmatprep.subr.mxu0 0.0
      %2084 = vmatpush1.msra.mxu0 0.0
      %2085 = vmatprep.subr.mxu0 0.0
      %2086 = vmatpush1.msra.mxu0 0.0
      %2087 = vmatprep.subr.mxu0 0.0
      %2088 = vmatpush1.msra.mxu0 0.0
      %2089 = vmatprep.subr.mxu0 0.0
      %2090 = vmatpush1.msra.mxu0 0.0
      %2091 = vmatprep.subr.mxu0 0.0
      %2092 = vmatpush1.msra.mxu0 0.0
      %2093 = vmatprep.subr.mxu0 0.0
      %2094 = vmatpush1.msra.mxu0 0.0
      %2095 = vmatprep.subr.mxu0 0.0
      %2096 = vmatpush1.msra.mxu0 0.0
      %2097 = vmatprep.subr.mxu0 0.0
      %2098 = vmatpush1.msra.mxu0 0.0
      %2099 = vmatprep.mubr.f32.mxu0 0.0
      %2100 = vmatmul.mubr.f32.gmra.mrb[0].mxu0 %v2033
      %v2101 = vpop.f32.mrb[0].mxu0
      %v2102 = vadd.f32 0.0, %v2101
      %v2103 = vpop.f32.mrb[0].mxu0
      %2104 = vdwg.mxu0
      %v2106 = vsel %vm352, %v196, 0
      %2108 = vmatprep.subr.mxu0 0.0
      %2109 = vmatpush1.msra.mxu0 %v304
      %2110 = vmatprep.subr.mxu0 0.0
      %2111 = vmatpush1.msra.mxu0 %v305
      %2112 = vmatprep.subr.mxu0 0.0
      %2113 = vmatpush1.msra.mxu0 %v306
      %2114 = vmatprep.subr.mxu0 0.0
      %2115 = vmatpush1.msra.mxu0 %v307
      %2116 = vmatprep.subr.mxu0 0.0
      %2117 = vmatpush1.msra.mxu0 0.0
      %2118 = vmatprep.subr.mxu0 0.0
      %2119 = vmatpush1.msra.mxu0 0.0
      %2120 = vmatprep.subr.mxu0 0.0
      %2121 = vmatpush1.msra.mxu0 0.0
      %2122 = vmatprep.subr.mxu0 0.0
      %2123 = vmatpush1.msra.mxu0 0.0
      %2124 = vmatprep.subr.mxu0 0.0
      %2125 = vmatpush1.msra.mxu0 0.0
      %2126 = vmatprep.subr.mxu0 0.0
      %2127 = vmatpush1.msra.mxu0 0.0
      %2128 = vmatprep.subr.mxu0 0.0
      %2129 = vmatpush1.msra.mxu0 0.0
      %2130 = vmatprep.subr.mxu0 0.0
      %2131 = vmatpush1.msra.mxu0 0.0
      %2132 = vmatprep.subr.mxu0 0.0
      %2133 = vmatpush1.msra.mxu0 0.0
      %2134 = vmatprep.subr.mxu0 0.0
      %2135 = vmatpush1.msra.mxu0 0.0
      %2136 = vmatprep.subr.mxu0 0.0
      %2137 = vmatpush1.msra.mxu0 0.0
      %2138 = vmatprep.subr.mxu0 0.0
      %2139 = vmatpush1.msra.mxu0 0.0
      %2140 = vmatprep.subr.mxu0 0.0
      %2141 = vmatpush1.msra.mxu0 0.0
      %2142 = vmatprep.subr.mxu0 0.0
      %2143 = vmatpush1.msra.mxu0 0.0
      %2144 = vmatprep.subr.mxu0 0.0
      %2145 = vmatpush1.msra.mxu0 0.0
      %2146 = vmatprep.subr.mxu0 0.0
      %2147 = vmatpush1.msra.mxu0 0.0
      %2148 = vmatprep.subr.mxu0 0.0
      %2149 = vmatpush1.msra.mxu0 0.0
      %2150 = vmatprep.subr.mxu0 0.0
      %2151 = vmatpush1.msra.mxu0 0.0
      %2152 = vmatprep.subr.mxu0 0.0
      %2153 = vmatpush1.msra.mxu0 0.0
      %2154 = vmatprep.subr.mxu0 0.0
      %2155 = vmatpush1.msra.mxu0 0.0
      %2156 = vmatprep.subr.mxu0 0.0
      %2157 = vmatpush1.msra.mxu0 0.0
      %2158 = vmatprep.subr.mxu0 0.0
      %2159 = vmatpush1.msra.mxu0 0.0
      %2160 = vmatprep.subr.mxu0 0.0
      %2161 = vmatpush1.msra.mxu0 0.0
      %2162 = vmatprep.subr.mxu0 0.0
      %2163 = vmatpush1.msra.mxu0 0.0
      %2164 = vmatprep.subr.mxu0 0.0
      %2165 = vmatpush1.msra.mxu0 0.0
      %2166 = vmatprep.subr.mxu0 0.0
      %2167 = vmatpush1.msra.mxu0 0.0
      %2168 = vmatprep.subr.mxu0 0.0
      %2169 = vmatpush1.msra.mxu0 0.0
      %2170 = vmatprep.subr.mxu0 0.0
      %2171 = vmatpush1.msra.mxu0 0.0
      %2172 = vmatprep.mubr.f32.mxu0 0.0
      %2173 = vmatmul.mubr.f32.gmra.mrb[0].mxu0 %v2106
      %v2174 = vpop.f32.mrb[0].mxu0
      %v2175 = vadd.f32 0.0, %v2174
      %v2176 = vpop.f32.mrb[0].mxu0
      %2177 = vdwg.mxu0
      %v2179 = vsel %vm352, %v197, 0
      %2181 = vmatprep.subr.mxu0 0.0
      %2182 = vmatpush1.msra.mxu0 %v308
      %2183 = vmatprep.subr.mxu0 0.0
      %2184 = vmatpush1.msra.mxu0 %v309
      %2185 = vmatprep.subr.mxu0 0.0
      %2186 = vmatpush1.msra.mxu0 %v310
      %2187 = vmatprep.subr.mxu0 0.0
      %2188 = vmatpush1.msra.mxu0 %v311
      %2189 = vmatprep.subr.mxu0 0.0
      %2190 = vmatpush1.msra.mxu0 0.0
      %2191 = vmatprep.subr.mxu0 0.0
      %2192 = vmatpush1.msra.mxu0 0.0
      %2193 = vmatprep.subr.mxu0 0.0
      %2194 = vmatpush1.msra.mxu0 0.0
      %2195 = vmatprep.subr.mxu0 0.0
      %2196 = vmatpush1.msra.mxu0 0.0
      %2197 = vmatprep.subr.mxu0 0.0
      %2198 = vmatpush1.msra.mxu0 0.0
      %2199 = vmatprep.subr.mxu0 0.0
      %2200 = vmatpush1.msra.mxu0 0.0
      %2201 = vmatprep.subr.mxu0 0.0
      %2202 = vmatpush1.msra.mxu0 0.0
      %2203 = vmatprep.subr.mxu0 0.0
      %2204 = vmatpush1.msra.mxu0 0.0
      %2205 = vmatprep.subr.mxu0 0.0
      %2206 = vmatpush1.msra.mxu0 0.0
      %2207 = vmatprep.subr.mxu0 0.0
      %2208 = vmatpush1.msra.mxu0 0.0
      %2209 = vmatprep.subr.mxu0 0.0
      %2210 = vmatpush1.msra.mxu0 0.0
      %2211 = vmatprep.subr.mxu0 0.0
      %2212 = vmatpush1.msra.mxu0 0.0
      %2213 = vmatprep.subr.mxu0 0.0
      %2214 = vmatpush1.msra.mxu0 0.0
      %2215 = vmatprep.subr.mxu0 0.0
      %2216 = vmatpush1.msra.mxu0 0.0
      %2217 = vmatprep.subr.mxu0 0.0
      %2218 = vmatpush1.msra.mxu0 0.0
      %2219 = vmatprep.subr.mxu0 0.0
      %2220 = vmatpush1.msra.mxu0 0.0
      %2221 = vmatprep.subr.mxu0 0.0
      %2222 = vmatpush1.msra.mxu0 0.0
      %2223 = vmatprep.subr.mxu0 0.0
      %2224 = vmatpush1.msra.mxu0 0.0
      %2225 = vmatprep.subr.mxu0 0.0
      %2226 = vmatpush1.msra.mxu0 0.0
      %2227 = vmatprep.subr.mxu0 0.0
      %2228 = vmatpush1.msra.mxu0 0.0
      %2229 = vmatprep.subr.mxu0 0.0
      %2230 = vmatpush1.msra.mxu0 0.0
      %2231 = vmatprep.subr.mxu0 0.0
      %2232 = vmatpush1.msra.mxu0 0.0
      %2233 = vmatprep.subr.mxu0 0.0
      %2234 = vmatpush1.msra.mxu0 0.0
      %2235 = vmatprep.subr.mxu0 0.0
      %2236 = vmatpush1.msra.mxu0 0.0
      %2237 = vmatprep.subr.mxu0 0.0
      %2238 = vmatpush1.msra.mxu0 0.0
      %2239 = vmatprep.subr.mxu0 0.0
      %2240 = vmatpush1.msra.mxu0 0.0
      %2241 = vmatprep.subr.mxu0 0.0
      %2242 = vmatpush1.msra.mxu0 0.0
      %2243 = vmatprep.subr.mxu0 0.0
      %2244 = vmatpush1.msra.mxu0 0.0
      %2245 = vmatprep.mubr.f32.mxu0 0.0
      %2246 = vmatmul.mubr.f32.gmra.mrb[0].mxu0 %v2179
      %v2247 = vpop.f32.mrb[0].mxu0
      %v2248 = vadd.f32 0.0, %v2247
      %v2249 = vpop.f32.mrb[0].mxu0
      %2250 = vdwg.mxu0
      %v2252 = vsel %vm352, %v198, 0
      %2254 = vmatprep.subr.mxu0 0.0
      %2255 = vmatpush1.msra.mxu0 %v312
      %2256 = vmatprep.subr.mxu0 0.0
      %2257 = vmatpush1.msra.mxu0 %v313
      %2258 = vmatprep.subr.mxu0 0.0
      %2259 = vmatpush1.msra.mxu0 %v314
      %2260 = vmatprep.subr.mxu0 0.0
      %2261 = vmatpush1.msra.mxu0 %v315
      %2262 = vmatprep.subr.mxu0 0.0
      %2263 = vmatpush1.msra.mxu0 0.0
      %2264 = vmatprep.subr.mxu0 0.0
      %2265 = vmatpush1.msra.mxu0 0.0
      %2266 = vmatprep.subr.mxu0 0.0
      %2267 = vmatpush1.msra.mxu0 0.0
      %2268 = vmatprep.subr.mxu0 0.0
      %2269 = vmatpush1.msra.mxu0 0.0
      %2270 = vmatprep.subr.mxu0 0.0
      %2271 = vmatpush1.msra.mxu0 0.0
      %2272 = vmatprep.subr.mxu0 0.0
      %2273 = vmatpush1.msra.mxu0 0.0
      %2274 = vmatprep.subr.mxu0 0.0
      %2275 = vmatpush1.msra.mxu0 0.0
      %2276 = vmatprep.subr.mxu0 0.0
      %2277 = vmatpush1.msra.mxu0 0.0
      %2278 = vmatprep.subr.mxu0 0.0
      %2279 = vmatpush1.msra.mxu0 0.0
      %2280 = vmatprep.subr.mxu0 0.0
      %2281 = vmatpush1.msra.mxu0 0.0
      %2282 = vmatprep.subr.mxu0 0.0
      %2283 = vmatpush1.msra.mxu0 0.0
      %2284 = vmatprep.subr.mxu0 0.0
      %2285 = vmatpush1.msra.mxu0 0.0
      %2286 = vmatprep.subr.mxu0 0.0
      %2287 = vmatpush1.msra.mxu0 0.0
      %2288 = vmatprep.subr.mxu0 0.0
      %2289 = vmatpush1.msra.mxu0 0.0
      %2290 = vmatprep.subr.mxu0 0.0
      %2291 = vmatpush1.msra.mxu0 0.0
      %2292 = vmatprep.subr.mxu0 0.0
      %2293 = vmatpush1.msra.mxu0 0.0
      %2294 = vmatprep.subr.mxu0 0.0
      %2295 = vmatpush1.msra.mxu0 0.0
      %2296 = vmatprep.subr.mxu0 0.0
      %2297 = vmatpush1.msra.mxu0 0.0
      %2298 = vmatprep.subr.mxu0 0.0
      %2299 = vmatpush1.msra.mxu0 0.0
      %2300 = vmatprep.subr.mxu0 0.0
      %2301 = vmatpush1.msra.mxu0 0.0
      %2302 = vmatprep.subr.mxu0 0.0
      %2303 = vmatpush1.msra.mxu0 0.0
      %2304 = vmatprep.subr.mxu0 0.0
      %2305 = vmatpush1.msra.mxu0 0.0
      %2306 = vmatprep.subr.mxu0 0.0
      %2307 = vmatpush1.msra.mxu0 0.0
      %2308 = vmatprep.subr.mxu0 0.0
      %2309 = vmatpush1.msra.mxu0 0.0
      %2310 = vmatprep.subr.mxu0 0.0
      %2311 = vmatpush1.msra.mxu0 0.0
      %2312 = vmatprep.subr.mxu0 0.0
      %2313 = vmatpush1.msra.mxu0 0.0
      %2314 = vmatprep.subr.mxu0 0.0
      %2315 = vmatpush1.msra.mxu0 0.0
      %2316 = vmatprep.subr.mxu0 0.0
      %2317 = vmatpush1.msra.mxu0 0.0
      %2318 = vmatprep.mubr.f32.mxu0 0.0
      %2319 = vmatmul.mubr.f32.gmra.mrb[0].mxu0 %v2252
      %v2320 = vpop.f32.mrb[0].mxu0
      %v2321 = vadd.f32 0.0, %v2320
      %v2322 = vpop.f32.mrb[0].mxu0
      %2323 = vdwg.mxu0
      %v2325 = vsel %vm352, %v199, 0
      %2327 = vmatprep.subr.mxu0 0.0
      %2328 = vmatpush1.msra.mxu0 %v316
      %2329 = vmatprep.subr.mxu0 0.0
      %2330 = vmatpush1.msra.mxu0 %v317
      %2331 = vmatprep.subr.mxu0 0.0
      %2332 = vmatpush1.msra.mxu0 %v318
      %2333 = vmatprep.subr.mxu0 0.0
      %2334 = vmatpush1.msra.mxu0 %v319
      %2335 = vmatprep.subr.mxu0 0.0
      %2336 = vmatpush1.msra.mxu0 0.0
      %2337 = vmatprep.subr.mxu0 0.0
      %2338 = vmatpush1.msra.mxu0 0.0
      %2339 = vmatprep.subr.mxu0 0.0
      %2340 = vmatpush1.msra.mxu0 0.0
      %2341 = vmatprep.subr.mxu0 0.0
      %2342 = vmatpush1.msra.mxu0 0.0
      %2343 = vmatprep.subr.mxu0 0.0
      %2344 = vmatpush1.msra.mxu0 0.0
      %2345 = vmatprep.subr.mxu0 0.0
      %2346 = vmatpush1.msra.mxu0 0.0
      %2347 = vmatprep.subr.mxu0 0.0
      %2348 = vmatpush1.msra.mxu0 0.0
      %2349 = vmatprep.subr.mxu0 0.0
      %2350 = vmatpush1.msra.mxu0 0.0
      %2351 = vmatprep.subr.mxu0 0.0
      %2352 = vmatpush1.msra.mxu0 0.0
      %2353 = vmatprep.subr.mxu0 0.0
      %2354 = vmatpush1.msra.mxu0 0.0
      %2355 = vmatprep.subr.mxu0 0.0
      %2356 = vmatpush1.msra.mxu0 0.0
      %2357 = vmatprep.subr.mxu0 0.0
      %2358 = vmatpush1.msra.mxu0 0.0
      %2359 = vmatprep.subr.mxu0 0.0
      %2360 = vmatpush1.msra.mxu0 0.0
      %2361 = vmatprep.subr.mxu0 0.0
      %2362 = vmatpush1.msra.mxu0 0.0
      %2363 = vmatprep.subr.mxu0 0.0
      %2364 = vmatpush1.msra.mxu0 0.0
      %2365 = vmatprep.subr.mxu0 0.0
      %2366 = vmatpush1.msra.mxu0 0.0
      %2367 = vmatprep.subr.mxu0 0.0
      %2368 = vmatpush1.msra.mxu0 0.0
      %2369 = vmatprep.subr.mxu0 0.0
      %2370 = vmatpush1.msra.mxu0 0.0
      %2371 = vmatprep.subr.mxu0 0.0
      %2372 = vmatpush1.msra.mxu0 0.0
      %2373 = vmatprep.subr.mxu0 0.0
      %2374 = vmatpush1.msra.mxu0 0.0
      %2375 = vmatprep.subr.mxu0 0.0
      %2376 = vmatpush1.msra.mxu0 0.0
      %2377 = vmatprep.subr.mxu0 0.0
      %2378 = vmatpush1.msra.mxu0 0.0
      %2379 = vmatprep.subr.mxu0 0.0
      %2380 = vmatpush1.msra.mxu0 0.0
      %2381 = vmatprep.subr.mxu0 0.0
      %2382 = vmatpush1.msra.mxu0 0.0
      %2383 = vmatprep.subr.mxu0 0.0
      %2384 = vmatpush1.msra.mxu0 0.0
      %2385 = vmatprep.subr.mxu0 0.0
      %2386 = vmatpush1.msra.mxu0 0.0
      %2387 = vmatprep.subr.mxu0 0.0
      %2388 = vmatpush1.msra.mxu0 0.0
      %2389 = vmatprep.subr.mxu0 0.0
      %2390 = vmatpush1.msra.mxu0 0.0
      %2391 = vmatprep.mubr.f32.mxu0 0.0
      %2392 = vmatmul.mubr.f32.gmra.mrb[0].mxu0 %v2325
      %v2393 = vpop.f32.mrb[0].mxu0
      %v2394 = vadd.f32 0.0, %v2393
      %v2395 = vpop.f32.mrb[0].mxu0
      %2396 = vdwg.mxu0
      %v2398 = vsel %vm352, %v200, 0
      %2400 = vmatprep.subr.mxu0 0.0
      %2401 = vmatpush1.msra.mxu0 %v320
      %2402 = vmatprep.subr.mxu0 0.0
      %2403 = vmatpush1.msra.mxu0 %v321
      %2404 = vmatprep.subr.mxu0 0.0
      %2405 = vmatpush1.msra.mxu0 %v322
      %2406 = vmatprep.subr.mxu0 0.0
      %2407 = vmatpush1.msra.mxu0 %v323
      %2408 = vmatprep.subr.mxu0 0.0
      %2409 = vmatpush1.msra.mxu0 0.0
      %2410 = vmatprep.subr.mxu0 0.0
      %2411 = vmatpush1.msra.mxu0 0.0
      %2412 = vmatprep.subr.mxu0 0.0
      %2413 = vmatpush1.msra.mxu0 0.0
      %2414 = vmatprep.subr.mxu0 0.0
      %2415 = vmatpush1.msra.mxu0 0.0
      %2416 = vmatprep.subr.mxu0 0.0
      %2417 = vmatpush1.msra.mxu0 0.0
      %2418 = vmatprep.subr.mxu0 0.0
      %2419 = vmatpush1.msra.mxu0 0.0
      %2420 = vmatprep.subr.mxu0 0.0
      %2421 = vmatpush1.msra.mxu0 0.0
      %2422 = vmatprep.subr.mxu0 0.0
      %2423 = vmatpush1.msra.mxu0 0.0
      %2424 = vmatprep.subr.mxu0 0.0
      %2425 = vmatpush1.msra.mxu0 0.0
      %2426 = vmatprep.subr.mxu0 0.0
      %2427 = vmatpush1.msra.mxu0 0.0
      %2428 = vmatprep.subr.mxu0 0.0
      %2429 = vmatpush1.msra.mxu0 0.0
      %2430 = vmatprep.subr.mxu0 0.0
      %2431 = vmatpush1.msra.mxu0 0.0
      %2432 = vmatprep.subr.mxu0 0.0
      %2433 = vmatpush1.msra.mxu0 0.0
      %2434 = vmatprep.subr.mxu0 0.0
      %2435 = vmatpush1.msra.mxu0 0.0
      %2436 = vmatprep.subr.mxu0 0.0
      %2437 = vmatpush1.msra.mxu0 0.0
      %2438 = vmatprep.subr.mxu0 0.0
      %2439 = vmatpush1.msra.mxu0 0.0
      %2440 = vmatprep.subr.mxu0 0.0
      %2441 = vmatpush1.msra.mxu0 0.0
      %2442 = vmatprep.subr.mxu0 0.0
      %2443 = vmatpush1.msra.mxu0 0.0
      %2444 = vmatprep.subr.mxu0 0.0
      %2445 = vmatpush1.msra.mxu0 0.0
      %2446 = vmatprep.subr.mxu0 0.0
      %2447 = vmatpush1.msra.mxu0 0.0
      %2448 = vmatprep.subr.mxu0 0.0
      %2449 = vmatpush1.msra.mxu0 0.0
      %2450 = vmatprep.subr.mxu0 0.0
      %2451 = vmatpush1.msra.mxu0 0.0
      %2452 = vmatprep.subr.mxu0 0.0
      %2453 = vmatpush1.msra.mxu0 0.0
      %2454 = vmatprep.subr.mxu0 0.0
      %2455 = vmatpush1.msra.mxu0 0.0
      %2456 = vmatprep.subr.mxu0 0.0
      %2457 = vmatpush1.msra.mxu0 0.0
      %2458 = vmatprep.subr.mxu0 0.0
      %2459 = vmatpush1.msra.mxu0 0.0
      %2460 = vmatprep.subr.mxu0 0.0
      %2461 = vmatpush1.msra.mxu0 0.0
      %2462 = vmatprep.subr.mxu0 0.0
      %2463 = vmatpush1.msra.mxu0 0.0
      %2464 = vmatprep.mubr.f32.mxu0 0.0
      %2465 = vmatmul.mubr.f32.gmra.mrb[0].mxu0 %v2398
      %v2466 = vpop.f32.mrb[0].mxu0
      %v2467 = vadd.f32 0.0, %v2466
      %v2468 = vpop.f32.mrb[0].mxu0
      %2469 = vdwg.mxu0
      %v2471 = vsel %vm352, %v201, 0
      %2473 = vmatprep.subr.mxu0 0.0
      %2474 = vmatpush1.msra.mxu0 %v324
      %2475 = vmatprep.subr.mxu0 0.0
      %2476 = vmatpush1.msra.mxu0 %v325
      %2477 = vmatprep.subr.mxu0 0.0
      %2478 = vmatpush1.msra.mxu0 %v326
      %2479 = vmatprep.subr.mxu0 0.0
      %2480 = vmatpush1.msra.mxu0 %v327
      %2481 = vmatprep.subr.mxu0 0.0
      %2482 = vmatpush1.msra.mxu0 0.0
      %2483 = vmatprep.subr.mxu0 0.0
      %2484 = vmatpush1.msra.mxu0 0.0
      %2485 = vmatprep.subr.mxu0 0.0
      %2486 = vmatpush1.msra.mxu0 0.0
      %2487 = vmatprep.subr.mxu0 0.0
      %2488 = vmatpush1.msra.mxu0 0.0
      %2489 = vmatprep.subr.mxu0 0.0
      %2490 = vmatpush1.msra.mxu0 0.0
      %2491 = vmatprep.subr.mxu0 0.0
      %2492 = vmatpush1.msra.mxu0 0.0
      %2493 = vmatprep.subr.mxu0 0.0
      %2494 = vmatpush1.msra.mxu0 0.0
      %2495 = vmatprep.subr.mxu0 0.0
      %2496 = vmatpush1.msra.mxu0 0.0
      %2497 = vmatprep.subr.mxu0 0.0
      %2498 = vmatpush1.msra.mxu0 0.0
      %2499 = vmatprep.subr.mxu0 0.0
      %2500 = vmatpush1.msra.mxu0 0.0
      %2501 = vmatprep.subr.mxu0 0.0
      %2502 = vmatpush1.msra.mxu0 0.0
      %2503 = vmatprep.subr.mxu0 0.0
      %2504 = vmatpush1.msra.mxu0 0.0
      %2505 = vmatprep.subr.mxu0 0.0
      %2506 = vmatpush1.msra.mxu0 0.0
      %2507 = vmatprep.subr.mxu0 0.0
      %2508 = vmatpush1.msra.mxu0 0.0
      %2509 = vmatprep.subr.mxu0 0.0
      %2510 = vmatpush1.msra.mxu0 0.0
      %2511 = vmatprep.subr.mxu0 0.0
      %2512 = vmatpush1.msra.mxu0 0.0
      %2513 = vmatprep.subr.mxu0 0.0
      %2514 = vmatpush1.msra.mxu0 0.0
      %2515 = vmatprep.subr.mxu0 0.0
      %2516 = vmatpush1.msra.mxu0 0.0
      %2517 = vmatprep.subr.mxu0 0.0
      %2518 = vmatpush1.msra.mxu0 0.0
      %2519 = vmatprep.subr.mxu0 0.0
      %2520 = vmatpush1.msra.mxu0 0.0
      %2521 = vmatprep.subr.mxu0 0.0
      %2522 = vmatpush1.msra.mxu0 0.0
      %2523 = vmatprep.subr.mxu0 0.0
      %2524 = vmatpush1.msra.mxu0 0.0
      %2525 = vmatprep.subr.mxu0 0.0
      %2526 = vmatpush1.msra.mxu0 0.0
      %2527 = vmatprep.subr.mxu0 0.0
      %2528 = vmatpush1.msra.mxu0 0.0
      %2529 = vmatprep.subr.mxu0 0.0
      %2530 = vmatpush1.msra.mxu0 0.0
      %2531 = vmatprep.subr.mxu0 0.0
      %2532 = vmatpush1.msra.mxu0 0.0
      %2533 = vmatprep.subr.mxu0 0.0
      %2534 = vmatpush1.msra.mxu0 0.0
      %2535 = vmatprep.subr.mxu0 0.0
      %2536 = vmatpush1.msra.mxu0 0.0
      %2537 = vmatprep.mubr.f32.mxu0 0.0
      %2538 = vmatmul.mubr.f32.gmra.mrb[0].mxu0 %v2471
      %v2539 = vpop.f32.mrb[0].mxu0
      %v2540 = vadd.f32 0.0, %v2539
      %v2541 = vpop.f32.mrb[0].mxu0
      %2542 = vdwg.mxu0
      %v2544 = vsel %vm352, %v202, 0
      %2546 = vmatprep.subr.mxu0 0.0
      %2547 = vmatpush1.msra.mxu0 %v328
      %2548 = vmatprep.subr.mxu0 0.0
      %2549 = vmatpush1.msra.mxu0 %v329
      %2550 = vmatprep.subr.mxu0 0.0
      %2551 = vmatpush1.msra.mxu0 %v330
      %2552 = vmatprep.subr.mxu0 0.0
      %2553 = vmatpush1.msra.mxu0 %v331
      %2554 = vmatprep.subr.mxu0 0.0
      %2555 = vmatpush1.msra.mxu0 0.0
      %2556 = vmatprep.subr.mxu0 0.0
      %2557 = vmatpush1.msra.mxu0 0.0
      %2558 = vmatprep.subr.mxu0 0.0
      %2559 = vmatpush1.msra.mxu0 0.0
      %2560 = vmatprep.subr.mxu0 0.0
      %2561 = vmatpush1.msra.mxu0 0.0
      %2562 = vmatprep.subr.mxu0 0.0
      %2563 = vmatpush1.msra.mxu0 0.0
      %2564 = vmatprep.subr.mxu0 0.0
      %2565 = vmatpush1.msra.mxu0 0.0
      %2566 = vmatprep.subr.mxu0 0.0
      %2567 = vmatpush1.msra.mxu0 0.0
      %2568 = vmatprep.subr.mxu0 0.0
      %2569 = vmatpush1.msra.mxu0 0.0
      %2570 = vmatprep.subr.mxu0 0.0
      %2571 = vmatpush1.msra.mxu0 0.0
      %2572 = vmatprep.subr.mxu0 0.0
      %2573 = vmatpush1.msra.mxu0 0.0
      %2574 = vmatprep.subr.mxu0 0.0
      %2575 = vmatpush1.msra.mxu0 0.0
      %2576 = vmatprep.subr.mxu0 0.0
      %2577 = vmatpush1.msra.mxu0 0.0
      %2578 = vmatprep.subr.mxu0 0.0
      %2579 = vmatpush1.msra.mxu0 0.0
      %2580 = vmatprep.subr.mxu0 0.0
      %2581 = vmatpush1.msra.mxu0 0.0
      %2582 = vmatprep.subr.mxu0 0.0
      %2583 = vmatpush1.msra.mxu0 0.0
      %2584 = vmatprep.subr.mxu0 0.0
      %2585 = vmatpush1.msra.mxu0 0.0
      %2586 = vmatprep.subr.mxu0 0.0
      %2587 = vmatpush1.msra.mxu0 0.0
      %2588 = vmatprep.subr.mxu0 0.0
      %2589 = vmatpush1.msra.mxu0 0.0
      %2590 = vmatprep.subr.mxu0 0.0
      %2591 = vmatpush1.msra.mxu0 0.0
      %2592 = vmatprep.subr.mxu0 0.0
      %2593 = vmatpush1.msra.mxu0 0.0
      %2594 = vmatprep.subr.mxu0 0.0
      %2595 = vmatpush1.msra.mxu0 0.0
      %2596 = vmatprep.subr.mxu0 0.0
      %2597 = vmatpush1.msra.mxu0 0.0
      %2598 = vmatprep.subr.mxu0 0.0
      %2599 = vmatpush1.msra.mxu0 0.0
      %2600 = vmatprep.subr.mxu0 0.0
      %2601 = vmatpush1.msra.mxu0 0.0
      %2602 = vmatprep.subr.mxu0 0.0
      %2603 = vmatpush1.msra.mxu0 0.0
      %2604 = vmatprep.subr.mxu0 0.0
      %2605 = vmatpush1.msra.mxu0 0.0
      %2606 = vmatprep.subr.mxu0 0.0
      %2607 = vmatpush1.msra.mxu0 0.0
      %2608 = vmatprep.subr.mxu0 0.0
      %2609 = vmatpush1.msra.mxu0 0.0
      %2610 = vmatprep.mubr.f32.mxu0 0.0
      %2611 = vmatmul.mubr.f32.gmra.mrb[0].mxu0 %v2544
      %v2612 = vpop.f32.mrb[0].mxu0
      %v2613 = vadd.f32 0.0, %v2612
      %v2614 = vpop.f32.mrb[0].mxu0
      %2615 = vdwg.mxu0
      %v2617 = vsel %vm352, %v203, 0
      %2619 = vmatprep.subr.mxu0 0.0
      %2620 = vmatpush1.msra.mxu0 %v332
      %2621 = vmatprep.subr.mxu0 0.0
      %2622 = vmatpush1.msra.mxu0 %v333
      %2623 = vmatprep.subr.mxu0 0.0
      %2624 = vmatpush1.msra.mxu0 %v334
      %2625 = vmatprep.subr.mxu0 0.0
      %2626 = vmatpush1.msra.mxu0 %v335
      %2627 = vmatprep.subr.mxu0 0.0
      %2628 = vmatpush1.msra.mxu0 0.0
      %2629 = vmatprep.subr.mxu0 0.0
      %2630 = vmatpush1.msra.mxu0 0.0
      %2631 = vmatprep.subr.mxu0 0.0
      %2632 = vmatpush1.msra.mxu0 0.0
      %2633 = vmatprep.subr.mxu0 0.0
      %2634 = vmatpush1.msra.mxu0 0.0
      %2635 = vmatprep.subr.mxu0 0.0
      %2636 = vmatpush1.msra.mxu0 0.0
      %2637 = vmatprep.subr.mxu0 0.0
      %2638 = vmatpush1.msra.mxu0 0.0
      %2639 = vmatprep.subr.mxu0 0.0
      %2640 = vmatpush1.msra.mxu0 0.0
      %2641 = vmatprep.subr.mxu0 0.0
      %2642 = vmatpush1.msra.mxu0 0.0
      %2643 = vmatprep.subr.mxu0 0.0
      %2644 = vmatpush1.msra.mxu0 0.0
      %2645 = vmatprep.subr.mxu0 0.0
      %2646 = vmatpush1.msra.mxu0 0.0
      %2647 = vmatprep.subr.mxu0 0.0
      %2648 = vmatpush1.msra.mxu0 0.0
      %2649 = vmatprep.subr.mxu0 0.0
      %2650 = vmatpush1.msra.mxu0 0.0
      %2651 = vmatprep.subr.mxu0 0.0
      %2652 = vmatpush1.msra.mxu0 0.0
      %2653 = vmatprep.subr.mxu0 0.0
      %2654 = vmatpush1.msra.mxu0 0.0
      %2655 = vmatprep.subr.mxu0 0.0
      %2656 = vmatpush1.msra.mxu0 0.0
      %2657 = vmatprep.subr.mxu0 0.0
      %2658 = vmatpush1.msra.mxu0 0.0
      %2659 = vmatprep.subr.mxu0 0.0
      %2660 = vmatpush1.msra.mxu0 0.0
      %2661 = vmatprep.subr.mxu0 0.0
      %2662 = vmatpush1.msra.mxu0 0.0
      %2663 = vmatprep.subr.mxu0 0.0
      %2664 = vmatpush1.msra.mxu0 0.0
      %2665 = vmatprep.subr.mxu0 0.0
      %2666 = vmatpush1.msra.mxu0 0.0
      %2667 = vmatprep.subr.mxu0 0.0
      %2668 = vmatpush1.msra.mxu0 0.0
      %2669 = vmatprep.subr.mxu0 0.0
      %2670 = vmatpush1.msra.mxu0 0.0
      %2671 = vmatprep.subr.mxu0 0.0
      %2672 = vmatpush1.msra.mxu0 0.0
      %2673 = vmatprep.subr.mxu0 0.0
      %2674 = vmatpush1.msra.mxu0 0.0
      %2675 = vmatprep.subr.mxu0 0.0
      %2676 = vmatpush1.msra.mxu0 0.0
      %2677 = vmatprep.subr.mxu0 0.0
      %2678 = vmatpush1.msra.mxu0 0.0
      %2679 = vmatprep.subr.mxu0 0.0
      %2680 = vmatpush1.msra.mxu0 0.0
      %2681 = vmatprep.subr.mxu0 0.0
      %2682 = vmatpush1.msra.mxu0 0.0
      %2683 = vmatprep.mubr.f32.mxu0 0.0
      %2684 = vmatmul.mubr.f32.gmra.mrb[0].mxu0 %v2617
      %v2685 = vpop.f32.mrb[0].mxu0
      %v2686 = vadd.f32 0.0, %v2685
      %v2687 = vpop.f32.mrb[0].mxu0
      %2688 = vdwg.mxu0
      %v2690 = vsel %vm352, %v204, 0
      %2692 = vmatprep.subr.mxu0 0.0
      %2693 = vmatpush1.msra.mxu0 %v336
      %2694 = vmatprep.subr.mxu0 0.0
      %2695 = vmatpush1.msra.mxu0 %v337
      %2696 = vmatprep.subr.mxu0 0.0
      %2697 = vmatpush1.msra.mxu0 %v338
      %2698 = vmatprep.subr.mxu0 0.0
      %2699 = vmatpush1.msra.mxu0 %v339
      %2700 = vmatprep.subr.mxu0 0.0
      %2701 = vmatpush1.msra.mxu0 0.0
      %2702 = vmatprep.subr.mxu0 0.0
      %2703 = vmatpush1.msra.mxu0 0.0
      %2704 = vmatprep.subr.mxu0 0.0
      %2705 = vmatpush1.msra.mxu0 0.0
      %2706 = vmatprep.subr.mxu0 0.0
      %2707 = vmatpush1.msra.mxu0 0.0
      %2708 = vmatprep.subr.mxu0 0.0
      %2709 = vmatpush1.msra.mxu0 0.0
      %2710 = vmatprep.subr.mxu0 0.0
      %2711 = vmatpush1.msra.mxu0 0.0
      %2712 = vmatprep.subr.mxu0 0.0
      %2713 = vmatpush1.msra.mxu0 0.0
      %2714 = vmatprep.subr.mxu0 0.0
      %2715 = vmatpush1.msra.mxu0 0.0
      %2716 = vmatprep.subr.mxu0 0.0
      %2717 = vmatpush1.msra.mxu0 0.0
      %2718 = vmatprep.subr.mxu0 0.0
      %2719 = vmatpush1.msra.mxu0 0.0
      %2720 = vmatprep.subr.mxu0 0.0
      %2721 = vmatpush1.msra.mxu0 0.0
      %2722 = vmatprep.subr.mxu0 0.0
      %2723 = vmatpush1.msra.mxu0 0.0
      %2724 = vmatprep.subr.mxu0 0.0
      %2725 = vmatpush1.msra.mxu0 0.0
      %2726 = vmatprep.subr.mxu0 0.0
      %2727 = vmatpush1.msra.mxu0 0.0
      %2728 = vmatprep.subr.mxu0 0.0
      %2729 = vmatpush1.msra.mxu0 0.0
      %2730 = vmatprep.subr.mxu0 0.0
      %2731 = vmatpush1.msra.mxu0 0.0
      %2732 = vmatprep.subr.mxu0 0.0
      %2733 = vmatpush1.msra.mxu0 0.0
      %2734 = vmatprep.subr.mxu0 0.0
      %2735 = vmatpush1.msra.mxu0 0.0
      %2736 = vmatprep.subr.mxu0 0.0
      %2737 = vmatpush1.msra.mxu0 0.0
      %2738 = vmatprep.subr.mxu0 0.0
      %2739 = vmatpush1.msra.mxu0 0.0
      %2740 = vmatprep.subr.mxu0 0.0
      %2741 = vmatpush1.msra.mxu0 0.0
      %2742 = vmatprep.subr.mxu0 0.0
      %2743 = vmatpush1.msra.mxu0 0.0
      %2744 = vmatprep.subr.mxu0 0.0
      %2745 = vmatpush1.msra.mxu0 0.0
      %2746 = vmatprep.subr.mxu0 0.0
      %2747 = vmatpush1.msra.mxu0 0.0
      %2748 = vmatprep.subr.mxu0 0.0
      %2749 = vmatpush1.msra.mxu0 0.0
      %2750 = vmatprep.subr.mxu0 0.0
      %2751 = vmatpush1.msra.mxu0 0.0
      %2752 = vmatprep.subr.mxu0 0.0
      %2753 = vmatpush1.msra.mxu0 0.0
      %2754 = vmatprep.subr.mxu0 0.0
      %2755 = vmatpush1.msra.mxu0 0.0
      %2756 = vmatprep.mubr.f32.mxu0 0.0
      %2757 = vmatmul.mubr.f32.gmra.mrb[0].mxu0 %v2690
      %v2758 = vpop.f32.mrb[0].mxu0
      %v2759 = vadd.f32 0.0, %v2758
      %v2760 = vpop.f32.mrb[0].mxu0
      %2761 = vdwg.mxu0
      %v2763 = vsel %vm352, %v205, 0
      %2765 = vmatprep.subr.mxu0 0.0
      %2766 = vmatpush1.msra.mxu0 %v340
      %2767 = vmatprep.subr.mxu0 0.0
      %2768 = vmatpush1.msra.mxu0 %v341
      %2769 = vmatprep.subr.mxu0 0.0
      %2770 = vmatpush1.msra.mxu0 %v342
      %2771 = vmatprep.subr.mxu0 0.0
      %2772 = vmatpush1.msra.mxu0 %v343
      %2773 = vmatprep.subr.mxu0 0.0
      %2774 = vmatpush1.msra.mxu0 0.0
      %2775 = vmatprep.subr.mxu0 0.0
      %2776 = vmatpush1.msra.mxu0 0.0
      %2777 = vmatprep.subr.mxu0 0.0
      %2778 = vmatpush1.msra.mxu0 0.0
      %2779 = vmatprep.subr.mxu0 0.0
      %2780 = vmatpush1.msra.mxu0 0.0
      %2781 = vmatprep.subr.mxu0 0.0
      %2782 = vmatpush1.msra.mxu0 0.0
      %2783 = vmatprep.subr.mxu0 0.0
      %2784 = vmatpush1.msra.mxu0 0.0
      %2785 = vmatprep.subr.mxu0 0.0
      %2786 = vmatpush1.msra.mxu0 0.0
      %2787 = vmatprep.subr.mxu0 0.0
      %2788 = vmatpush1.msra.mxu0 0.0
      %2789 = vmatprep.subr.mxu0 0.0
      %2790 = vmatpush1.msra.mxu0 0.0
      %2791 = vmatprep.subr.mxu0 0.0
      %2792 = vmatpush1.msra.mxu0 0.0
      %2793 = vmatprep.subr.mxu0 0.0
      %2794 = vmatpush1.msra.mxu0 0.0
      %2795 = vmatprep.subr.mxu0 0.0
      %2796 = vmatpush1.msra.mxu0 0.0
      %2797 = vmatprep.subr.mxu0 0.0
      %2798 = vmatpush1.msra.mxu0 0.0
      %2799 = vmatprep.subr.mxu0 0.0
      %2800 = vmatpush1.msra.mxu0 0.0
      %2801 = vmatprep.subr.mxu0 0.0
      %2802 = vmatpush1.msra.mxu0 0.0
      %2803 = vmatprep.subr.mxu0 0.0
      %2804 = vmatpush1.msra.mxu0 0.0
      %2805 = vmatprep.subr.mxu0 0.0
      %2806 = vmatpush1.msra.mxu0 0.0
      %2807 = vmatprep.subr.mxu0 0.0
      %2808 = vmatpush1.msra.mxu0 0.0
      %2809 = vmatprep.subr.mxu0 0.0
      %2810 = vmatpush1.msra.mxu0 0.0
      %2811 = vmatprep.subr.mxu0 0.0
      %2812 = vmatpush1.msra.mxu0 0.0
      %2813 = vmatprep.subr.mxu0 0.0
      %2814 = vmatpush1.msra.mxu0 0.0
      %2815 = vmatprep.subr.mxu0 0.0
      %2816 = vmatpush1.msra.mxu0 0.0
      %2817 = vmatprep.subr.mxu0 0.0
      %2818 = vmatpush1.msra.mxu0 0.0
      %2819 = vmatprep.subr.mxu0 0.0
      %2820 = vmatpush1.msra.mxu0 0.0
      %2821 = vmatprep.subr.mxu0 0.0
      %2822 = vmatpush1.msra.mxu0 0.0
      %2823 = vmatprep.subr.mxu0 0.0
      %2824 = vmatpush1.msra.mxu0 0.0
      %2825 = vmatprep.subr.mxu0 0.0
      %2826 = vmatpush1.msra.mxu0 0.0
      %2827 = vmatprep.subr.mxu0 0.0
      %2828 = vmatpush1.msra.mxu0 0.0
      %2829 = vmatprep.mubr.f32.mxu0 0.0
      %2830 = vmatmul.mubr.f32.gmra.mrb[0].mxu0 %v2763
      %v2831 = vpop.f32.mrb[0].mxu0
      %v2832 = vadd.f32 0.0, %v2831
      %v2833 = vpop.f32.mrb[0].mxu0
      %2834 = vdwg.mxu0
      %v2836 = vsel %vm352, %v206, 0
      %2838 = vmatprep.subr.mxu0 0.0
      %2839 = vmatpush1.msra.mxu0 %v344
      %2840 = vmatprep.subr.mxu0 0.0
      %2841 = vmatpush1.msra.mxu0 %v345
      %2842 = vmatprep.subr.mxu0 0.0
      %2843 = vmatpush1.msra.mxu0 %v346
      %2844 = vmatprep.subr.mxu0 0.0
      %2845 = vmatpush1.msra.mxu0 %v347
      %2846 = vmatprep.subr.mxu0 0.0
      %2847 = vmatpush1.msra.mxu0 0.0
      %2848 = vmatprep.subr.mxu0 0.0
      %2849 = vmatpush1.msra.mxu0 0.0
      %2850 = vmatprep.subr.mxu0 0.0
      %2851 = vmatpush1.msra.mxu0 0.0
      %2852 = vmatprep.subr.mxu0 0.0
      %2853 = vmatpush1.msra.mxu0 0.0
      %2854 = vmatprep.subr.mxu0 0.0
      %2855 = vmatpush1.msra.mxu0 0.0
      %2856 = vmatprep.subr.mxu0 0.0
      %2857 = vmatpush1.msra.mxu0 0.0
      %2858 = vmatprep.subr.mxu0 0.0
      %2859 = vmatpush1.msra.mxu0 0.0
      %2860 = vmatprep.subr.mxu0 0.0
      %2861 = vmatpush1.msra.mxu0 0.0
      %2862 = vmatprep.subr.mxu0 0.0
      %2863 = vmatpush1.msra.mxu0 0.0
      %2864 = vmatprep.subr.mxu0 0.0
      %2865 = vmatpush1.msra.mxu0 0.0
      %2866 = vmatprep.subr.mxu0 0.0
      %2867 = vmatpush1.msra.mxu0 0.0
      %2868 = vmatprep.subr.mxu0 0.0
      %2869 = vmatpush1.msra.mxu0 0.0
      %2870 = vmatprep.subr.mxu0 0.0
      %2871 = vmatpush1.msra.mxu0 0.0
      %2872 = vmatprep.subr.mxu0 0.0
      %2873 = vmatpush1.msra.mxu0 0.0
      %2874 = vmatprep.subr.mxu0 0.0
      %2875 = vmatpush1.msra.mxu0 0.0
      %2876 = vmatprep.subr.mxu0 0.0
      %2877 = vmatpush1.msra.mxu0 0.0
      %2878 = vmatprep.subr.mxu0 0.0
      %2879 = vmatpush1.msra.mxu0 0.0
      %2880 = vmatprep.subr.mxu0 0.0
      %2881 = vmatpush1.msra.mxu0 0.0
      %2882 = vmatprep.subr.mxu0 0.0
      %2883 = vmatpush1.msra.mxu0 0.0
      %2884 = vmatprep.subr.mxu0 0.0
      %2885 = vmatpush1.msra.mxu0 0.0
      %2886 = vmatprep.subr.mxu0 0.0
      %2887 = vmatpush1.msra.mxu0 0.0
      %2888 = vmatprep.subr.mxu0 0.0
      %2889 = vmatpush1.msra.mxu0 0.0
      %2890 = vmatprep.subr.mxu0 0.0
      %2891 = vmatpush1.msra.mxu0 0.0
      %2892 = vmatprep.subr.mxu0 0.0
      %2893 = vmatpush1.msra.mxu0 0.0
      %2894 = vmatprep.subr.mxu0 0.0
      %2895 = vmatpush1.msra.mxu0 0.0
      %2896 = vmatprep.subr.mxu0 0.0
      %2897 = vmatpush1.msra.mxu0 0.0
      %2898 = vmatprep.subr.mxu0 0.0
      %2899 = vmatpush1.msra.mxu0 0.0
      %2900 = vmatprep.subr.mxu0 0.0
      %2901 = vmatpush1.msra.mxu0 0.0
      %2902 = vmatprep.mubr.f32.mxu0 0.0
      %2903 = vmatmul.mubr.f32.gmra.mrb[0].mxu0 %v2836
      %v2904 = vpop.f32.mrb[0].mxu0
      %v2905 = vadd.f32 0.0, %v2904
      %v2906 = vpop.f32.mrb[0].mxu0
      %2907 = vdwg.mxu0
      %v2909 = vsel %vm352, %v207, 0
      %2911 = vmatprep.subr.mxu0 0.0
      %2912 = vmatpush1.msra.mxu0 %v348
      %2913 = vmatprep.subr.mxu0 0.0
      %2914 = vmatpush1.msra.mxu0 %v349
      %2915 = vmatprep.subr.mxu0 0.0
      %2916 = vmatpush1.msra.mxu0 %v350
      %2917 = vmatprep.subr.mxu0 0.0
      %2918 = vmatpush1.msra.mxu0 %v351
      %2919 = vmatprep.subr.mxu0 0.0
      %2920 = vmatpush1.msra.mxu0 0.0
      %2921 = vmatprep.subr.mxu0 0.0
      %2922 = vmatpush1.msra.mxu0 0.0
      %2923 = vmatprep.subr.mxu0 0.0
      %2924 = vmatpush1.msra.mxu0 0.0
      %2925 = vmatprep.subr.mxu0 0.0
      %2926 = vmatpush1.msra.mxu0 0.0
      %2927 = vmatprep.subr.mxu0 0.0
      %2928 = vmatpush1.msra.mxu0 0.0
      %2929 = vmatprep.subr.mxu0 0.0
      %2930 = vmatpush1.msra.mxu0 0.0
      %2931 = vmatprep.subr.mxu0 0.0
      %2932 = vmatpush1.msra.mxu0 0.0
      %2933 = vmatprep.subr.mxu0 0.0
      %2934 = vmatpush1.msra.mxu0 0.0
      %2935 = vmatprep.subr.mxu0 0.0
      %2936 = vmatpush1.msra.mxu0 0.0
      %2937 = vmatprep.subr.mxu0 0.0
      %2938 = vmatpush1.msra.mxu0 0.0
      %2939 = vmatprep.subr.mxu0 0.0
      %2940 = vmatpush1.msra.mxu0 0.0
      %2941 = vmatprep.subr.mxu0 0.0
      %2942 = vmatpush1.msra.mxu0 0.0
      %2943 = vmatprep.subr.mxu0 0.0
      %2944 = vmatpush1.msra.mxu0 0.0
      %2945 = vmatprep.subr.mxu0 0.0
      %2946 = vmatpush1.msra.mxu0 0.0
      %2947 = vmatprep.subr.mxu0 0.0
      %2948 = vmatpush1.msra.mxu0 0.0
      %2949 = vmatprep.subr.mxu0 0.0
      %2950 = vmatpush1.msra.mxu0 0.0
      %2951 = vmatprep.subr.mxu0 0.0
      %2952 = vmatpush1.msra.mxu0 0.0
      %2953 = vmatprep.subr.mxu0 0.0
      %2954 = vmatpush1.msra.mxu0 0.0
      %2955 = vmatprep.subr.mxu0 0.0
      %2956 = vmatpush1.msra.mxu0 0.0
      %2957 = vmatprep.subr.mxu0 0.0
      %2958 = vmatpush1.msra.mxu0 0.0
      %2959 = vmatprep.subr.mxu0 0.0
      %2960 = vmatpush1.msra.mxu0 0.0
      %2961 = vmatprep.subr.mxu0 0.0
      %2962 = vmatpush1.msra.mxu0 0.0
      %2963 = vmatprep.subr.mxu0 0.0
      %2964 = vmatpush1.msra.mxu0 0.0
      %2965 = vmatprep.subr.mxu0 0.0
      %2966 = vmatpush1.msra.mxu0 0.0
      %2967 = vmatprep.subr.mxu0 0.0
      %2968 = vmatpush1.msra.mxu0 0.0
      %2969 = vmatprep.subr.mxu0 0.0
      %2970 = vmatpush1.msra.mxu0 0.0
      %2971 = vmatprep.subr.mxu0 0.0
      %2972 = vmatpush1.msra.mxu0 0.0
      %2973 = vmatprep.subr.mxu0 0.0
      %2974 = vmatpush1.msra.mxu0 0.0
      %2975 = vmatprep.mubr.f32.mxu0 0.0
      %2976 = vmatmul.mubr.f32.gmra.mrb[0].mxu0 %v2909
      %v2977 = vpop.f32.mrb[0].mxu0
      %v2978 = vadd.f32 0.0, %v2977
      %v2979 = vpop.f32.mrb[0].mxu0
      %2980 = vdwg.mxu0
      %vm2981 = vcmask 254976
      %2982 = vst.msk [vmem:[%s170] sm:$0x3] %vm2981, %v423
      %2983 = vst.msk [vmem:[%s170 + $0x2] sm:$0x3] %vm2981, %v496
      %2984 = vst.msk [vmem:[%s170 + $0x4] sm:$0x3] %vm2981, %v569
      %2985 = vst.msk [vmem:[%s170 + $0x6] sm:$0x3] %vm2981, %v642
      %2986 = vst.msk [vmem:[%s170 + $0x8] sm:$0x3] %vm2981, %v715
      %2987 = vst.msk [vmem:[%s170 + $0xa] sm:$0x3] %vm2981, %v788
      %2988 = vst.msk [vmem:[%s170 + $0xc] sm:$0x3] %vm2981, %v861
      %2989 = vst.msk [vmem:[%s170 + $0xe] sm:$0x3] %vm2981, %v934
      %2990 = vst.msk [vmem:[%s170 + $0x10] sm:$0x3] %vm2981, %v1007
      %2991 = vst.msk [vmem:[%s170 + $0x12] sm:$0x3] %vm2981, %v1080
      %2992 = vst.msk [vmem:[%s170 + $0x14] sm:$0x3] %vm2981, %v1153
      %2993 = vst.msk [vmem:[%s170 + $0x16] sm:$0x3] %vm2981, %v1226
      %2994 = vst.msk [vmem:[%s170 + $0x18] sm:$0x3] %vm2981, %v1299
      %2995 = vst.msk [vmem:[%s170 + $0x1a] sm:$0x3] %vm2981, %v1372
      %2996 = vst.msk [vmem:[%s170 + $0x1c] sm:$0x3] %vm2981, %v1445
      %2997 = vst.msk [vmem:[%s170 + $0x1e] sm:$0x3] %vm2981, %v1518
      %2998 = vst.msk [vmem:[%s170 + $0x20] sm:$0x3] %vm2981, %v1591
      %2999 = vst.msk [vmem:[%s170 + $0x22] sm:$0x3] %vm2981, %v1664
      %3000 = vst.msk [vmem:[%s170 + $0x24] sm:$0x3] %vm2981, %v1737
      %3001 = vst.msk [vmem:[%s170 + $0x26] sm:$0x3] %vm2981, %v1810
      %3002 = vst.msk [vmem:[%s170 + $0x28] sm:$0x3] %vm2981, %v1883
      %3003 = vst.msk [vmem:[%s170 + $0x2a] sm:$0x3] %vm2981, %v1956
      %3004 = vst.msk [vmem:[%s170 + $0x2c] sm:$0x3] %vm2981, %v2029
      %3005 = vst.msk [vmem:[%s170 + $0x2e] sm:$0x3] %vm2981, %v2102
      %3006 = vst.msk [vmem:[%s170 + $0x30] sm:$0x3] %vm2981, %v2175
      %3007 = vst.msk [vmem:[%s170 + $0x32] sm:$0x3] %vm2981, %v2248
      %3008 = vst.msk [vmem:[%s170 + $0x34] sm:$0x3] %vm2981, %v2321
      %3009 = vst.msk [vmem:[%s170 + $0x36] sm:$0x3] %vm2981, %v2394
      %3010 = vst.msk [vmem:[%s170 + $0x38] sm:$0x3] %vm2981, %v2467
      %3011 = vst.msk [vmem:[%s170 + $0x3a] sm:$0x3] %vm2981, %v2540
      %3012 = vst.msk [vmem:[%s170 + $0x3c] sm:$0x3] %vm2981, %v2613
      %3013 = vst.msk [vmem:[%s170 + $0x3e] sm:$0x3] %vm2981, %v2686
      %3014 = vst.msk [vmem:[%s170 + $0x40] sm:$0x3] %vm2981, %v2759
      %3015 = vst.msk [vmem:[%s170 + $0x42] sm:$0x3] %vm2981, %v2832
      %3016 = vst.msk [vmem:[%s170 + $0x44] sm:$0x3] %vm2981, %v2905
      %3017 = vst.msk [vmem:[%s170 + $0x46] sm:$0x3] %vm2981, %v2978
      %s3018 = smul.u32 36, %s13
      %p3019 = scmp.lt.s32.totalorder %s3018, 71
      %s3020 = scalar_select %p3019, %s3018, 71
      %s3021 = smul.addr %s3020, 2
      %s3022 = scalar_lea.vmem %s2, %s3021
      // Predicated region
      $region29: #{_lambda_.11} parent=27 // pred_check
        %p3023 = pneg %p83
      $region30: #{_lambda_.11} parent=27 // pred_check_branch
        %3025 = sbr.rel (%p3023) target = $region32
      $region31: #{_lambda_.11} parent=27 // pred_region
        %s3026 = smul.u32 36, %s13
      $region32: #{_lambda_.11} parent=27 // pred_fallthru
        _
    $region28: #{_lambda_.11} parent=5 // pred_fallthru
      _
    %p3027 = scmp.le.s32.totalorder 2, %s8
    // Predicated region
    $region33: #{_lambda_.11} parent=5 // pred_check
      %p3028 = pneg %p3027
    $region34: #{_lambda_.11} parent=5 // pred_check_branch
      %3030 = sbr.rel (%p3028) target = $region36
    $region35: #{_lambda_.11} parent=5 // pred_region
      %s3031 = ssub.s32 %s8, 2
      // Predicated region
      $region37: #{_lambda_.11} parent=35 // pred_check
        %p3032 = pneg %p89
      $region38: #{_lambda_.11} parent=35 // pred_check_branch
        %3034 = sbr.rel (%p3032) target = $region40
      $region39: #{_lambda_.11} parent=35 // pred_region
        %s3035 = smul.u32 36, %s14
        %p3036 = scmp.lt.s32.totalorder %s3035, 71
        %s3037 = scalar_select %p3036, %s3035, 71
        %s3038 = smul.addr %s3037, 2
        %s3039 = scalar_lea.vmem %s2, %s3038
      $region40: #{_lambda_.11} parent=35 // pred_fallthru
        _
    $region36: #{_lambda_.11} parent=5 // pred_fallthru
      _
  $region6: #{_lambda_.11} parent=0 // loop_footer
    %s12 = sadd.s32 1, %s8
  $region7: #{_lambda_.11} parent=0 // loop_footer_branch
    %7 = sbr.rel target = $region3
  $region8: #{_lambda_.11} parent=0 // loop_exit
    _

// kernel: _lambda_.12
$region0: #{_lambda_.12}
  #allocation0 [shape = 'u32[]', space=smem, size = 0x4, offset = 0x4, fixed_abs, tag = 'smem constant byte address 0x4 - core index']
  #allocation1 [shape = 'u32[144,128]{1,0:T(1,128)}', space=vmem, size = 0x12000, scoped, tag = 'internal scratch']
  %s0 = inlined_call_operand.vmem [shape: f32[2,16,324], index: 0, kind: input, shape index: {}]
  %s1 = inlined_call_operand.vmem [shape: f32[2,16,324], index: 1, kind: input, shape index: {}]
  %s2 = inlined_call_operand.vmem [shape: f32[16,16], index: 2, kind: input, shape index: {}]
  %s3 = inlined_call_operand.vmem [shape: f32[16,1], index: 3, kind: input, shape index: {}]
  %s4 = inlined_call_operand.vmem [shape: f32[2,16,324], index: 4, kind: output, shape index: {}]
  %s5 = sld [smem:[#allocation0]]
  $region49: #{_lambda_.12} parent=0
    _
  %s7 = ssub.s32 1, %s5
  %s8 = scalar_select 0, %s7, %s5
  loop: start=0, step=1, limit=4
  $region2: #{_lambda_.12} parent=0 // loop_pre_header
    _
  $region3: #{_lambda_.12} parent=0 // loop_header
    %s10 = sphi 0, %s14
    %p11 = scmp.ge.s32.totalorder %s10, 4
    %s20 = sphi 0, %s22
    %s23 = sphi 0, %s20
    %s24 = sphi 0, %s23
    %s40 = sphi 0, %s24
    %s46 = sphi 0, %s48
    %s49 = sphi 0, %s46
    %s50 = sphi 0, %s49
    %s66 = sphi 0, %s50
    %s70 = sphi 0, %s70
    %s72 = sphi 0, %s70
    %s73 = sphi 0, %s72
    %s87 = sphi 0, %s73
    %s91 = sphi 0, %s91
    %s93 = sphi 0, %s91
    %s94 = sphi 0, %s93
    %s108 = sphi 0, %s94
    %s114 = sphi 0, %s116
    %s117 = sphi 0, %s114
    %s118 = sphi 0, %s117
    %s134 = sphi 0, %s118
  $region4: #{_lambda_.12} parent=0 // loop_header_branch
    %13 = sbr.rel (%p11) target = $region8
  $region5: #{_lambda_.12} parent=0 // loop_body
    %s15 = ssub.s32 %s10, 1
    %s16 = ssub.s32 %s10, 2
    %s17 = sadd.s32 %s10, 1
    %s18 = ssub.s32 %s10, %s17
    %p19 = scmp.eq.s32.totalorder %s18, 0
    %s21 = sadd.s32 %s20, 1
    %s22 = scalar_select %p19, %s20, %s21
    %p25 = pneg %p19
    %p26 = scmp.eq.s32.totalorder %s10, 1
    %p27 = por %p25, %p26
    %p28 = scmp.ne.s32.totalorder %s20, %s23
    %p29 = scmp.eq.s32.totalorder %s10, 0
    %p30 = por %p28, %p29
    %p31 = scmp.ne.s32.totalorder %s20, %s23
    %p32 = scmp.eq.s32.totalorder %s15, 1
    %p33 = por %p31, %p32
    %p34 = scmp.ne.s32.totalorder %s23, %s24
    %p35 = scmp.eq.s32.totalorder %s15, 0
    %p36 = por %p34, %p35
    %p37 = scmp.ne.s32.totalorder %s23, %s24
    %p38 = scmp.eq.s32.totalorder %s16, 1
    %p39 = por %p37, %p38
    %p41 = scmp.ne.s32.totalorder %s24, %s40
    %p42 = scmp.eq.s32.totalorder %s16, 0
    %p43 = por %p41, %p42
    %s44 = ssub.s32 %s10, %s17
    %p45 = scmp.eq.s32.totalorder %s44, 0
    %s47 = sadd.s32 %s46, 1
    %s48 = scalar_select %p45, %s46, %s47
    %p51 = pneg %p45
    %p52 = scmp.eq.s32.totalorder %s10, 1
    %p53 = por %p51, %p52
    %p54 = scmp.ne.s32.totalorder %s46, %s49
    %p55 = scmp.eq.s32.totalorder %s10, 0
    %p56 = por %p54, %p55
    %p57 = scmp.ne.s32.totalorder %s46, %s49
    %p58 = scmp.eq.s32.totalorder %s15, 1
    %p59 = por %p57, %p58
    %p60 = scmp.ne.s32.totalorder %s49, %s50
    %p61 = scmp.eq.s32.totalorder %s15, 0
    %p62 = por %p60, %p61
    %p63 = scmp.ne.s32.totalorder %s49, %s50
    %p64 = scmp.eq.s32.totalorder %s16, 1
    %p65 = por %p63, %p64
    %p67 = scmp.ne.s32.totalorder %s50, %s66
    %p68 = scmp.eq.s32.totalorder %s16, 0
    %p69 = por %p67, %p68
    %s71 = sadd.s32 %s70, 1
    %p74 = scmp.eq.s32.totalorder %s10, 1
    %p75 = scmp.ne.s32.totalorder %s70, %s72
    %p76 = scmp.eq.s32.totalorder %s10, 0
    %p77 = por %p75, %p76
    %p78 = scmp.ne.s32.totalorder %s70, %s72
    %p79 = scmp.eq.s32.totalorder %s15, 1
    %p80 = por %p78, %p79
    %p81 = scmp.ne.s32.totalorder %s72, %s73
    %p82 = scmp.eq.s32.totalorder %s15, 0
    %p83 = por %p81, %p82
    %p84 = scmp.ne.s32.totalorder %s72, %s73
    %p85 = scmp.eq.s32.totalorder %s16, 1
    %p86 = por %p84, %p85
    %p88 = scmp.ne.s32.totalorder %s73, %s87
    %p89 = scmp.eq.s32.totalorder %s16, 0
    %p90 = por %p88, %p89
    %s92 = sadd.s32 %s91, 1
    %p95 = scmp.eq.s32.totalorder %s10, 1
    %p96 = scmp.ne.s32.totalorder %s91, %s93
    %p97 = scmp.eq.s32.totalorder %s10, 0
    %p98 = por %p96, %p97
    %p99 = scmp.ne.s32.totalorder %s91, %s93
    %p100 = scmp.eq.s32.totalorder %s15, 1
    %p101 = por %p99, %p100
    %p102 = scmp.ne.s32.totalorder %s93, %s94
    %p103 = scmp.eq.s32.totalorder %s15, 0
    %p104 = por %p102, %p103
    %p105 = scmp.ne.s32.totalorder %s93, %s94
    %p106 = scmp.eq.s32.totalorder %s16, 1
    %p107 = por %p105, %p106
    %p109 = scmp.ne.s32.totalorder %s94, %s108
    %p110 = scmp.eq.s32.totalorder %s16, 0
    %p111 = por %p109, %p110
    %s112 = ssub.s32 %s10, %s17
    %p113 = scmp.eq.s32.totalorder %s112, 0
    %s115 = sadd.s32 %s114, 1
    %s116 = scalar_select %p113, %s114, %s115
    %p119 = pneg %p113
    %p120 = scmp.eq.s32.totalorder %s10, 1
    %p121 = por %p119, %p120
    %p122 = scmp.ne.s32.totalorder %s114, %s117
    %p123 = scmp.eq.s32.totalorder %s10, 0
    %p124 = por %p122, %p123
    %p125 = scmp.ne.s32.totalorder %s114, %s117
    %p126 = scmp.eq.s32.totalorder %s15, 1
    %p127 = por %p125, %p126
    %p128 = scmp.ne.s32.totalorder %s117, %s118
    %p129 = scmp.eq.s32.totalorder %s15, 0
    %p130 = por %p128, %p129
    %p131 = scmp.ne.s32.totalorder %s117, %s118
    %p132 = scmp.eq.s32.totalorder %s16, 1
    %p133 = por %p131, %p132
    %p135 = scmp.ne.s32.totalorder %s118, %s134
    %p136 = scmp.eq.s32.totalorder %s16, 0
    %p137 = por %p135, %p136
    %p138 = scmp.le.s32.totalorder 1, %s10
    %p139 = scmp.lt.s32.totalorder %s10, 3
    %p140 = pnand %p138, %p139
    %p141 = pneg %p140
    // Predicated region
    $region9: #{_lambda_.12} parent=5 // pred_check
      _
    $region10: #{_lambda_.12} parent=5 // pred_check_branch
      %143 = sbr.rel (%p140) target = $region12
    $region11: #{_lambda_.12} parent=5 // pred_region
      %s144 = ssub.s32 %s10, 1
      // Predicated region
      $region13: #{_lambda_.12} parent=11 // pred_check
        %p145 = pneg %p83
      $region14: #{_lambda_.12} parent=11 // pred_check_branch
        %147 = sbr.rel (%p145) target = $region16
      $region15: #{_lambda_.12} parent=11 // pred_region
        _
      $region16: #{_lambda_.12} parent=11 // pred_fallthru
        _
      // Predicated region
      $region17: #{_lambda_.12} parent=11 // pred_check
        %p148 = pneg %p104
      $region18: #{_lambda_.12} parent=11 // pred_check_branch
        %150 = sbr.rel (%p148) target = $region20
      $region19: #{_lambda_.12} parent=11 // pred_region
        _
      $region20: #{_lambda_.12} parent=11 // pred_fallthru
        _
    $region12: #{_lambda_.12} parent=5 // pred_fallthru
      _
    %p151 = scmp.lt.s32.totalorder %s10, 2
    // Predicated region
    $region21: #{_lambda_.12} parent=5 // pred_check
      %p152 = pneg %p151
    $region22: #{_lambda_.12} parent=5 // pred_check_branch
      %154 = sbr.rel (%p152) target = $region24
    $region23: #{_lambda_.12} parent=5 // pred_region
      // Predicated region
      $region25: #{_lambda_.12} parent=23 // pred_check
        %p155 = pneg %p30
      $region26: #{_lambda_.12} parent=23 // pred_check_branch
        %157 = sbr.rel (%p155) target = $region28
      $region27: #{_lambda_.12} parent=23 // pred_region
        %p158 = scmp.lt.s32.totalorder %s10, 1
        %s159 = scalar_select %p158, %s10, 1
        %s160 = smul.addr %s159, 6
        %s161 = smul.addr %s160, 8
        %s162 = scalar_lea.vmem %s0, %s161
      $region28: #{_lambda_.12} parent=23 // pred_fallthru
        _
      // Predicated region
      $region29: #{_lambda_.12} parent=23 // pred_check
        %p163 = pneg %p56
      $region30: #{_lambda_.12} parent=23 // pred_check_branch
        %165 = sbr.rel (%p163) target = $region32
      $region31: #{_lambda_.12} parent=23 // pred_region
        %p166 = scmp.lt.s32.totalorder %s10, 1
        %s167 = scalar_select %p166, %s10, 1
        %s168 = smul.addr %s167, 6
        %s169 = smul.addr %s168, 8
        %s170 = scalar_lea.vmem %s1, %s169
      $region32: #{_lambda_.12} parent=23 // pred_fallthru
        _
    $region24: #{_lambda_.12} parent=5 // pred_fallthru
      _
    %p171 = scmp.le.s32.totalorder 1, %s10
    %p172 = scmp.lt.s32.totalorder %s10, 3
    %p173 = pnand %p171, %p172
    %p174 = pneg %p173
    // Predicated region
    $region33: #{_lambda_.12} parent=5 // pred_check
      _
    $region34: #{_lambda_.12} parent=5 // pred_check_branch
      %176 = sbr.rel (%p173) target = $region36
    $region35: #{_lambda_.12} parent=5 // pred_region
      %s177 = ssub.s32 %s10, 1
      %p178 = scmp.lt.s32.totalorder %s15, 1
      %s179 = scalar_select %p178, %s15, 1
      %s180 = smul.addr %s179, 6
      %s181 = smul.addr %s180, 8
      %s182 = scalar_lea.vmem %s0, %s181
      %p183 = pneg %p36
      %p184 = pneg %p33
      %p185 = scmp.lt.s32.totalorder %s15, 1
      %s186 = scalar_select %p185, %s15, 1
      %s187 = smul.addr %s186, 6
      %s188 = smul.addr %s187, 8
      %s189 = scalar_lea.vmem %s1, %s188
      %p190 = pneg %p62
      %p191 = pneg %p59
      %p192 = pneg %p83
      %p193 = pneg %p80
      %p194 = pneg %p104
      %p195 = pneg %p101
      %p196 = pneg %p130
      %p197 = pneg %p127
      %p198 = scmp.lt.s32.totalorder %s15, 1
      %s199 = scalar_select %p198, %s15, 1
      %s200 = smul.addr %s199, 6
      %s201 = smul.addr %s200, 8
      %s202 = scalar_lea.vmem %s4, %s201
      %p203 = scmp.lt.s32.totalorder %s15, 1
      %s204 = scalar_select %p203, %s15, 1
      %s205 = smul.addr %s204, 6
      %s206 = smul.addr %s205, 8
      %s207 = scalar_lea.vmem %s0, %s206
      %p208 = scmp.lt.s32.totalorder %s15, 1
      %s209 = scalar_select %p208, %s15, 1
      %s210 = smul.addr %s209, 6
      %s211 = smul.addr %s210, 8
      %s212 = scalar_lea.vmem %s1, %s211
      %p213 = scmp.lt.s32.totalorder %s15, 1
      %s214 = scalar_select %p213, %s15, 1
      %s215 = smul.addr %s214, 6
      %s216 = smul.addr %s215, 8
      %s217 = scalar_lea.vmem %s4, %s216
      %v218 = vld [vmem:[%s2] sm:$0xff]
      %v219 = vld [vmem:[%s2 + $0x8] sm:$0xff]
      %v220 = vld [vmem:[%s207] sm:$0xff]
      %v221 = vld [vmem:[%s207 + $0x8] sm:$0xff]
      %v222 = vld [vmem:[%s207 + $0x10] sm:$0xff]
      %v223 = vld [vmem:[%s207 + $0x18] sm:$0xff]
      %v224 = vld [vmem:[%s207 + $0x20] sm:$0xff]
      %v225 = vld [vmem:[%s207 + $0x28] sm:$0xff]
      %v226 = vld [vmem:[%s3] sm:$0xff]
      %v227 = vld [vmem:[%s3 + $0x8] sm:$0xff]
      %229 = vset.pattern.permute.xlu0 0
      %230 = vperm.xlu0 %229, %v226
      %v231 = vpop.permute.xlu0 %230
      %234 = vset.pattern.permute.xlu0 0
      %235 = vperm.xlu0 %234, %v227
      %v236 = vpop.permute.xlu0 %235
      %vm238 = vcmask 130048
      %v240 = vsel %vm238, %v218, 0
      %v243 = vsel %vm238, %v219, 0
      %245 = vmatprep.subr.mxu0 %v221
      %246 = vmatpush1.msra.mxu0 %v220
      %247 = vmatprep.subr.mxu0 %v224
      %248 = vmatpush1.msra.mxu0 %v223
      %249 = vmatprep.subr.mxu0 0.0
      %250 = vmatpush1.msra.mxu0 0.0
      %251 = vmatprep.subr.mxu0 0.0
      %252 = vmatpush1.msra.mxu0 0.0
      %253 = vmatprep.subr.mxu0 0.0
      %254 = vmatpush1.msra.mxu0 0.0
      %255 = vmatprep.subr.mxu0 0.0
      %256 = vmatpush1.msra.mxu0 0.0
      %257 = vmatprep.subr.mxu0 0.0
      %258 = vmatpush1.msra.mxu0 0.0
      %259 = vmatprep.subr.mxu0 0.0
      %260 = vmatpush1.msra.mxu0 0.0
      %261 = vmatprep.subr.mxu0 0.0
      %262 = vmatpush1.msra.mxu0 0.0
      %263 = vmatprep.subr.mxu0 0.0
      %264 = vmatpush1.msra.mxu0 0.0
      %265 = vmatprep.subr.mxu0 0.0
      %266 = vmatpush1.msra.mxu0 0.0
      %267 = vmatprep.subr.mxu0 0.0
      %268 = vmatpush1.msra.mxu0 0.0
      %269 = vmatprep.subr.mxu0 0.0
      %270 = vmatpush1.msra.mxu0 0.0
      %271 = vmatprep.subr.mxu0 0.0
      %272 = vmatpush1.msra.mxu0 0.0
      %273 = vmatprep.subr.mxu0 0.0
      %274 = vmatpush1.msra.mxu0 0.0
      %275 = vmatprep.subr.mxu0 0.0
      %276 = vmatpush1.msra.mxu0 0.0
      %277 = vmatprep.subr.mxu0 0.0
      %278 = vmatpush1.msra.mxu0 0.0
      %279 = vmatprep.subr.mxu0 0.0
      %280 = vmatpush1.msra.mxu0 0.0
      %281 = vmatprep.subr.mxu0 0.0
      %282 = vmatpush1.msra.mxu0 0.0
      %283 = vmatprep.subr.mxu0 0.0
      %284 = vmatpush1.msra.mxu0 0.0
      %285 = vmatprep.subr.mxu0 0.0
      %286 = vmatpush1.msra.mxu0 0.0
      %287 = vmatprep.subr.mxu0 0.0
      %288 = vmatpush1.msra.mxu0 0.0
      %289 = vmatprep.subr.mxu0 0.0
      %290 = vmatpush1.msra.mxu0 0.0
      %291 = vmatprep.subr.mxu0 0.0
      %292 = vmatpush1.msra.mxu0 0.0
      %293 = vmatprep.subr.mxu0 0.0
      %294 = vmatpush1.msra.mxu0 0.0
      %295 = vmatprep.subr.mxu0 0.0
      %296 = vmatpush1.msra.mxu0 0.0
      %297 = vmatprep.subr.mxu0 0.0
      %298 = vmatpush1.msra.mxu0 0.0
      %299 = vmatprep.subr.mxu0 0.0
      %300 = vmatpush1.msra.mxu0 0.0
      %301 = vmatprep.subr.mxu0 0.0
      %302 = vmatpush1.msra.mxu0 0.0
      %303 = vmatprep.subr.mxu0 0.0
      %304 = vmatpush1.msra.mxu0 0.0
      %305 = vmatprep.subr.mxu0 0.0
      %306 = vmatpush1.msra.mxu0 0.0
      %307 = vmatprep.subr.mxu0 0.0
      %308 = vmatpush1.msra.mxu0 0.0
      %309 = vmatprep.mubr.f32.mxu0 0.0
      %310 = vmatmul.mubr.f32.gmra.mrb[0].mxu0 %v240
      %v311 = vpop.f32.mrb[0].mxu0
      %v312 = vadd.f32 %v231, %v311
      %v313 = vpop.f32.mrb[0].mxu0
      %v314 = vadd.f32 %v231, %v313
      %315 = vmatprep.mubr.f32.mxu0 0.0
      %316 = vmatmul.mubr.f32.gmra.mrb[0].mxu0 %v243
      %v317 = vpop.f32.mrb[0].mxu0
      %v318 = vadd.f32 %v236, %v317
      %v319 = vpop.f32.mrb[0].mxu0
      %v320 = vadd.f32 %v236, %v319
      %321 = vdwg.mxu0
      %322 = vmatprep.subr.mxu0 0.0
      %323 = vmatpush1.msra.mxu0 %v222
      %324 = vmatprep.subr.mxu0 0.0
      %325 = vmatpush1.msra.mxu0 %v225
      %326 = vmatprep.subr.mxu0 0.0
      %327 = vmatpush1.msra.mxu0 0.0
      %328 = vmatprep.subr.mxu0 0.0
      %329 = vmatpush1.msra.mxu0 0.0
      %330 = vmatprep.subr.mxu0 0.0
      %331 = vmatpush1.msra.mxu0 0.0
      %332 = vmatprep.subr.mxu0 0.0
      %333 = vmatpush1.msra.mxu0 0.0
      %334 = vmatprep.subr.mxu0 0.0
      %335 = vmatpush1.msra.mxu0 0.0
      %336 = vmatprep.subr.mxu0 0.0
      %337 = vmatpush1.msra.mxu0 0.0
      %338 = vmatprep.subr.mxu0 0.0
      %339 = vmatpush1.msra.mxu0 0.0
      %340 = vmatprep.subr.mxu0 0.0
      %341 = vmatpush1.msra.mxu0 0.0
      %342 = vmatprep.subr.mxu0 0.0
      %343 = vmatpush1.msra.mxu0 0.0
      %344 = vmatprep.subr.mxu0 0.0
      %345 = vmatpush1.msra.mxu0 0.0
      %346 = vmatprep.subr.mxu0 0.0
      %347 = vmatpush1.msra.mxu0 0.0
      %348 = vmatprep.subr.mxu0 0.0
      %349 = vmatpush1.msra.mxu0 0.0
      %350 = vmatprep.subr.mxu0 0.0
      %351 = vmatpush1.msra.mxu0 0.0
      %352 = vmatprep.subr.mxu0 0.0
      %353 = vmatpush1.msra.mxu0 0.0
      %354 = vmatprep.subr.mxu0 0.0
      %355 = vmatpush1.msra.mxu0 0.0
      %356 = vmatprep.subr.mxu0 0.0
      %357 = vmatpush1.msra.mxu0 0.0
      %358 = vmatprep.subr.mxu0 0.0
      %359 = vmatpush1.msra.mxu0 0.0
      %360 = vmatprep.subr.mxu0 0.0
      %361 = vmatpush1.msra.mxu0 0.0
      %362 = vmatprep.subr.mxu0 0.0
      %363 = vmatpush1.msra.mxu0 0.0
      %364 = vmatprep.subr.mxu0 0.0
      %365 = vmatpush1.msra.mxu0 0.0
      %366 = vmatprep.subr.mxu0 0.0
      %367 = vmatpush1.msra.mxu0 0.0
      %368 = vmatprep.subr.mxu0 0.0
      %369 = vmatpush1.msra.mxu0 0.0
      %370 = vmatprep.subr.mxu0 0.0
      %371 = vmatpush1.msra.mxu0 0.0
      %372 = vmatprep.subr.mxu0 0.0
      %373 = vmatpush1.msra.mxu0 0.0
      %374 = vmatprep.subr.mxu0 0.0
      %375 = vmatpush1.msra.mxu0 0.0
      %376 = vmatprep.subr.mxu0 0.0
      %377 = vmatpush1.msra.mxu0 0.0
      %378 = vmatprep.subr.mxu0 0.0
      %379 = vmatpush1.msra.mxu0 0.0
      %380 = vmatprep.subr.mxu0 0.0
      %381 = vmatpush1.msra.mxu0 0.0
      %382 = vmatprep.subr.mxu0 0.0
      %383 = vmatpush1.msra.mxu0 0.0
      %384 = vmatprep.subr.mxu0 0.0
      %385 = vmatpush1.msra.mxu0 0.0
      %386 = vmatprep.mubr.f32.mxu0 0.0
      %387 = vmatmul.mubr.f32.gmra.mrb[0].mxu0 %v240
      %v388 = vpop.f32.mrb[0].mxu0
      %v389 = vadd.f32 %v231, %v388
      %v390 = vpop.f32.mrb[0].mxu0
      %391 = vmatprep.mubr.f32.mxu0 0.0
      %392 = vmatmul.mubr.f32.gmra.mrb[0].mxu0 %v243
      %v393 = vpop.f32.mrb[0].mxu0
      %v394 = vadd.f32 %v236, %v393
      %v395 = vpop.f32.mrb[0].mxu0
      %396 = vdwg.mxu0
      %v397 = vld [vmem:[%s212] sm:$0xff]
      %v398 = vld [vmem:[%s212 + $0x8] sm:$0xff]
      %v399 = vld [vmem:[%s212 + $0x10] sm:$0xff]
      %v400 = vld [vmem:[%s212 + $0x18] sm:$0xff]
      %v401 = vld [vmem:[%s212 + $0x20] sm:$0xff]
      %v402 = vld [vmem:[%s212 + $0x28] sm:$0xff]
      %v403 = vadd.f32 %v312, %v397
      %v404 = vadd.f32 %v314, %v398
      %v405 = vadd.f32 %v389, %v399
      %v406 = vadd.f32 %v318, %v400
      %v407 = vadd.f32 %v320, %v401
      %v408 = vadd.f32 %v394, %v402
      %v409 = vmul.f32 %v403, 0.5
      %v410 = vmul.f32 %v404, 0.5
      %v411 = vmul.f32 %v405, 0.5
      %v412 = vmul.f32 %v406, 0.5
      %v413 = vmul.f32 %v407, 0.5
      %v414 = vmul.f32 %v408, 0.5
      %v415 = vmul.f32 %v403, 0.70710677
      %v416 = vmul.f32 %v404, 0.70710677
      %v417 = vmul.f32 %v405, 0.70710677
      %v418 = vmul.f32 %v406, 0.70710677
      %v419 = vmul.f32 %v407, 0.70710677
      %v420 = vmul.f32 %v408, 0.70710677
      %vm421 = vcmp.ge.f32.partialorder %v415, 0.0
      %vm422 = vcmp.ge.f32.partialorder %v416, 0.0
      %vm423 = vcmp.ge.f32.partialorder %v417, 0.0
      %vm424 = vcmp.ge.f32.partialorder %v418, 0.0
      %vm425 = vcmp.ge.f32.partialorder %v419, 0.0
      %vm426 = vcmp.ge.f32.partialorder %v420, 0.0
      %v427 = vsel %vm421, 1.0, -1.0
      %v428 = vsel %vm422, 1.0, -1.0
      %v429 = vsel %vm423, 1.0, -1.0
      %v430 = vsel %vm424, 1.0, -1.0
      %v431 = vsel %vm425, 1.0, -1.0
      %v432 = vsel %vm426, 1.0, -1.0
      %v433 = vand.u32 2147483647, %v415
      %v434 = vand.u32 2147483647, %v416
      %v435 = vand.u32 2147483647, %v417
      %v436 = vand.u32 2147483647, %v418
      %v437 = vand.u32 2147483647, %v419
      %v438 = vand.u32 2147483647, %v420
      %v439 = vmul.f32 %v433, 0.3275911
      %v440 = vmul.f32 %v434, 0.3275911
      %v441 = vmul.f32 %v435, 0.3275911
      %v442 = vmul.f32 %v436, 0.3275911
      %v443 = vmul.f32 %v437, 0.3275911
      %v444 = vmul.f32 %v438, 0.3275911
      %v445 = vadd.f32 %v439, 1.0
      %v446 = vadd.f32 %v440, 1.0
      %v447 = vadd.f32 %v441, 1.0
      %v448 = vadd.f32 %v442, 1.0
      %v449 = vadd.f32 %v443, 1.0
      %v450 = vadd.f32 %v444, 1.0
      %v451 = vrcp.pop %v445
      %v452 = vmul.f32 1.0, %v451
      %v453 = vrcp.pop %v446
      %v454 = vmul.f32 1.0, %v453
      %v455 = vrcp.pop %v447
      %v456 = vmul.f32 1.0, %v455
      %v457 = vrcp.pop %v448
      %v458 = vmul.f32 1.0, %v457
      %v459 = vrcp.pop %v449
      %v460 = vmul.f32 1.0, %v459
      %v461 = vrcp.pop %v450
      %v462 = vmul.f32 1.0, %v461
      %v463 = vmul.f32 %v452, 1.0614054
      %v464 = vmul.f32 %v454, 1.0614054
      %v465 = vmul.f32 %v456, 1.0614054
      %v466 = vmul.f32 %v458, 1.0614054
      %v467 = vmul.f32 %v460, 1.0614054
      %v468 = vmul.f32 %v462, 1.0614054
      %v469 = vadd.f32 %v463, -1.4531521
      %v470 = vadd.f32 %v464, -1.4531521
      %v471 = vadd.f32 %v465, -1.4531521
      %v472 = vadd.f32 %v466, -1.4531521
      %v473 = vadd.f32 %v467, -1.4531521
      %v474 = vadd.f32 %v468, -1.4531521
      %v475 = vmul.f32 %v469, %v452
      %v476 = vmul.f32 %v470, %v454
      %v477 = vmul.f32 %v471, %v456
      %v478 = vmul.f32 %v472, %v458
      %v479 = vmul.f32 %v473, %v460
      %v480 = vmul.f32 %v474, %v462
      %v481 = vadd.f32 %v475, 1.4214138
      %v482 = vadd.f32 %v476, 1.4214138
      %v483 = vadd.f32 %v477, 1.4214138
      %v484 = vadd.f32 %v478, 1.4214138
      %v485 = vadd.f32 %v479, 1.4214138
      %v486 = vadd.f32 %v480, 1.4214138
      %v487 = vmul.f32 %v481, %v452
      %v488 = vmul.f32 %v482, %v454
      %v489 = vmul.f32 %v483, %v456
      %v490 = vmul.f32 %v484, %v458
      %v491 = vmul.f32 %v485, %v460
      %v492 = vmul.f32 %v486, %v462
      %v493 = vadd.f32 %v487, -0.28449672
      %v494 = vadd.f32 %v488, -0.28449672
      %v495 = vadd.f32 %v489, -0.28449672
      %v496 = vadd.f32 %v490, -0.28449672
      %v497 = vadd.f32 %v491, -0.28449672
      %v498 = vadd.f32 %v492, -0.28449672
      %v499 = vmul.f32 %v493, %v452
      %v500 = vmul.f32 %v494, %v454
      %v501 = vmul.f32 %v495, %v456
      %v502 = vmul.f32 %v496, %v458
      %v503 = vmul.f32 %v497, %v460
      %v504 = vmul.f32 %v498, %v462
      %v505 = vadd.f32 %v499, 0.2548296
      %v506 = vadd.f32 %v500, 0.2548296
      %v507 = vadd.f32 %v501, 0.2548296
      %v508 = vadd.f32 %v502, 0.2548296
      %v509 = vadd.f32 %v503, 0.2548296
      %v510 = vadd.f32 %v504, 0.2548296
      %v511 = vmul.f32 %v505, %v452
      %v512 = vmul.f32 %v506, %v454
      %v513 = vmul.f32 %v507, %v456
      %v514 = vmul.f32 %v508, %v458
      %v515 = vmul.f32 %v509, %v460
      %v516 = vmul.f32 %v510, %v462
      %v517 = vsub.f32 0.0, %v433
      %v518 = vsub.f32 0.0, %v434
      %v519 = vsub.f32 0.0, %v435
      %v520 = vsub.f32 0.0, %v436
      %v521 = vsub.f32 0.0, %v437
      %v522 = vsub.f32 0.0, %v438
      %v523 = vmul.f32 %v517, %v433
      %v524 = vmul.f32 %v518, %v434
      %v525 = vmul.f32 %v519, %v435
      %v526 = vmul.f32 %v520, %v436
      %v527 = vmul.f32 %v521, %v437
      %v528 = vmul.f32 %v522, %v438
      %v529 = vmul.f32 %v523, 1.442695
      %v530 = vpow.pop %v529
      %v531 = vmul.f32 %v524, 1.442695
      %v532 = vpow.pop %v531
      %v533 = vmul.f32 %v525, 1.442695
      %v534 = vpow.pop %v533
      %v535 = vmul.f32 %v526, 1.442695
      %v536 = vpow.pop %v535
      %v537 = vmul.f32 %v527, 1.442695
      %v538 = vpow.pop %v537
      %v539 = vmul.f32 %v528, 1.442695
      %v540 = vpow.pop %v539
      %v541 = vmul.f32 %v511, %v530
      %v542 = vmul.f32 %v512, %v532
      %v543 = vmul.f32 %v513, %v534
      %v544 = vmul.f32 %v514, %v536
      %v545 = vmul.f32 %v515, %v538
      %v546 = vmul.f32 %v516, %v540
      %v547 = vsub.f32 1.0, %v541
      %v548 = vsub.f32 1.0, %v542
      %v549 = vsub.f32 1.0, %v543
      %v550 = vsub.f32 1.0, %v544
      %v551 = vsub.f32 1.0, %v545
      %v552 = vsub.f32 1.0, %v546
      %v553 = vmul.f32 %v427, %v547
      %v554 = vmul.f32 %v428, %v548
      %v555 = vmul.f32 %v429, %v549
      %v556 = vmul.f32 %v430, %v550
      %v557 = vmul.f32 %v431, %v551
      %v558 = vmul.f32 %v432, %v552
      %v559 = vadd.f32 %v553, 1.0
      %v560 = vadd.f32 %v554, 1.0
      %v561 = vadd.f32 %v555, 1.0
      %v562 = vadd.f32 %v556, 1.0
      %v563 = vadd.f32 %v557, 1.0
      %v564 = vadd.f32 %v558, 1.0
      %v565 = vmul.f32 %v409, %v559
      %v566 = vmul.f32 %v410, %v560
      %v567 = vmul.f32 %v411, %v561
      %v568 = vmul.f32 %v412, %v562
      %v569 = vmul.f32 %v413, %v563
      %v570 = vmul.f32 %v414, %v564
      %571 = vst [vmem:[%s217] sm:$0xff] %v565
      %572 = vst [vmem:[%s217 + $0x8] sm:$0xff] %v566
      %vm573 = vcmask 556032
      %574 = vst.msk [vmem:[%s217 + $0x10] sm:$0xff] %vm573, %v567
      %575 = vst [vmem:[%s217 + $0x18] sm:$0xff] %v568
      %576 = vst [vmem:[%s217 + $0x20] sm:$0xff] %v569
      %577 = vst.msk [vmem:[%s217 + $0x28] sm:$0xff] %vm573, %v570
      %p578 = scmp.lt.s32.totalorder %s15, 1
      %s579 = scalar_select %p578, %s15, 1
      %s580 = smul.addr %s579, 6
      %s581 = smul.addr %s580, 8
      %s582 = scalar_lea.vmem %s4, %s581
      // Predicated region
      $region37: #{_lambda_.12} parent=35 // pred_check
        %p583 = pneg %p127
      $region38: #{_lambda_.12} parent=35 // pred_check_branch
        %585 = sbr.rel (%p583) target = $region40
      $region39: #{_lambda_.12} parent=35 // pred_region
        _
      $region40: #{_lambda_.12} parent=35 // pred_fallthru
        _
    $region36: #{_lambda_.12} parent=5 // pred_fallthru
      _
    %p586 = scmp.le.s32.totalorder 2, %s10
    // Predicated region
    $region41: #{_lambda_.12} parent=5 // pred_check
      %p587 = pneg %p586
    $region42: #{_lambda_.12} parent=5 // pred_check_branch
      %589 = sbr.rel (%p587) target = $region44
    $region43: #{_lambda_.12} parent=5 // pred_region
      %s590 = ssub.s32 %s10, 2
      // Predicated region
      $region45: #{_lambda_.12} parent=43 // pred_check
        %p591 = pneg %p133
      $region46: #{_lambda_.12} parent=43 // pred_check_branch
        %593 = sbr.rel (%p591) target = $region48
      $region47: #{_lambda_.12} parent=43 // pred_region
        %p594 = scmp.lt.s32.totalorder %s16, 1
        %s595 = scalar_select %p594, %s16, 1
        %s596 = smul.addr %s595, 6
        %s597 = smul.addr %s596, 8
        %s598 = scalar_lea.vmem %s4, %s597
      $region48: #{_lambda_.12} parent=43 // pred_fallthru
        _
    $region44: #{_lambda_.12} parent=5 // pred_fallthru
      _
  $region6: #{_lambda_.12} parent=0 // loop_footer
    %s14 = sadd.s32 1, %s10
  $region7: #{_lambda_.12} parent=0 // loop_footer_branch
    %9 = sbr.rel target = $region3
  $region8: #{_lambda_.12} parent=0 // loop_exit
    _

// kernel: _lambda_.18
$region0: #{_lambda_.18}
  #allocation0 [shape = 'u32[]', space=smem, size = 0x4, offset = 0x4, fixed_abs, tag = 'smem constant byte address 0x4 - core index']
  #allocation1 [shape = 'u32[144,128]{1,0:T(1,128)}', space=vmem, size = 0x12000, scoped, tag = 'internal scratch']
  %s0 = inlined_call_operand.vmem [shape: f32[2,16,324], index: 0, kind: input, shape index: {}]
  %s1 = inlined_call_operand.vmem [shape: f32[2,16,324], index: 1, kind: input, shape index: {}]
  %s2 = inlined_call_operand.vmem [shape: f32[16,16], index: 2, kind: input, shape index: {}]
  %s3 = inlined_call_operand.vmem [shape: f32[16,1], index: 3, kind: input, shape index: {}]
  %s4 = inlined_call_operand.vmem [shape: f32[2,16,324], index: 4, kind: output, shape index: {}]
  %s5 = sld [smem:[#allocation0]]
  $region49: #{_lambda_.18} parent=0
    _
  %s7 = ssub.s32 1, %s5
  %s8 = scalar_select 0, %s7, %s5
  loop: start=0, step=1, limit=4
  $region2: #{_lambda_.18} parent=0 // loop_pre_header
    _
  $region3: #{_lambda_.18} parent=0 // loop_header
    %s10 = sphi 0, %s14
    %p11 = scmp.ge.s32.totalorder %s10, 4
    %s20 = sphi 0, %s22
    %s23 = sphi 0, %s20
    %s24 = sphi 0, %s23
    %s40 = sphi 0, %s24
    %s46 = sphi 0, %s48
    %s49 = sphi 0, %s46
    %s50 = sphi 0, %s49
    %s66 = sphi 0, %s50
    %s70 = sphi 0, %s70
    %s72 = sphi 0, %s70
    %s73 = sphi 0, %s72
    %s87 = sphi 0, %s73
    %s91 = sphi 0, %s91
    %s93 = sphi 0, %s91
    %s94 = sphi 0, %s93
    %s108 = sphi 0, %s94
    %s114 = sphi 0, %s116
    %s117 = sphi 0, %s114
    %s118 = sphi 0, %s117
    %s134 = sphi 0, %s118
  $region4: #{_lambda_.18} parent=0 // loop_header_branch
    %13 = sbr.rel (%p11) target = $region8
  $region5: #{_lambda_.18} parent=0 // loop_body
    %s15 = ssub.s32 %s10, 1
    %s16 = ssub.s32 %s10, 2
    %s17 = sadd.s32 %s10, 1
    %s18 = ssub.s32 %s10, %s17
    %p19 = scmp.eq.s32.totalorder %s18, 0
    %s21 = sadd.s32 %s20, 1
    %s22 = scalar_select %p19, %s20, %s21
    %p25 = pneg %p19
    %p26 = scmp.eq.s32.totalorder %s10, 1
    %p27 = por %p25, %p26
    %p28 = scmp.ne.s32.totalorder %s20, %s23
    %p29 = scmp.eq.s32.totalorder %s10, 0
    %p30 = por %p28, %p29
    %p31 = scmp.ne.s32.totalorder %s20, %s23
    %p32 = scmp.eq.s32.totalorder %s15, 1
    %p33 = por %p31, %p32
    %p34 = scmp.ne.s32.totalorder %s23, %s24
    %p35 = scmp.eq.s32.totalorder %s15, 0
    %p36 = por %p34, %p35
    %p37 = scmp.ne.s32.totalorder %s23, %s24
    %p38 = scmp.eq.s32.totalorder %s16, 1
    %p39 = por %p37, %p38
    %p41 = scmp.ne.s32.totalorder %s24, %s40
    %p42 = scmp.eq.s32.totalorder %s16, 0
    %p43 = por %p41, %p42
    %s44 = ssub.s32 %s10, %s17
    %p45 = scmp.eq.s32.totalorder %s44, 0
    %s47 = sadd.s32 %s46, 1
    %s48 = scalar_select %p45, %s46, %s47
    %p51 = pneg %p45
    %p52 = scmp.eq.s32.totalorder %s10, 1
    %p53 = por %p51, %p52
    %p54 = scmp.ne.s32.totalorder %s46, %s49
    %p55 = scmp.eq.s32.totalorder %s10, 0
    %p56 = por %p54, %p55
    %p57 = scmp.ne.s32.totalorder %s46, %s49
    %p58 = scmp.eq.s32.totalorder %s15, 1
    %p59 = por %p57, %p58
    %p60 = scmp.ne.s32.totalorder %s49, %s50
    %p61 = scmp.eq.s32.totalorder %s15, 0
    %p62 = por %p60, %p61
    %p63 = scmp.ne.s32.totalorder %s49, %s50
    %p64 = scmp.eq.s32.totalorder %s16, 1
    %p65 = por %p63, %p64
    %p67 = scmp.ne.s32.totalorder %s50, %s66
    %p68 = scmp.eq.s32.totalorder %s16, 0
    %p69 = por %p67, %p68
    %s71 = sadd.s32 %s70, 1
    %p74 = scmp.eq.s32.totalorder %s10, 1
    %p75 = scmp.ne.s32.totalorder %s70, %s72
    %p76 = scmp.eq.s32.totalorder %s10, 0
    %p77 = por %p75, %p76
    %p78 = scmp.ne.s32.totalorder %s70, %s72
    %p79 = scmp.eq.s32.totalorder %s15, 1
    %p80 = por %p78, %p79
    %p81 = scmp.ne.s32.totalorder %s72, %s73
    %p82 = scmp.eq.s32.totalorder %s15, 0
    %p83 = por %p81, %p82
    %p84 = scmp.ne.s32.totalorder %s72, %s73
    %p85 = scmp.eq.s32.totalorder %s16, 1
    %p86 = por %p84, %p85
    %p88 = scmp.ne.s32.totalorder %s73, %s87
    %p89 = scmp.eq.s32.totalorder %s16, 0
    %p90 = por %p88, %p89
    %s92 = sadd.s32 %s91, 1
    %p95 = scmp.eq.s32.totalorder %s10, 1
    %p96 = scmp.ne.s32.totalorder %s91, %s93
    %p97 = scmp.eq.s32.totalorder %s10, 0
    %p98 = por %p96, %p97
    %p99 = scmp.ne.s32.totalorder %s91, %s93
    %p100 = scmp.eq.s32.totalorder %s15, 1
    %p101 = por %p99, %p100
    %p102 = scmp.ne.s32.totalorder %s93, %s94
    %p103 = scmp.eq.s32.totalorder %s15, 0
    %p104 = por %p102, %p103
    %p105 = scmp.ne.s32.totalorder %s93, %s94
    %p106 = scmp.eq.s32.totalorder %s16, 1
    %p107 = por %p105, %p106
    %p109 = scmp.ne.s32.totalorder %s94, %s108
    %p110 = scmp.eq.s32.totalorder %s16, 0
    %p111 = por %p109, %p110
    %s112 = ssub.s32 %s10, %s17
    %p113 = scmp.eq.s32.totalorder %s112, 0
    %s115 = sadd.s32 %s114, 1
    %s116 = scalar_select %p113, %s114, %s115
    %p119 = pneg %p113
    %p120 = scmp.eq.s32.totalorder %s10, 1
    %p121 = por %p119, %p120
    %p122 = scmp.ne.s32.totalorder %s114, %s117
    %p123 = scmp.eq.s32.totalorder %s10, 0
    %p124 = por %p122, %p123
    %p125 = scmp.ne.s32.totalorder %s114, %s117
    %p126 = scmp.eq.s32.totalorder %s15, 1
    %p127 = por %p125, %p126
    %p128 = scmp.ne.s32.totalorder %s117, %s118
    %p129 = scmp.eq.s32.totalorder %s15, 0
    %p130 = por %p128, %p129
    %p131 = scmp.ne.s32.totalorder %s117, %s118
    %p132 = scmp.eq.s32.totalorder %s16, 1
    %p133 = por %p131, %p132
    %p135 = scmp.ne.s32.totalorder %s118, %s134
    %p136 = scmp.eq.s32.totalorder %s16, 0
    %p137 = por %p135, %p136
    %p138 = scmp.le.s32.totalorder 1, %s10
    %p139 = scmp.lt.s32.totalorder %s10, 3
    %p140 = pnand %p138, %p139
    %p141 = pneg %p140
    // Predicated region
    $region9: #{_lambda_.18} parent=5 // pred_check
      _
    $region10: #{_lambda_.18} parent=5 // pred_check_branch
      %143 = sbr.rel (%p140) target = $region12
    $region11: #{_lambda_.18} parent=5 // pred_region
      %s144 = ssub.s32 %s10, 1
      // Predicated region
      $region13: #{_lambda_.18} parent=11 // pred_check
        %p145 = pneg %p83
      $region14: #{_lambda_.18} parent=11 // pred_check_branch
        %147 = sbr.rel (%p145) target = $region16
      $region15: #{_lambda_.18} parent=11 // pred_region
        _
      $region16: #{_lambda_.18} parent=11 // pred_fallthru
        _
      // Predicated region
      $region17: #{_lambda_.18} parent=11 // pred_check
        %p148 = pneg %p104
      $region18: #{_lambda_.18} parent=11 // pred_check_branch
        %150 = sbr.rel (%p148) target = $region20
      $region19: #{_lambda_.18} parent=11 // pred_region
        _
      $region20: #{_lambda_.18} parent=11 // pred_fallthru
        _
    $region12: #{_lambda_.18} parent=5 // pred_fallthru
      _
    %p151 = scmp.lt.s32.totalorder %s10, 2
    // Predicated region
    $region21: #{_lambda_.18} parent=5 // pred_check
      %p152 = pneg %p151
    $region22: #{_lambda_.18} parent=5 // pred_check_branch
      %154 = sbr.rel (%p152) target = $region24
    $region23: #{_lambda_.18} parent=5 // pred_region
      // Predicated region
      $region25: #{_lambda_.18} parent=23 // pred_check
        %p155 = pneg %p30
      $region26: #{_lambda_.18} parent=23 // pred_check_branch
        %157 = sbr.rel (%p155) target = $region28
      $region27: #{_lambda_.18} parent=23 // pred_region
        %p158 = scmp.lt.s32.totalorder %s10, 1
        %s159 = scalar_select %p158, %s10, 1
        %s160 = smul.addr %s159, 6
        %s161 = smul.addr %s160, 8
        %s162 = scalar_lea.vmem %s0, %s161
      $region28: #{_lambda_.18} parent=23 // pred_fallthru
        _
      // Predicated region
      $region29: #{_lambda_.18} parent=23 // pred_check
        %p163 = pneg %p56
      $region30: #{_lambda_.18} parent=23 // pred_check_branch
        %165 = sbr.rel (%p163) target = $region32
      $region31: #{_lambda_.18} parent=23 // pred_region
        %p166 = scmp.lt.s32.totalorder %s10, 1
        %s167 = scalar_select %p166, %s10, 1
        %s168 = smul.addr %s167, 6
        %s169 = smul.addr %s168, 8
        %s170 = scalar_lea.vmem %s1, %s169
      $region32: #{_lambda_.18} parent=23 // pred_fallthru
        _
    $region24: #{_lambda_.18} parent=5 // pred_fallthru
      _
    %p171 = scmp.le.s32.totalorder 1, %s10
    %p172 = scmp.lt.s32.totalorder %s10, 3
    %p173 = pnand %p171, %p172
    %p174 = pneg %p173
    // Predicated region
    $region33: #{_lambda_.18} parent=5 // pred_check
      _
    $region34: #{_lambda_.18} parent=5 // pred_check_branch
      %176 = sbr.rel (%p173) target = $region36
    $region35: #{_lambda_.18} parent=5 // pred_region
      %s177 = ssub.s32 %s10, 1
      %p178 = scmp.lt.s32.totalorder %s15, 1
      %s179 = scalar_select %p178, %s15, 1
      %s180 = smul.addr %s179, 6
      %s181 = smul.addr %s180, 8
      %s182 = scalar_lea.vmem %s0, %s181
      %p183 = pneg %p36
      %p184 = pneg %p33
      %p185 = scmp.lt.s32.totalorder %s15, 1
      %s186 = scalar_select %p185, %s15, 1
      %s187 = smul.addr %s186, 6
      %s188 = smul.addr %s187, 8
      %s189 = scalar_lea.vmem %s1, %s188
      %p190 = pneg %p62
      %p191 = pneg %p59
      %p192 = pneg %p83
      %p193 = pneg %p80
      %p194 = pneg %p104
      %p195 = pneg %p101
      %p196 = pneg %p130
      %p197 = pneg %p127
      %p198 = scmp.lt.s32.totalorder %s15, 1
      %s199 = scalar_select %p198, %s15, 1
      %s200 = smul.addr %s199, 6
      %s201 = smul.addr %s200, 8
      %s202 = scalar_lea.vmem %s4, %s201
      %p203 = scmp.lt.s32.totalorder %s15, 1
      %s204 = scalar_select %p203, %s15, 1
      %s205 = smul.addr %s204, 6
      %s206 = smul.addr %s205, 8
      %s207 = scalar_lea.vmem %s0, %s206
      %p208 = scmp.lt.s32.totalorder %s15, 1
      %s209 = scalar_select %p208, %s15, 1
      %s210 = smul.addr %s209, 6
      %s211 = smul.addr %s210, 8
      %s212 = scalar_lea.vmem %s1, %s211
      %p213 = scmp.lt.s32.totalorder %s15, 1
      %s214 = scalar_select %p213, %s15, 1
      %s215 = smul.addr %s214, 6
      %s216 = smul.addr %s215, 8
      %s217 = scalar_lea.vmem %s4, %s216
      %v218 = vld [vmem:[%s2] sm:$0xff]
      %v219 = vld [vmem:[%s2 + $0x8] sm:$0xff]
      %v220 = vld [vmem:[%s207] sm:$0xff]
      %v221 = vld [vmem:[%s207 + $0x8] sm:$0xff]
      %v222 = vld [vmem:[%s207 + $0x10] sm:$0xff]
      %v223 = vld [vmem:[%s207 + $0x18] sm:$0xff]
      %v224 = vld [vmem:[%s207 + $0x20] sm:$0xff]
      %v225 = vld [vmem:[%s207 + $0x28] sm:$0xff]
      %v226 = vld [vmem:[%s3] sm:$0xff]
      %v227 = vld [vmem:[%s3 + $0x8] sm:$0xff]
      %229 = vset.pattern.permute.xlu0 0
      %230 = vperm.xlu0 %229, %v226
      %v231 = vpop.permute.xlu0 %230
      %234 = vset.pattern.permute.xlu0 0
      %235 = vperm.xlu0 %234, %v227
      %v236 = vpop.permute.xlu0 %235
      %vm238 = vcmask 130048
      %v240 = vsel %vm238, %v218, 0
      %v243 = vsel %vm238, %v219, 0
      %245 = vmatprep.subr.mxu0 %v221
      %246 = vmatpush1.msra.mxu0 %v220
      %247 = vmatprep.subr.mxu0 %v224
      %248 = vmatpush1.msra.mxu0 %v223
      %249 = vmatprep.subr.mxu0 0.0
      %250 = vmatpush1.msra.mxu0 0.0
      %251 = vmatprep.subr.mxu0 0.0
      %252 = vmatpush1.msra.mxu0 0.0
      %253 = vmatprep.subr.mxu0 0.0
      %254 = vmatpush1.msra.mxu0 0.0
      %255 = vmatprep.subr.mxu0 0.0
      %256 = vmatpush1.msra.mxu0 0.0
      %257 = vmatprep.subr.mxu0 0.0
      %258 = vmatpush1.msra.mxu0 0.0
      %259 = vmatprep.subr.mxu0 0.0
      %260 = vmatpush1.msra.mxu0 0.0
      %261 = vmatprep.subr.mxu0 0.0
      %262 = vmatpush1.msra.mxu0 0.0
      %263 = vmatprep.subr.mxu0 0.0
      %264 = vmatpush1.msra.mxu0 0.0
      %265 = vmatprep.subr.mxu0 0.0
      %266 = vmatpush1.msra.mxu0 0.0
      %267 = vmatprep.subr.mxu0 0.0
      %268 = vmatpush1.msra.mxu0 0.0
      %269 = vmatprep.subr.mxu0 0.0
      %270 = vmatpush1.msra.mxu0 0.0
      %271 = vmatprep.subr.mxu0 0.0
      %272 = vmatpush1.msra.mxu0 0.0
      %273 = vmatprep.subr.mxu0 0.0
      %274 = vmatpush1.msra.mxu0 0.0
      %275 = vmatprep.subr.mxu0 0.0
      %276 = vmatpush1.msra.mxu0 0.0
      %277 = vmatprep.subr.mxu0 0.0
      %278 = vmatpush1.msra.mxu0 0.0
      %279 = vmatprep.subr.mxu0 0.0
      %280 = vmatpush1.msra.mxu0 0.0
      %281 = vmatprep.subr.mxu0 0.0
      %282 = vmatpush1.msra.mxu0 0.0
      %283 = vmatprep.subr.mxu0 0.0
      %284 = vmatpush1.msra.mxu0 0.0
      %285 = vmatprep.subr.mxu0 0.0
      %286 = vmatpush1.msra.mxu0 0.0
      %287 = vmatprep.subr.mxu0 0.0
      %288 = vmatpush1.msra.mxu0 0.0
      %289 = vmatprep.subr.mxu0 0.0
      %290 = vmatpush1.msra.mxu0 0.0
      %291 = vmatprep.subr.mxu0 0.0
      %292 = vmatpush1.msra.mxu0 0.0
      %293 = vmatprep.subr.mxu0 0.0
      %294 = vmatpush1.msra.mxu0 0.0
      %295 = vmatprep.subr.mxu0 0.0
      %296 = vmatpush1.msra.mxu0 0.0
      %297 = vmatprep.subr.mxu0 0.0
      %298 = vmatpush1.msra.mxu0 0.0
      %299 = vmatprep.subr.mxu0 0.0
      %300 = vmatpush1.msra.mxu0 0.0
      %301 = vmatprep.subr.mxu0 0.0
      %302 = vmatpush1.msra.mxu0 0.0
      %303 = vmatprep.subr.mxu0 0.0
      %304 = vmatpush1.msra.mxu0 0.0
      %305 = vmatprep.subr.mxu0 0.0
      %306 = vmatpush1.msra.mxu0 0.0
      %307 = vmatprep.subr.mxu0 0.0
      %308 = vmatpush1.msra.mxu0 0.0
      %309 = vmatprep.mubr.f32.mxu0 0.0
      %310 = vmatmul.mubr.f32.gmra.mrb[0].mxu0 %v240
      %v311 = vpop.f32.mrb[0].mxu0
      %v312 = vadd.f32 %v231, %v311
      %v313 = vpop.f32.mrb[0].mxu0
      %v314 = vadd.f32 %v231, %v313
      %315 = vmatprep.mubr.f32.mxu0 0.0
      %316 = vmatmul.mubr.f32.gmra.mrb[0].mxu0 %v243
      %v317 = vpop.f32.mrb[0].mxu0
      %v318 = vadd.f32 %v236, %v317
      %v319 = vpop.f32.mrb[0].mxu0
      %v320 = vadd.f32 %v236, %v319
      %321 = vdwg.mxu0
      %322 = vmatprep.subr.mxu0 0.0
      %323 = vmatpush1.msra.mxu0 %v222
      %324 = vmatprep.subr.mxu0 0.0
      %325 = vmatpush1.msra.mxu0 %v225
      %326 = vmatprep.subr.mxu0 0.0
      %327 = vmatpush1.msra.mxu0 0.0
      %328 = vmatprep.subr.mxu0 0.0
      %329 = vmatpush1.msra.mxu0 0.0
      %330 = vmatprep.subr.mxu0 0.0
      %331 = vmatpush1.msra.mxu0 0.0
      %332 = vmatprep.subr.mxu0 0.0
      %333 = vmatpush1.msra.mxu0 0.0
      %334 = vmatprep.subr.mxu0 0.0
      %335 = vmatpush1.msra.mxu0 0.0
      %336 = vmatprep.subr.mxu0 0.0
      %337 = vmatpush1.msra.mxu0 0.0
      %338 = vmatprep.subr.mxu0 0.0
      %339 = vmatpush1.msra.mxu0 0.0
      %340 = vmatprep.subr.mxu0 0.0
      %341 = vmatpush1.msra.mxu0 0.0
      %342 = vmatprep.subr.mxu0 0.0
      %343 = vmatpush1.msra.mxu0 0.0
      %344 = vmatprep.subr.mxu0 0.0
      %345 = vmatpush1.msra.mxu0 0.0
      %346 = vmatprep.subr.mxu0 0.0
      %347 = vmatpush1.msra.mxu0 0.0
      %348 = vmatprep.subr.mxu0 0.0
      %349 = vmatpush1.msra.mxu0 0.0
      %350 = vmatprep.subr.mxu0 0.0
      %351 = vmatpush1.msra.mxu0 0.0
      %352 = vmatprep.subr.mxu0 0.0
      %353 = vmatpush1.msra.mxu0 0.0
      %354 = vmatprep.subr.mxu0 0.0
      %355 = vmatpush1.msra.mxu0 0.0
      %356 = vmatprep.subr.mxu0 0.0
      %357 = vmatpush1.msra.mxu0 0.0
      %358 = vmatprep.subr.mxu0 0.0
      %359 = vmatpush1.msra.mxu0 0.0
      %360 = vmatprep.subr.mxu0 0.0
      %361 = vmatpush1.msra.mxu0 0.0
      %362 = vmatprep.subr.mxu0 0.0
      %363 = vmatpush1.msra.mxu0 0.0
      %364 = vmatprep.subr.mxu0 0.0
      %365 = vmatpush1.msra.mxu0 0.0
      %366 = vmatprep.subr.mxu0 0.0
      %367 = vmatpush1.msra.mxu0 0.0
      %368 = vmatprep.subr.mxu0 0.0
      %369 = vmatpush1.msra.mxu0 0.0
      %370 = vmatprep.subr.mxu0 0.0
      %371 = vmatpush1.msra.mxu0 0.0
      %372 = vmatprep.subr.mxu0 0.0
      %373 = vmatpush1.msra.mxu0 0.0
      %374 = vmatprep.subr.mxu0 0.0
      %375 = vmatpush1.msra.mxu0 0.0
      %376 = vmatprep.subr.mxu0 0.0
      %377 = vmatpush1.msra.mxu0 0.0
      %378 = vmatprep.subr.mxu0 0.0
      %379 = vmatpush1.msra.mxu0 0.0
      %380 = vmatprep.subr.mxu0 0.0
      %381 = vmatpush1.msra.mxu0 0.0
      %382 = vmatprep.subr.mxu0 0.0
      %383 = vmatpush1.msra.mxu0 0.0
      %384 = vmatprep.subr.mxu0 0.0
      %385 = vmatpush1.msra.mxu0 0.0
      %386 = vmatprep.mubr.f32.mxu0 0.0
      %387 = vmatmul.mubr.f32.gmra.mrb[0].mxu0 %v240
      %v388 = vpop.f32.mrb[0].mxu0
      %v389 = vadd.f32 %v231, %v388
      %v390 = vpop.f32.mrb[0].mxu0
      %391 = vmatprep.mubr.f32.mxu0 0.0
      %392 = vmatmul.mubr.f32.gmra.mrb[0].mxu0 %v243
      %v393 = vpop.f32.mrb[0].mxu0
      %v394 = vadd.f32 %v236, %v393
      %v395 = vpop.f32.mrb[0].mxu0
      %396 = vdwg.mxu0
      %v397 = vld [vmem:[%s212] sm:$0xff]
      %v398 = vld [vmem:[%s212 + $0x8] sm:$0xff]
      %v399 = vld [vmem:[%s212 + $0x10] sm:$0xff]
      %v400 = vld [vmem:[%s212 + $0x18] sm:$0xff]
      %v401 = vld [vmem:[%s212 + $0x20] sm:$0xff]
      %v402 = vld [vmem:[%s212 + $0x28] sm:$0xff]
      %v403 = vadd.f32 %v312, %v397
      %v404 = vadd.f32 %v314, %v398
      %v405 = vadd.f32 %v389, %v399
      %v406 = vadd.f32 %v318, %v400
      %v407 = vadd.f32 %v320, %v401
      %v408 = vadd.f32 %v394, %v402
      %409 = vst [vmem:[%s217] sm:$0xff] %v403
      %410 = vst [vmem:[%s217 + $0x8] sm:$0xff] %v404
      %vm411 = vcmask 556032
      %412 = vst.msk [vmem:[%s217 + $0x10] sm:$0xff] %vm411, %v405
      %413 = vst [vmem:[%s217 + $0x18] sm:$0xff] %v406
      %414 = vst [vmem:[%s217 + $0x20] sm:$0xff] %v407
      %415 = vst.msk [vmem:[%s217 + $0x28] sm:$0xff] %vm411, %v408
      %p416 = scmp.lt.s32.totalorder %s15, 1
      %s417 = scalar_select %p416, %s15, 1
      %s418 = smul.addr %s417, 6
      %s419 = smul.addr %s418, 8
      %s420 = scalar_lea.vmem %s4, %s419
      // Predicated region
      $region37: #{_lambda_.18} parent=35 // pred_check
        %p421 = pneg %p127
      $region38: #{_lambda_.18} parent=35 // pred_check_branch
        %423 = sbr.rel (%p421) target = $region40
      $region39: #{_lambda_.18} parent=35 // pred_region
        _
      $region40: #{_lambda_.18} parent=35 // pred_fallthru
        _
    $region36: #{_lambda_.18} parent=5 // pred_fallthru
      _
    %p424 = scmp.le.s32.totalorder 2, %s10
    // Predicated region
    $region41: #{_lambda_.18} parent=5 // pred_check
      %p425 = pneg %p424
    $region42: #{_lambda_.18} parent=5 // pred_check_branch
      %427 = sbr.rel (%p425) target = $region44
    $region43: #{_lambda_.18} parent=5 // pred_region
      %s428 = ssub.s32 %s10, 2
      // Predicated region
      $region45: #{_lambda_.18} parent=43 // pred_check
        %p429 = pneg %p133
      $region46: #{_lambda_.18} parent=43 // pred_check_branch
        %431 = sbr.rel (%p429) target = $region48
      $region47: #{_lambda_.18} parent=43 // pred_region
        %p432 = scmp.lt.s32.totalorder %s16, 1
        %s433 = scalar_select %p432, %s16, 1
        %s434 = smul.addr %s433, 6
        %s435 = smul.addr %s434, 8
        %s436 = scalar_lea.vmem %s4, %s435
      $region48: #{_lambda_.18} parent=43 // pred_fallthru
        _
    $region44: #{_lambda_.18} parent=5 // pred_fallthru
      _
  $region6: #{_lambda_.18} parent=0 // loop_footer
    %s14 = sadd.s32 1, %s10
  $region7: #{_lambda_.18} parent=0 // loop_footer_branch
    %9 = sbr.rel target = $region3
  $region8: #{_lambda_.18} parent=0 // loop_exit
    _

// kernel: _lambda_.19
$region0: #{_lambda_.19}
  #allocation0 [shape = 'u32[]', space=smem, size = 0x4, offset = 0x4, fixed_abs, tag = 'smem constant byte address 0x4 - core index']
  #allocation1 [shape = 'u32[144,128]{1,0:T(1,128)}', space=vmem, size = 0x12000, scoped, tag = 'internal scratch']
  #allocation2 [shape = 'f32[1,1]{1,0:T(1,128)S(1)}', space=vmem, size = 0x200, scoped, tag = 'scoped memory for _lambda_.19']
  %s0 = inlined_call_operand.vmem [shape: f32[2,16,256], index: 0, kind: input, shape index: {}]
  %s1 = inlined_call_operand.vmem [shape: f32[128,16], index: 1, kind: input, shape index: {}]
  %s2 = inlined_call_operand.vmem [shape: f32[128,1], index: 2, kind: input, shape index: {}]
  %s3 = inlined_call_operand.vmem [shape: f32[1,128], index: 3, kind: input, shape index: {}]
  %s4 = inlined_call_operand.<no memory space> [shape: f32[1,1], index: 4, kind: input, shape index: {}]
  %s5 = inlined_call_operand.vmem [shape: f32[2,1,256], index: 5, kind: output, shape index: {}]
  %s6 = sld [smem:[#allocation0]]
  $region53: #{_lambda_.19} parent=0
    _
  %s8 = ssub.s32 1, %s6
  %s9 = scalar_select 0, %s8, %s6
  %v10 = vstv %s4
  %11 = vst [vmem:[#allocation2] sm:$0x1] %v10
  loop: start=0, step=1, limit=4
  $region2: #{_lambda_.19} parent=0 // loop_pre_header
    _
  $region3: #{_lambda_.19} parent=0 // loop_header
    %s13 = sphi 0, %s17
    %p14 = scmp.ge.s32.totalorder %s13, 4
    %s23 = sphi 0, %s25
    %s26 = sphi 0, %s23
    %s27 = sphi 0, %s26
    %s43 = sphi 0, %s27
    %s47 = sphi 0, %s47
    %s49 = sphi 0, %s47
    %s50 = sphi 0, %s49
    %s64 = sphi 0, %s50
    %s68 = sphi 0, %s68
    %s70 = sphi 0, %s68
    %s71 = sphi 0, %s70
    %s85 = sphi 0, %s71
    %s89 = sphi 0, %s89
    %s91 = sphi 0, %s89
    %s92 = sphi 0, %s91
    %s106 = sphi 0, %s92
    %s110 = sphi 0, %s110
    %s112 = sphi 0, %s110
    %s113 = sphi 0, %s112
    %s127 = sphi 0, %s113
    %s133 = sphi 0, %s135
    %s136 = sphi 0, %s133
    %s137 = sphi 0, %s136
    %s153 = sphi 0, %s137
  $region4: #{_lambda_.19} parent=0 // loop_header_branch
    %16 = sbr.rel (%p14) target = $region8
  $region5: #{_lambda_.19} parent=0 // loop_body
    %s18 = ssub.s32 %s13, 1
    %s19 = ssub.s32 %s13, 2
    %s20 = sadd.s32 %s13, 1
    %s21 = ssub.s32 %s13, %s20
    %p22 = scmp.eq.s32.totalorder %s21, 0
    %s24 = sadd.s32 %s23, 1
    %s25 = scalar_select %p22, %s23, %s24
    %p28 = pneg %p22
    %p29 = scmp.eq.s32.totalorder %s13, 1
    %p30 = por %p28, %p29
    %p31 = scmp.ne.s32.totalorder %s23, %s26
    %p32 = scmp.eq.s32.totalorder %s13, 0
    %p33 = por %p31, %p32
    %p34 = scmp.ne.s32.totalorder %s23, %s26
    %p35 = scmp.eq.s32.totalorder %s18, 1
    %p36 = por %p34, %p35
    %p37 = scmp.ne.s32.totalorder %s26, %s27
    %p38 = scmp.eq.s32.totalorder %s18, 0
    %p39 = por %p37, %p38
    %p40 = scmp.ne.s32.totalorder %s26, %s27
    %p41 = scmp.eq.s32.totalorder %s19, 1
    %p42 = por %p40, %p41
    %p44 = scmp.ne.s32.totalorder %s27, %s43
    %p45 = scmp.eq.s32.totalorder %s19, 0
    %p46 = por %p44, %p45
    %s48 = sadd.s32 %s47, 1
    %p51 = scmp.eq.s32.totalorder %s13, 1
    %p52 = scmp.ne.s32.totalorder %s47, %s49
    %p53 = scmp.eq.s32.totalorder %s13, 0
    %p54 = por %p52, %p53
    %p55 = scmp.ne.s32.totalorder %s47, %s49
    %p56 = scmp.eq.s32.totalorder %s18, 1
    %p57 = por %p55, %p56
    %p58 = scmp.ne.s32.totalorder %s49, %s50
    %p59 = scmp.eq.s32.totalorder %s18, 0
    %p60 = por %p58, %p59
    %p61 = scmp.ne.s32.totalorder %s49, %s50
    %p62 = scmp.eq.s32.totalorder %s19, 1
    %p63 = por %p61, %p62
    %p65 = scmp.ne.s32.totalorder %s50, %s64
    %p66 = scmp.eq.s32.totalorder %s19, 0
    %p67 = por %p65, %p66
    %s69 = sadd.s32 %s68, 1
    %p72 = scmp.eq.s32.totalorder %s13, 1
    %p73 = scmp.ne.s32.totalorder %s68, %s70
    %p74 = scmp.eq.s32.totalorder %s13, 0
    %p75 = por %p73, %p74
    %p76 = scmp.ne.s32.totalorder %s68, %s70
    %p77 = scmp.eq.s32.totalorder %s18, 1
    %p78 = por %p76, %p77
    %p79 = scmp.ne.s32.totalorder %s70, %s71
    %p80 = scmp.eq.s32.totalorder %s18, 0
    %p81 = por %p79, %p80
    %p82 = scmp.ne.s32.totalorder %s70, %s71
    %p83 = scmp.eq.s32.totalorder %s19, 1
    %p84 = por %p82, %p83
    %p86 = scmp.ne.s32.totalorder %s71, %s85
    %p87 = scmp.eq.s32.totalorder %s19, 0
    %p88 = por %p86, %p87
    %s90 = sadd.s32 %s89, 1
    %p93 = scmp.eq.s32.totalorder %s13, 1
    %p94 = scmp.ne.s32.totalorder %s89, %s91
    %p95 = scmp.eq.s32.totalorder %s13, 0
    %p96 = por %p94, %p95
    %p97 = scmp.ne.s32.totalorder %s89, %s91
    %p98 = scmp.eq.s32.totalorder %s18, 1
    %p99 = por %p97, %p98
    %p100 = scmp.ne.s32.totalorder %s91, %s92
    %p101 = scmp.eq.s32.totalorder %s18, 0
    %p102 = por %p100, %p101
    %p103 = scmp.ne.s32.totalorder %s91, %s92
    %p104 = scmp.eq.s32.totalorder %s19, 1
    %p105 = por %p103, %p104
    %p107 = scmp.ne.s32.totalorder %s92, %s106
    %p108 = scmp.eq.s32.totalorder %s19, 0
    %p109 = por %p107, %p108
    %s111 = sadd.s32 %s110, 1
    %p114 = scmp.eq.s32.totalorder %s13, 1
    %p115 = scmp.ne.s32.totalorder %s110, %s112
    %p116 = scmp.eq.s32.totalorder %s13, 0
    %p117 = por %p115, %p116
    %p118 = scmp.ne.s32.totalorder %s110, %s112
    %p119 = scmp.eq.s32.totalorder %s18, 1
    %p120 = por %p118, %p119
    %p121 = scmp.ne.s32.totalorder %s112, %s113
    %p122 = scmp.eq.s32.totalorder %s18, 0
    %p123 = por %p121, %p122
    %p124 = scmp.ne.s32.totalorder %s112, %s113
    %p125 = scmp.eq.s32.totalorder %s19, 1
    %p126 = por %p124, %p125
    %p128 = scmp.ne.s32.totalorder %s113, %s127
    %p129 = scmp.eq.s32.totalorder %s19, 0
    %p130 = por %p128, %p129
    %s131 = ssub.s32 %s13, %s20
    %p132 = scmp.eq.s32.totalorder %s131, 0
    %s134 = sadd.s32 %s133, 1
    %s135 = scalar_select %p132, %s133, %s134
    %p138 = pneg %p132
    %p139 = scmp.eq.s32.totalorder %s13, 1
    %p140 = por %p138, %p139
    %p141 = scmp.ne.s32.totalorder %s133, %s136
    %p142 = scmp.eq.s32.totalorder %s13, 0
    %p143 = por %p141, %p142
    %p144 = scmp.ne.s32.totalorder %s133, %s136
    %p145 = scmp.eq.s32.totalorder %s18, 1
    %p146 = por %p144, %p145
    %p147 = scmp.ne.s32.totalorder %s136, %s137
    %p148 = scmp.eq.s32.totalorder %s18, 0
    %p149 = por %p147, %p148
    %p150 = scmp.ne.s32.totalorder %s136, %s137
    %p151 = scmp.eq.s32.totalorder %s19, 1
    %p152 = por %p150, %p151
    %p154 = scmp.ne.s32.totalorder %s137, %s153
    %p155 = scmp.eq.s32.totalorder %s19, 0
    %p156 = por %p154, %p155
    %p157 = scmp.le.s32.totalorder 1, %s13
    %p158 = scmp.lt.s32.totalorder %s13, 3
    %p159 = pnand %p157, %p158
    %p160 = pneg %p159
    // Predicated region
    $region9: #{_lambda_.19} parent=5 // pred_check
      _
    $region10: #{_lambda_.19} parent=5 // pred_check_branch
      %162 = sbr.rel (%p159) target = $region12
    $region11: #{_lambda_.19} parent=5 // pred_region
      %s163 = ssub.s32 %s13, 1
      // Predicated region
      $region13: #{_lambda_.19} parent=11 // pred_check
        %p164 = pneg %p60
      $region14: #{_lambda_.19} parent=11 // pred_check_branch
        %166 = sbr.rel (%p164) target = $region16
      $region15: #{_lambda_.19} parent=11 // pred_region
        _
      $region16: #{_lambda_.19} parent=11 // pred_fallthru
        _
      // Predicated region
      $region17: #{_lambda_.19} parent=11 // pred_check
        %p167 = pneg %p81
      $region18: #{_lambda_.19} parent=11 // pred_check_branch
        %169 = sbr.rel (%p167) target = $region20
      $region19: #{_lambda_.19} parent=11 // pred_region
        _
      $region20: #{_lambda_.19} parent=11 // pred_fallthru
        _
      // Predicated region
      $region21: #{_lambda_.19} parent=11 // pred_check
        %p170 = pneg %p102
      $region22: #{_lambda_.19} parent=11 // pred_check_branch
        %172 = sbr.rel (%p170) target = $region24
      $region23: #{_lambda_.19} parent=11 // pred_region
        _
      $region24: #{_lambda_.19} parent=11 // pred_fallthru
        _
      // Predicated region
      $region25: #{_lambda_.19} parent=11 // pred_check
        %p173 = pneg %p123
      $region26: #{_lambda_.19} parent=11 // pred_check_branch
        %175 = sbr.rel (%p173) target = $region28
      $region27: #{_lambda_.19} parent=11 // pred_region
        _
      $region28: #{_lambda_.19} parent=11 // pred_fallthru
        _
    $region12: #{_lambda_.19} parent=5 // pred_fallthru
      _
    %p176 = scmp.lt.s32.totalorder %s13, 2
    // Predicated region
    $region29: #{_lambda_.19} parent=5 // pred_check
      %p177 = pneg %p176
    $region30: #{_lambda_.19} parent=5 // pred_check_branch
      %179 = sbr.rel (%p177) target = $region32
    $region31: #{_lambda_.19} parent=5 // pred_region
      // Predicated region
      $region33: #{_lambda_.19} parent=31 // pred_check
        %p180 = pneg %p33
      $region34: #{_lambda_.19} parent=31 // pred_check_branch
        %182 = sbr.rel (%p180) target = $region36
      $region35: #{_lambda_.19} parent=31 // pred_region
        %p183 = scmp.lt.s32.totalorder %s13, 1
        %s184 = scalar_select %p183, %s13, 1
        %s185 = smul.addr %s184, 4
        %s186 = smul.addr %s185, 8
        %s187 = scalar_lea.vmem %s0, %s186
      $region36: #{_lambda_.19} parent=31 // pred_fallthru
        _
    $region32: #{_lambda_.19} parent=5 // pred_fallthru
      _
    %p188 = scmp.le.s32.totalorder 1, %s13
    %p189 = scmp.lt.s32.totalorder %s13, 3
    %p190 = pnand %p188, %p189
    %p191 = pneg %p190
    // Predicated region
    $region37: #{_lambda_.19} parent=5 // pred_check
      _
    $region38: #{_lambda_.19} parent=5 // pred_check_branch
      %193 = sbr.rel (%p190) target = $region40
    $region39: #{_lambda_.19} parent=5 // pred_region
      %s194 = ssub.s32 %s13, 1
      %p195 = scmp.lt.s32.totalorder %s18, 1
      %s196 = scalar_select %p195, %s18, 1
      %s197 = smul.addr %s196, 4
      %s198 = smul.addr %s197, 8
      %s199 = scalar_lea.vmem %s0, %s198
      %p200 = pneg %p39
      %p201 = pneg %p36
      %p202 = pneg %p60
      %p203 = pneg %p57
      %p204 = pneg %p81
      %p205 = pneg %p78
      %p206 = pneg %p102
      %p207 = pneg %p99
      %p208 = pneg %p123
      %p209 = pneg %p120
      %p210 = pneg %p149
      %p211 = pneg %p146
      %p212 = scmp.lt.s32.totalorder %s18, 1
      %s213 = scalar_select %p212, %s18, 1
      %s214 = smul.addr %s213, 2
      %s215 = scalar_lea.vmem %s5, %s214
      %p216 = scmp.lt.s32.totalorder %s18, 1
      %s217 = scalar_select %p216, %s18, 1
      %s218 = smul.addr %s217, 4
      %s219 = smul.addr %s218, 8
      %s220 = scalar_lea.vmem %s0, %s219
      %p221 = scmp.lt.s32.totalorder %s18, 1
      %s222 = scalar_select %p221, %s18, 1
      %s223 = smul.addr %s222, 2
      %s224 = scalar_lea.vmem %s5, %s223
      %v225 = vld [vmem:[%s1] sm:$0xff]
      %v226 = vld [vmem:[%s1 + $0x8] sm:$0xff]
      %v227 = vld [vmem:[%s1 + $0x10] sm:$0xff]
      %v228 = vld [vmem:[%s1 + $0x18] sm:$0xff]
      %v229 = vld [vmem:[%s1 + $0x20] sm:$0xff]
      %v230 = vld [vmem:[%s1 + $0x28] sm:$0xff]
      %v231 = vld [vmem:[%s1 + $0x30] sm:$0xff]
      %v232 = vld [vmem:[%s1 + $0x38] sm:$0xff]
      %v233 = vld [vmem:[%s1 + $0x40] sm:$0xff]
      %v234 = vld [vmem:[%s1 + $0x48] sm:$0xff]
      %v235 = vld [vmem:[%s1 + $0x50] sm:$0xff]
      %v236 = vld [vmem:[%s1 + $0x58] sm:$0xff]
      %v237 = vld [vmem:[%s1 + $0x60] sm:$0xff]
      %v238 = vld [vmem:[%s1 + $0x68] sm:$0xff]
      %v239 = vld [vmem:[%s1 + $0x70] sm:$0xff]
      %v240 = vld [vmem:[%s1 + $0x78] sm:$0xff]
      %v241 = vld [vmem:[%s220] sm:$0xff]
      %v242 = vld [vmem:[%s220 + $0x8] sm:$0xff]
      %v243 = vld [vmem:[%s220 + $0x10] sm:$0xff]
      %v244 = vld [vmem:[%s220 + $0x18] sm:$0xff]
      %v245 = vld [vmem:[%s2] sm:$0xff]
      %v246 = vld [vmem:[%s2 + $0x8] sm:$0xff]
      %v247 = vld [vmem:[%s2 + $0x10] sm:$0xff]
      %v248 = vld [vmem:[%s2 + $0x18] sm:$0xff]
      %v249 = vld [vmem:[%s2 + $0x20] sm:$0xff]
      %v250 = vld [vmem:[%s2 + $0x28] sm:$0xff]
      %v251 = vld [vmem:[%s2 + $0x30] sm:$0xff]
      %v252 = vld [vmem:[%s2 + $0x38] sm:$0xff]
      %v253 = vld [vmem:[%s2 + $0x40] sm:$0xff]
      %v254 = vld [vmem:[%s2 + $0x48] sm:$0xff]
      %v255 = vld [vmem:[%s2 + $0x50] sm:$0xff]
      %v256 = vld [vmem:[%s2 + $0x58] sm:$0xff]
      %v257 = vld [vmem:[%s2 + $0x60] sm:$0xff]
      %v258 = vld [vmem:[%s2 + $0x68] sm:$0xff]
      %v259 = vld [vmem:[%s2 + $0x70] sm:$0xff]
      %v260 = vld [vmem:[%s2 + $0x78] sm:$0xff]
      %262 = vset.pattern.permute.xlu0 0
      %263 = vperm.xlu0 %262, %v245
      %v264 = vpop.permute.xlu0 %263
      %267 = vset.pattern.permute.xlu0 0
      %268 = vperm.xlu0 %267, %v246
      %v269 = vpop.permute.xlu0 %268
      %272 = vset.pattern.permute.xlu0 0
      %273 = vperm.xlu0 %272, %v247
      %v274 = vpop.permute.xlu0 %273
      %277 = vset.pattern.permute.xlu0 0
      %278 = vperm.xlu0 %277, %v248
      %v279 = vpop.permute.xlu0 %278
      %282 = vset.pattern.permute.xlu0 0
      %283 = vperm.xlu0 %282, %v249
      %v284 = vpop.permute.xlu0 %283
      %287 = vset.pattern.permute.xlu0 0
      %288 = vperm.xlu0 %287, %v250
      %v289 = vpop.permute.xlu0 %288
      %292 = vset.pattern.permute.xlu0 0
      %293 = vperm.xlu0 %292, %v251
      %v294 = vpop.permute.xlu0 %293
      %297 = vset.pattern.permute.xlu0 0
      %298 = vperm.xlu0 %297, %v252
      %v299 = vpop.permute.xlu0 %298
      %302 = vset.pattern.permute.xlu0 0
      %303 = vperm.xlu0 %302, %v253
      %v304 = vpop.permute.xlu0 %303
      %307 = vset.pattern.permute.xlu0 0
      %308 = vperm.xlu0 %307, %v254
      %v309 = vpop.permute.xlu0 %308
      %312 = vset.pattern.permute.xlu0 0
      %313 = vperm.xlu0 %312, %v255
      %v314 = vpop.permute.xlu0 %313
      %317 = vset.pattern.permute.xlu0 0
      %318 = vperm.xlu0 %317, %v256
      %v319 = vpop.permute.xlu0 %318
      %322 = vset.pattern.permute.xlu0 0
      %323 = vperm.xlu0 %322, %v257
      %v324 = vpop.permute.xlu0 %323
      %327 = vset.pattern.permute.xlu0 0
      %328 = vperm.xlu0 %327, %v258
      %v329 = vpop.permute.xlu0 %328
      %332 = vset.pattern.permute.xlu0 0
      %333 = vperm.xlu0 %332, %v259
      %v334 = vpop.permute.xlu0 %333
      %337 = vset.pattern.permute.xlu0 0
      %338 = vperm.xlu0 %337, %v260
      %v339 = vpop.permute.xlu0 %338
      %vm341 = vcmask 130048
      %v343 = vsel %vm341, %v225, 0
      %v346 = vsel %vm341, %v226, 0
      %v349 = vsel %vm341, %v227, 0
      %v352 = vsel %vm341, %v228, 0
      %v355 = vsel %vm341, %v229, 0
      %v358 = vsel %vm341, %v230, 0
      %v361 = vsel %vm341, %v231, 0
      %v364 = vsel %vm341, %v232, 0
      %v367 = vsel %vm341, %v233, 0
      %v370 = vsel %vm341, %v234, 0
      %v373 = vsel %vm341, %v235, 0
      %v376 = vsel %vm341, %v236, 0
      %v379 = vsel %vm341, %v237, 0
      %v382 = vsel %vm341, %v238, 0
      %v385 = vsel %vm341, %v239, 0
      %v388 = vsel %vm341, %v240, 0
      %390 = vmatprep.subr.mxu0 %v242
      %391 = vmatpush1.msra.mxu0 %v241
      %392 = vmatprep.subr.mxu0 %v244
      %393 = vmatpush1.msra.mxu0 %v243
      %394 = vmatprep.subr.mxu0 0.0
      %395 = vmatpush1.msra.mxu0 0.0
      %396 = vmatprep.subr.mxu0 0.0
      %397 = vmatpush1.msra.mxu0 0.0
      %398 = vmatprep.subr.mxu0 0.0
      %399 = vmatpush1.msra.mxu0 0.0
      %400 = vmatprep.subr.mxu0 0.0
      %401 = vmatpush1.msra.mxu0 0.0
      %402 = vmatprep.subr.mxu0 0.0
      %403 = vmatpush1.msra.mxu0 0.0
      %404 = vmatprep.subr.mxu0 0.0
      %405 = vmatpush1.msra.mxu0 0.0
      %406 = vmatprep.subr.mxu0 0.0
      %407 = vmatpush1.msra.mxu0 0.0
      %408 = vmatprep.subr.mxu0 0.0
      %409 = vmatpush1.msra.mxu0 0.0
      %410 = vmatprep.subr.mxu0 0.0
      %411 = vmatpush1.msra.mxu0 0.0
      %412 = vmatprep.subr.mxu0 0.0
      %413 = vmatpush1.msra.mxu0 0.0
      %414 = vmatprep.subr.mxu0 0.0
      %415 = vmatpush1.msra.mxu0 0.0
      %416 = vmatprep.subr.mxu0 0.0
      %417 = vmatpush1.msra.mxu0 0.0
      %418 = vmatprep.subr.mxu0 0.0
      %419 = vmatpush1.msra.mxu0 0.0
      %420 = vmatprep.subr.mxu0 0.0
      %421 = vmatpush1.msra.mxu0 0.0
      %422 = vmatprep.subr.mxu0 0.0
      %423 = vmatpush1.msra.mxu0 0.0
      %424 = vmatprep.subr.mxu0 0.0
      %425 = vmatpush1.msra.mxu0 0.0
      %426 = vmatprep.subr.mxu0 0.0
      %427 = vmatpush1.msra.mxu0 0.0
      %428 = vmatprep.subr.mxu0 0.0
      %429 = vmatpush1.msra.mxu0 0.0
      %430 = vmatprep.subr.mxu0 0.0
      %431 = vmatpush1.msra.mxu0 0.0
      %432 = vmatprep.subr.mxu0 0.0
      %433 = vmatpush1.msra.mxu0 0.0
      %434 = vmatprep.subr.mxu0 0.0
      %435 = vmatpush1.msra.mxu0 0.0
      %436 = vmatprep.subr.mxu0 0.0
      %437 = vmatpush1.msra.mxu0 0.0
      %438 = vmatprep.subr.mxu0 0.0
      %439 = vmatpush1.msra.mxu0 0.0
      %440 = vmatprep.subr.mxu0 0.0
      %441 = vmatpush1.msra.mxu0 0.0
      %442 = vmatprep.subr.mxu0 0.0
      %443 = vmatpush1.msra.mxu0 0.0
      %444 = vmatprep.subr.mxu0 0.0
      %445 = vmatpush1.msra.mxu0 0.0
      %446 = vmatprep.subr.mxu0 0.0
      %447 = vmatpush1.msra.mxu0 0.0
      %448 = vmatprep.subr.mxu0 0.0
      %449 = vmatpush1.msra.mxu0 0.0
      %450 = vmatprep.subr.mxu0 0.0
      %451 = vmatpush1.msra.mxu0 0.0
      %452 = vmatprep.subr.mxu0 0.0
      %453 = vmatpush1.msra.mxu0 0.0
      %454 = vmatprep.mubr.f32.mxu0 0.0
      %455 = vmatmul.mubr.f32.gmra.mrb[0].mxu0 %v343
      %v456 = vpop.f32.mrb[0].mxu0
      %v457 = vadd.f32 %v264, %v456
      %v458 = vpop.f32.mrb[0].mxu0
      %v459 = vadd.f32 %v264, %v458
      %460 = vmatprep.mubr.f32.mxu0 0.0
      %461 = vmatmul.mubr.f32.gmra.mrb[0].mxu0 %v346
      %v462 = vpop.f32.mrb[0].mxu0
      %v463 = vadd.f32 %v269, %v462
      %v464 = vpop.f32.mrb[0].mxu0
      %v465 = vadd.f32 %v269, %v464
      %466 = vmatprep.mubr.f32.mxu0 0.0
      %467 = vmatmul.mubr.f32.gmra.mrb[0].mxu0 %v349
      %v468 = vpop.f32.mrb[0].mxu0
      %v469 = vadd.f32 %v274, %v468
      %v470 = vpop.f32.mrb[0].mxu0
      %v471 = vadd.f32 %v274, %v470
      %472 = vmatprep.mubr.f32.mxu0 0.0
      %473 = vmatmul.mubr.f32.gmra.mrb[0].mxu0 %v352
      %v474 = vpop.f32.mrb[0].mxu0
      %v475 = vadd.f32 %v279, %v474
      %v476 = vpop.f32.mrb[0].mxu0
      %v477 = vadd.f32 %v279, %v476
      %478 = vmatprep.mubr.f32.mxu0 0.0
      %479 = vmatmul.mubr.f32.gmra.mrb[0].mxu0 %v355
      %v480 = vpop.f32.mrb[0].mxu0
      %v481 = vadd.f32 %v284, %v480
      %v482 = vpop.f32.mrb[0].mxu0
      %v483 = vadd.f32 %v284, %v482
      %484 = vmatprep.mubr.f32.mxu0 0.0
      %485 = vmatmul.mubr.f32.gmra.mrb[0].mxu0 %v358
      %v486 = vpop.f32.mrb[0].mxu0
      %v487 = vadd.f32 %v289, %v486
      %v488 = vpop.f32.mrb[0].mxu0
      %v489 = vadd.f32 %v289, %v488
      %490 = vmatprep.mubr.f32.mxu0 0.0
      %491 = vmatmul.mubr.f32.gmra.mrb[0].mxu0 %v361
      %v492 = vpop.f32.mrb[0].mxu0
      %v493 = vadd.f32 %v294, %v492
      %v494 = vpop.f32.mrb[0].mxu0
      %v495 = vadd.f32 %v294, %v494
      %496 = vmatprep.mubr.f32.mxu0 0.0
      %497 = vmatmul.mubr.f32.gmra.mrb[0].mxu0 %v364
      %v498 = vpop.f32.mrb[0].mxu0
      %v499 = vadd.f32 %v299, %v498
      %v500 = vpop.f32.mrb[0].mxu0
      %v501 = vadd.f32 %v299, %v500
      %502 = vmatprep.mubr.f32.mxu0 0.0
      %503 = vmatmul.mubr.f32.gmra.mrb[0].mxu0 %v367
      %v504 = vpop.f32.mrb[0].mxu0
      %v505 = vadd.f32 %v304, %v504
      %v506 = vpop.f32.mrb[0].mxu0
      %v507 = vadd.f32 %v304, %v506
      %508 = vmatprep.mubr.f32.mxu0 0.0
      %509 = vmatmul.mubr.f32.gmra.mrb[0].mxu0 %v370
      %v510 = vpop.f32.mrb[0].mxu0
      %v511 = vadd.f32 %v309, %v510
      %v512 = vpop.f32.mrb[0].mxu0
      %v513 = vadd.f32 %v309, %v512
      %514 = vmatprep.mubr.f32.mxu0 0.0
      %515 = vmatmul.mubr.f32.gmra.mrb[0].mxu0 %v373
      %v516 = vpop.f32.mrb[0].mxu0
      %v517 = vadd.f32 %v314, %v516
      %v518 = vpop.f32.mrb[0].mxu0
      %v519 = vadd.f32 %v314, %v518
      %520 = vmatprep.mubr.f32.mxu0 0.0
      %521 = vmatmul.mubr.f32.gmra.mrb[0].mxu0 %v376
      %v522 = vpop.f32.mrb[0].mxu0
      %v523 = vadd.f32 %v319, %v522
      %v524 = vpop.f32.mrb[0].mxu0
      %v525 = vadd.f32 %v319, %v524
      %526 = vmatprep.mubr.f32.mxu0 0.0
      %527 = vmatmul.mubr.f32.gmra.mrb[0].mxu0 %v379
      %v528 = vpop.f32.mrb[0].mxu0
      %v529 = vadd.f32 %v324, %v528
      %v530 = vpop.f32.mrb[0].mxu0
      %v531 = vadd.f32 %v324, %v530
      %532 = vmatprep.mubr.f32.mxu0 0.0
      %533 = vmatmul.mubr.f32.gmra.mrb[0].mxu0 %v382
      %v534 = vpop.f32.mrb[0].mxu0
      %v535 = vadd.f32 %v329, %v534
      %v536 = vpop.f32.mrb[0].mxu0
      %v537 = vadd.f32 %v329, %v536
      %538 = vmatprep.mubr.f32.mxu0 0.0
      %539 = vmatmul.mubr.f32.gmra.mrb[0].mxu0 %v385
      %v540 = vpop.f32.mrb[0].mxu0
      %v541 = vadd.f32 %v334, %v540
      %v542 = vpop.f32.mrb[0].mxu0
      %v543 = vadd.f32 %v334, %v542
      %544 = vmatprep.mubr.f32.mxu0 0.0
      %545 = vmatmul.mubr.f32.gmra.mrb[0].mxu0 %v388
      %v546 = vpop.f32.mrb[0].mxu0
      %v547 = vadd.f32 %v339, %v546
      %v548 = vpop.f32.mrb[0].mxu0
      %v549 = vadd.f32 %v339, %v548
      %550 = vdwg.mxu0
      %v551 = vmul.f32 %v457, 0.5
      %v552 = vmul.f32 %v459, 0.5
      %v553 = vmul.f32 %v463, 0.5
      %v554 = vmul.f32 %v465, 0.5
      %v555 = vmul.f32 %v469, 0.5
      %v556 = vmul.f32 %v471, 0.5
      %v557 = vmul.f32 %v475, 0.5
      %v558 = vmul.f32 %v477, 0.5
      %v559 = vmul.f32 %v481, 0.5
      %v560 = vmul.f32 %v483, 0.5
      %v561 = vmul.f32 %v487, 0.5
      %v562 = vmul.f32 %v489, 0.5
      %v563 = vmul.f32 %v493, 0.5
      %v564 = vmul.f32 %v495, 0.5
      %v565 = vmul.f32 %v499, 0.5
      %v566 = vmul.f32 %v501, 0.5
      %v567 = vmul.f32 %v505, 0.5
      %v568 = vmul.f32 %v507, 0.5
      %v569 = vmul.f32 %v511, 0.5
      %v570 = vmul.f32 %v513, 0.5
      %v571 = vmul.f32 %v517, 0.5
      %v572 = vmul.f32 %v519, 0.5
      %v573 = vmul.f32 %v523, 0.5
      %v574 = vmul.f32 %v525, 0.5
      %v575 = vmul.f32 %v529, 0.5
      %v576 = vmul.f32 %v531, 0.5
      %v577 = vmul.f32 %v535, 0.5
      %v578 = vmul.f32 %v537, 0.5
      %v579 = vmul.f32 %v541, 0.5
      %v580 = vmul.f32 %v543, 0.5
      %v581 = vmul.f32 %v547, 0.5
      %v582 = vmul.f32 %v549, 0.5
      %v583 = vmul.f32 %v457, 0.70710677
      %v584 = vmul.f32 %v459, 0.70710677
      %v585 = vmul.f32 %v463, 0.70710677
      %v586 = vmul.f32 %v465, 0.70710677
      %v587 = vmul.f32 %v469, 0.70710677
      %v588 = vmul.f32 %v471, 0.70710677
      %v589 = vmul.f32 %v475, 0.70710677
      %v590 = vmul.f32 %v477, 0.70710677
      %v591 = vmul.f32 %v481, 0.70710677
      %v592 = vmul.f32 %v483, 0.70710677
      %v593 = vmul.f32 %v487, 0.70710677
      %v594 = vmul.f32 %v489, 0.70710677
      %v595 = vmul.f32 %v493, 0.70710677
      %v596 = vmul.f32 %v495, 0.70710677
      %v597 = vmul.f32 %v499, 0.70710677
      %v598 = vmul.f32 %v501, 0.70710677
      %v599 = vmul.f32 %v505, 0.70710677
      %v600 = vmul.f32 %v507, 0.70710677
      %v601 = vmul.f32 %v511, 0.70710677
      %v602 = vmul.f32 %v513, 0.70710677
      %v603 = vmul.f32 %v517, 0.70710677
      %v604 = vmul.f32 %v519, 0.70710677
      %v605 = vmul.f32 %v523, 0.70710677
      %v606 = vmul.f32 %v525, 0.70710677
      %v607 = vmul.f32 %v529, 0.70710677
      %v608 = vmul.f32 %v531, 0.70710677
      %v609 = vmul.f32 %v535, 0.70710677
      %v610 = vmul.f32 %v537, 0.70710677
      %v611 = vmul.f32 %v541, 0.70710677
      %v612 = vmul.f32 %v543, 0.70710677
      %v613 = vmul.f32 %v547, 0.70710677
      %v614 = vmul.f32 %v549, 0.70710677
      %vm615 = vcmp.ge.f32.partialorder %v583, 0.0
      %vm616 = vcmp.ge.f32.partialorder %v584, 0.0
      %vm617 = vcmp.ge.f32.partialorder %v585, 0.0
      %vm618 = vcmp.ge.f32.partialorder %v586, 0.0
      %vm619 = vcmp.ge.f32.partialorder %v587, 0.0
      %vm620 = vcmp.ge.f32.partialorder %v588, 0.0
      %vm621 = vcmp.ge.f32.partialorder %v589, 0.0
      %vm622 = vcmp.ge.f32.partialorder %v590, 0.0
      %vm623 = vcmp.ge.f32.partialorder %v591, 0.0
      %vm624 = vcmp.ge.f32.partialorder %v592, 0.0
      %vm625 = vcmp.ge.f32.partialorder %v593, 0.0
      %vm626 = vcmp.ge.f32.partialorder %v594, 0.0
      %vm627 = vcmp.ge.f32.partialorder %v595, 0.0
      %vm628 = vcmp.ge.f32.partialorder %v596, 0.0
      %vm629 = vcmp.ge.f32.partialorder %v597, 0.0
      %vm630 = vcmp.ge.f32.partialorder %v598, 0.0
      %vm631 = vcmp.ge.f32.partialorder %v599, 0.0
      %vm632 = vcmp.ge.f32.partialorder %v600, 0.0
      %vm633 = vcmp.ge.f32.partialorder %v601, 0.0
      %vm634 = vcmp.ge.f32.partialorder %v602, 0.0
      %vm635 = vcmp.ge.f32.partialorder %v603, 0.0
      %vm636 = vcmp.ge.f32.partialorder %v604, 0.0
      %vm637 = vcmp.ge.f32.partialorder %v605, 0.0
      %vm638 = vcmp.ge.f32.partialorder %v606, 0.0
      %vm639 = vcmp.ge.f32.partialorder %v607, 0.0
      %vm640 = vcmp.ge.f32.partialorder %v608, 0.0
      %vm641 = vcmp.ge.f32.partialorder %v609, 0.0
      %vm642 = vcmp.ge.f32.partialorder %v610, 0.0
      %vm643 = vcmp.ge.f32.partialorder %v611, 0.0
      %vm644 = vcmp.ge.f32.partialorder %v612, 0.0
      %vm645 = vcmp.ge.f32.partialorder %v613, 0.0
      %vm646 = vcmp.ge.f32.partialorder %v614, 0.0
      %v647 = vsel %vm615, 1.0, -1.0
      %v648 = vsel %vm616, 1.0, -1.0
      %v649 = vsel %vm617, 1.0, -1.0
      %v650 = vsel %vm618, 1.0, -1.0
      %v651 = vsel %vm619, 1.0, -1.0
      %v652 = vsel %vm620, 1.0, -1.0
      %v653 = vsel %vm621, 1.0, -1.0
      %v654 = vsel %vm622, 1.0, -1.0
      %v655 = vsel %vm623, 1.0, -1.0
      %v656 = vsel %vm624, 1.0, -1.0
      %v657 = vsel %vm625, 1.0, -1.0
      %v658 = vsel %vm626, 1.0, -1.0
      %v659 = vsel %vm627, 1.0, -1.0
      %v660 = vsel %vm628, 1.0, -1.0
      %v661 = vsel %vm629, 1.0, -1.0
      %v662 = vsel %vm630, 1.0, -1.0
      %v663 = vsel %vm631, 1.0, -1.0
      %v664 = vsel %vm632, 1.0, -1.0
      %v665 = vsel %vm633, 1.0, -1.0
      %v666 = vsel %vm634, 1.0, -1.0
      %v667 = vsel %vm635, 1.0, -1.0
      %v668 = vsel %vm636, 1.0, -1.0
      %v669 = vsel %vm637, 1.0, -1.0
      %v670 = vsel %vm638, 1.0, -1.0
      %v671 = vsel %vm639, 1.0, -1.0
      %v672 = vsel %vm640, 1.0, -1.0
      %v673 = vsel %vm641, 1.0, -1.0
      %v674 = vsel %vm642, 1.0, -1.0
      %v675 = vsel %vm643, 1.0, -1.0
      %v676 = vsel %vm644, 1.0, -1.0
      %v677 = vsel %vm645, 1.0, -1.0
      %v678 = vsel %vm646, 1.0, -1.0
      %v679 = vand.u32 2147483647, %v583
      %v680 = vand.u32 2147483647, %v584
      %v681 = vand.u32 2147483647, %v585
      %v682 = vand.u32 2147483647, %v586
      %v683 = vand.u32 2147483647, %v587
      %v684 = vand.u32 2147483647, %v588
      %v685 = vand.u32 2147483647, %v589
      %v686 = vand.u32 2147483647, %v590
      %v687 = vand.u32 2147483647, %v591
      %v688 = vand.u32 2147483647, %v592
      %v689 = vand.u32 2147483647, %v593
      %v690 = vand.u32 2147483647, %v594
      %v691 = vand.u32 2147483647, %v595
      %v692 = vand.u32 2147483647, %v596
      %v693 = vand.u32 2147483647, %v597
      %v694 = vand.u32 2147483647, %v598
      %v695 = vand.u32 2147483647, %v599
      %v696 = vand.u32 2147483647, %v600
      %v697 = vand.u32 2147483647, %v601
      %v698 = vand.u32 2147483647, %v602
      %v699 = vand.u32 2147483647, %v603
      %v700 = vand.u32 2147483647, %v604
      %v701 = vand.u32 2147483647, %v605
      %v702 = vand.u32 2147483647, %v606
      %v703 = vand.u32 2147483647, %v607
      %v704 = vand.u32 2147483647, %v608
      %v705 = vand.u32 2147483647, %v609
      %v706 = vand.u32 2147483647, %v610
      %v707 = vand.u32 2147483647, %v611
      %v708 = vand.u32 2147483647, %v612
      %v709 = vand.u32 2147483647, %v613
      %v710 = vand.u32 2147483647, %v614
      %v711 = vmul.f32 %v679, 0.3275911
      %v712 = vmul.f32 %v680, 0.3275911
      %v713 = vmul.f32 %v681, 0.3275911
      %v714 = vmul.f32 %v682, 0.3275911
      %v715 = vmul.f32 %v683, 0.3275911
      %v716 = vmul.f32 %v684, 0.3275911
      %v717 = vmul.f32 %v685, 0.3275911
      %v718 = vmul.f32 %v686, 0.3275911
      %v719 = vmul.f32 %v687, 0.3275911
      %v720 = vmul.f32 %v688, 0.3275911
      %v721 = vmul.f32 %v689, 0.3275911
      %v722 = vmul.f32 %v690, 0.3275911
      %v723 = vmul.f32 %v691, 0.3275911
      %v724 = vmul.f32 %v692, 0.3275911
      %v725 = vmul.f32 %v693, 0.3275911
      %v726 = vmul.f32 %v694, 0.3275911
      %v727 = vmul.f32 %v695, 0.3275911
      %v728 = vmul.f32 %v696, 0.3275911
      %v729 = vmul.f32 %v697, 0.3275911
      %v730 = vmul.f32 %v698, 0.3275911
      %v731 = vmul.f32 %v699, 0.3275911
      %v732 = vmul.f32 %v700, 0.3275911
      %v733 = vmul.f32 %v701, 0.3275911
      %v734 = vmul.f32 %v702, 0.3275911
      %v735 = vmul.f32 %v703, 0.3275911
      %v736 = vmul.f32 %v704, 0.3275911
      %v737 = vmul.f32 %v705, 0.3275911
      %v738 = vmul.f32 %v706, 0.3275911
      %v739 = vmul.f32 %v707, 0.3275911
      %v740 = vmul.f32 %v708, 0.3275911
      %v741 = vmul.f32 %v709, 0.3275911
      %v742 = vmul.f32 %v710, 0.3275911
      %v743 = vadd.f32 %v711, 1.0
      %v744 = vadd.f32 %v712, 1.0
      %v745 = vadd.f32 %v713, 1.0
      %v746 = vadd.f32 %v714, 1.0
      %v747 = vadd.f32 %v715, 1.0
      %v748 = vadd.f32 %v716, 1.0
      %v749 = vadd.f32 %v717, 1.0
      %v750 = vadd.f32 %v718, 1.0
      %v751 = vadd.f32 %v719, 1.0
      %v752 = vadd.f32 %v720, 1.0
      %v753 = vadd.f32 %v721, 1.0
      %v754 = vadd.f32 %v722, 1.0
      %v755 = vadd.f32 %v723, 1.0
      %v756 = vadd.f32 %v724, 1.0
      %v757 = vadd.f32 %v725, 1.0
      %v758 = vadd.f32 %v726, 1.0
      %v759 = vadd.f32 %v727, 1.0
      %v760 = vadd.f32 %v728, 1.0
      %v761 = vadd.f32 %v729, 1.0
      %v762 = vadd.f32 %v730, 1.0
      %v763 = vadd.f32 %v731, 1.0
      %v764 = vadd.f32 %v732, 1.0
      %v765 = vadd.f32 %v733, 1.0
      %v766 = vadd.f32 %v734, 1.0
      %v767 = vadd.f32 %v735, 1.0
      %v768 = vadd.f32 %v736, 1.0
      %v769 = vadd.f32 %v737, 1.0
      %v770 = vadd.f32 %v738, 1.0
      %v771 = vadd.f32 %v739, 1.0
      %v772 = vadd.f32 %v740, 1.0
      %v773 = vadd.f32 %v741, 1.0
      %v774 = vadd.f32 %v742, 1.0
      %v775 = vrcp.pop %v743
      %v776 = vmul.f32 1.0, %v775
      %v777 = vrcp.pop %v744
      %v778 = vmul.f32 1.0, %v777
      %v779 = vrcp.pop %v745
      %v780 = vmul.f32 1.0, %v779
      %v781 = vrcp.pop %v746
      %v782 = vmul.f32 1.0, %v781
      %v783 = vrcp.pop %v747
      %v784 = vmul.f32 1.0, %v783
      %v785 = vrcp.pop %v748
      %v786 = vmul.f32 1.0, %v785
      %v787 = vrcp.pop %v749
      %v788 = vmul.f32 1.0, %v787
      %v789 = vrcp.pop %v750
      %v790 = vmul.f32 1.0, %v789
      %v791 = vrcp.pop %v751
      %v792 = vmul.f32 1.0, %v791
      %v793 = vrcp.pop %v752
      %v794 = vmul.f32 1.0, %v793
      %v795 = vrcp.pop %v753
      %v796 = vmul.f32 1.0, %v795
      %v797 = vrcp.pop %v754
      %v798 = vmul.f32 1.0, %v797
      %v799 = vrcp.pop %v755
      %v800 = vmul.f32 1.0, %v799
      %v801 = vrcp.pop %v756
      %v802 = vmul.f32 1.0, %v801
      %v803 = vrcp.pop %v757
      %v804 = vmul.f32 1.0, %v803
      %v805 = vrcp.pop %v758
      %v806 = vmul.f32 1.0, %v805
      %v807 = vrcp.pop %v759
      %v808 = vmul.f32 1.0, %v807
      %v809 = vrcp.pop %v760
      %v810 = vmul.f32 1.0, %v809
      %v811 = vrcp.pop %v761
      %v812 = vmul.f32 1.0, %v811
      %v813 = vrcp.pop %v762
      %v814 = vmul.f32 1.0, %v813
      %v815 = vrcp.pop %v763
      %v816 = vmul.f32 1.0, %v815
      %v817 = vrcp.pop %v764
      %v818 = vmul.f32 1.0, %v817
      %v819 = vrcp.pop %v765
      %v820 = vmul.f32 1.0, %v819
      %v821 = vrcp.pop %v766
      %v822 = vmul.f32 1.0, %v821
      %v823 = vrcp.pop %v767
      %v824 = vmul.f32 1.0, %v823
      %v825 = vrcp.pop %v768
      %v826 = vmul.f32 1.0, %v825
      %v827 = vrcp.pop %v769
      %v828 = vmul.f32 1.0, %v827
      %v829 = vrcp.pop %v770
      %v830 = vmul.f32 1.0, %v829
      %v831 = vrcp.pop %v771
      %v832 = vmul.f32 1.0, %v831
      %v833 = vrcp.pop %v772
      %v834 = vmul.f32 1.0, %v833
      %v835 = vrcp.pop %v773
      %v836 = vmul.f32 1.0, %v835
      %v837 = vrcp.pop %v774
      %v838 = vmul.f32 1.0, %v837
      %v839 = vmul.f32 %v776, 1.0614054
      %v840 = vmul.f32 %v778, 1.0614054
      %v841 = vmul.f32 %v780, 1.0614054
      %v842 = vmul.f32 %v782, 1.0614054
      %v843 = vmul.f32 %v784, 1.0614054
      %v844 = vmul.f32 %v786, 1.0614054
      %v845 = vmul.f32 %v788, 1.0614054
      %v846 = vmul.f32 %v790, 1.0614054
      %v847 = vmul.f32 %v792, 1.0614054
      %v848 = vmul.f32 %v794, 1.0614054
      %v849 = vmul.f32 %v796, 1.0614054
      %v850 = vmul.f32 %v798, 1.0614054
      %v851 = vmul.f32 %v800, 1.0614054
      %v852 = vmul.f32 %v802, 1.0614054
      %v853 = vmul.f32 %v804, 1.0614054
      %v854 = vmul.f32 %v806, 1.0614054
      %v855 = vmul.f32 %v808, 1.0614054
      %v856 = vmul.f32 %v810, 1.0614054
      %v857 = vmul.f32 %v812, 1.0614054
      %v858 = vmul.f32 %v814, 1.0614054
      %v859 = vmul.f32 %v816, 1.0614054
      %v860 = vmul.f32 %v818, 1.0614054
      %v861 = vmul.f32 %v820, 1.0614054
      %v862 = vmul.f32 %v822, 1.0614054
      %v863 = vmul.f32 %v824, 1.0614054
      %v864 = vmul.f32 %v826, 1.0614054
      %v865 = vmul.f32 %v828, 1.0614054
      %v866 = vmul.f32 %v830, 1.0614054
      %v867 = vmul.f32 %v832, 1.0614054
      %v868 = vmul.f32 %v834, 1.0614054
      %v869 = vmul.f32 %v836, 1.0614054
      %v870 = vmul.f32 %v838, 1.0614054
      %v871 = vadd.f32 %v839, -1.4531521
      %v872 = vadd.f32 %v840, -1.4531521
      %v873 = vadd.f32 %v841, -1.4531521
      %v874 = vadd.f32 %v842, -1.4531521
      %v875 = vadd.f32 %v843, -1.4531521
      %v876 = vadd.f32 %v844, -1.4531521
      %v877 = vadd.f32 %v845, -1.4531521
      %v878 = vadd.f32 %v846, -1.4531521
      %v879 = vadd.f32 %v847, -1.4531521
      %v880 = vadd.f32 %v848, -1.4531521
      %v881 = vadd.f32 %v849, -1.4531521
      %v882 = vadd.f32 %v850, -1.4531521
      %v883 = vadd.f32 %v851, -1.4531521
      %v884 = vadd.f32 %v852, -1.4531521
      %v885 = vadd.f32 %v853, -1.4531521
      %v886 = vadd.f32 %v854, -1.4531521
      %v887 = vadd.f32 %v855, -1.4531521
      %v888 = vadd.f32 %v856, -1.4531521
      %v889 = vadd.f32 %v857, -1.4531521
      %v890 = vadd.f32 %v858, -1.4531521
      %v891 = vadd.f32 %v859, -1.4531521
      %v892 = vadd.f32 %v860, -1.4531521
      %v893 = vadd.f32 %v861, -1.4531521
      %v894 = vadd.f32 %v862, -1.4531521
      %v895 = vadd.f32 %v863, -1.4531521
      %v896 = vadd.f32 %v864, -1.4531521
      %v897 = vadd.f32 %v865, -1.4531521
      %v898 = vadd.f32 %v866, -1.4531521
      %v899 = vadd.f32 %v867, -1.4531521
      %v900 = vadd.f32 %v868, -1.4531521
      %v901 = vadd.f32 %v869, -1.4531521
      %v902 = vadd.f32 %v870, -1.4531521
      %v903 = vmul.f32 %v871, %v776
      %v904 = vmul.f32 %v872, %v778
      %v905 = vmul.f32 %v873, %v780
      %v906 = vmul.f32 %v874, %v782
      %v907 = vmul.f32 %v875, %v784
      %v908 = vmul.f32 %v876, %v786
      %v909 = vmul.f32 %v877, %v788
      %v910 = vmul.f32 %v878, %v790
      %v911 = vmul.f32 %v879, %v792
      %v912 = vmul.f32 %v880, %v794
      %v913 = vmul.f32 %v881, %v796
      %v914 = vmul.f32 %v882, %v798
      %v915 = vmul.f32 %v883, %v800
      %v916 = vmul.f32 %v884, %v802
      %v917 = vmul.f32 %v885, %v804
      %v918 = vmul.f32 %v886, %v806
      %v919 = vmul.f32 %v887, %v808
      %v920 = vmul.f32 %v888, %v810
      %v921 = vmul.f32 %v889, %v812
      %v922 = vmul.f32 %v890, %v814
      %v923 = vmul.f32 %v891, %v816
      %v924 = vmul.f32 %v892, %v818
      %v925 = vmul.f32 %v893, %v820
      %v926 = vmul.f32 %v894, %v822
      %v927 = vmul.f32 %v895, %v824
      %v928 = vmul.f32 %v896, %v826
      %v929 = vmul.f32 %v897, %v828
      %v930 = vmul.f32 %v898, %v830
      %v931 = vmul.f32 %v899, %v832
      %v932 = vmul.f32 %v900, %v834
      %v933 = vmul.f32 %v901, %v836
      %v934 = vmul.f32 %v902, %v838
      %v935 = vadd.f32 %v903, 1.4214138
      %v936 = vadd.f32 %v904, 1.4214138
      %v937 = vadd.f32 %v905, 1.4214138
      %v938 = vadd.f32 %v906, 1.4214138
      %v939 = vadd.f32 %v907, 1.4214138
      %v940 = vadd.f32 %v908, 1.4214138
      %v941 = vadd.f32 %v909, 1.4214138
      %v942 = vadd.f32 %v910, 1.4214138
      %v943 = vadd.f32 %v911, 1.4214138
      %v944 = vadd.f32 %v912, 1.4214138
      %v945 = vadd.f32 %v913, 1.4214138
      %v946 = vadd.f32 %v914, 1.4214138
      %v947 = vadd.f32 %v915, 1.4214138
      %v948 = vadd.f32 %v916, 1.4214138
      %v949 = vadd.f32 %v917, 1.4214138
      %v950 = vadd.f32 %v918, 1.4214138
      %v951 = vadd.f32 %v919, 1.4214138
      %v952 = vadd.f32 %v920, 1.4214138
      %v953 = vadd.f32 %v921, 1.4214138
      %v954 = vadd.f32 %v922, 1.4214138
      %v955 = vadd.f32 %v923, 1.4214138
      %v956 = vadd.f32 %v924, 1.4214138
      %v957 = vadd.f32 %v925, 1.4214138
      %v958 = vadd.f32 %v926, 1.4214138
      %v959 = vadd.f32 %v927, 1.4214138
      %v960 = vadd.f32 %v928, 1.4214138
      %v961 = vadd.f32 %v929, 1.4214138
      %v962 = vadd.f32 %v930, 1.4214138
      %v963 = vadd.f32 %v931, 1.4214138
      %v964 = vadd.f32 %v932, 1.4214138
      %v965 = vadd.f32 %v933, 1.4214138
      %v966 = vadd.f32 %v934, 1.4214138
      %v967 = vmul.f32 %v935, %v776
      %v968 = vmul.f32 %v936, %v778
      %v969 = vmul.f32 %v937, %v780
      %v970 = vmul.f32 %v938, %v782
      %v971 = vmul.f32 %v939, %v784
      %v972 = vmul.f32 %v940, %v786
      %v973 = vmul.f32 %v941, %v788
      %v974 = vmul.f32 %v942, %v790
      %v975 = vmul.f32 %v943, %v792
      %v976 = vmul.f32 %v944, %v794
      %v977 = vmul.f32 %v945, %v796
      %v978 = vmul.f32 %v946, %v798
      %v979 = vmul.f32 %v947, %v800
      %v980 = vmul.f32 %v948, %v802
      %v981 = vmul.f32 %v949, %v804
      %v982 = vmul.f32 %v950, %v806
      %v983 = vmul.f32 %v951, %v808
      %v984 = vmul.f32 %v952, %v810
      %v985 = vmul.f32 %v953, %v812
      %v986 = vmul.f32 %v954, %v814
      %v987 = vmul.f32 %v955, %v816
      %v988 = vmul.f32 %v956, %v818
      %v989 = vmul.f32 %v957, %v820
      %v990 = vmul.f32 %v958, %v822
      %v991 = vmul.f32 %v959, %v824
      %v992 = vmul.f32 %v960, %v826
      %v993 = vmul.f32 %v961, %v828
      %v994 = vmul.f32 %v962, %v830
      %v995 = vmul.f32 %v963, %v832
      %v996 = vmul.f32 %v964, %v834
      %v997 = vmul.f32 %v965, %v836
      %v998 = vmul.f32 %v966, %v838
      %v999 = vadd.f32 %v967, -0.28449672
      %v1000 = vadd.f32 %v968, -0.28449672
      %v1001 = vadd.f32 %v969, -0.28449672
      %v1002 = vadd.f32 %v970, -0.28449672
      %v1003 = vadd.f32 %v971, -0.28449672
      %v1004 = vadd.f32 %v972, -0.28449672
      %v1005 = vadd.f32 %v973, -0.28449672
      %v1006 = vadd.f32 %v974, -0.28449672
      %v1007 = vadd.f32 %v975, -0.28449672
      %v1008 = vadd.f32 %v976, -0.28449672
      %v1009 = vadd.f32 %v977, -0.28449672
      %v1010 = vadd.f32 %v978, -0.28449672
      %v1011 = vadd.f32 %v979, -0.28449672
      %v1012 = vadd.f32 %v980, -0.28449672
      %v1013 = vadd.f32 %v981, -0.28449672
      %v1014 = vadd.f32 %v982, -0.28449672
      %v1015 = vadd.f32 %v983, -0.28449672
      %v1016 = vadd.f32 %v984, -0.28449672
      %v1017 = vadd.f32 %v985, -0.28449672
      %v1018 = vadd.f32 %v986, -0.28449672
      %v1019 = vadd.f32 %v987, -0.28449672
      %v1020 = vadd.f32 %v988, -0.28449672
      %v1021 = vadd.f32 %v989, -0.28449672
      %v1022 = vadd.f32 %v990, -0.28449672
      %v1023 = vadd.f32 %v991, -0.28449672
      %v1024 = vadd.f32 %v992, -0.28449672
      %v1025 = vadd.f32 %v993, -0.28449672
      %v1026 = vadd.f32 %v994, -0.28449672
      %v1027 = vadd.f32 %v995, -0.28449672
      %v1028 = vadd.f32 %v996, -0.28449672
      %v1029 = vadd.f32 %v997, -0.28449672
      %v1030 = vadd.f32 %v998, -0.28449672
      %v1031 = vmul.f32 %v999, %v776
      %v1032 = vmul.f32 %v1000, %v778
      %v1033 = vmul.f32 %v1001, %v780
      %v1034 = vmul.f32 %v1002, %v782
      %v1035 = vmul.f32 %v1003, %v784
      %v1036 = vmul.f32 %v1004, %v786
      %v1037 = vmul.f32 %v1005, %v788
      %v1038 = vmul.f32 %v1006, %v790
      %v1039 = vmul.f32 %v1007, %v792
      %v1040 = vmul.f32 %v1008, %v794
      %v1041 = vmul.f32 %v1009, %v796
      %v1042 = vmul.f32 %v1010, %v798
      %v1043 = vmul.f32 %v1011, %v800
      %v1044 = vmul.f32 %v1012, %v802
      %v1045 = vmul.f32 %v1013, %v804
      %v1046 = vmul.f32 %v1014, %v806
      %v1047 = vmul.f32 %v1015, %v808
      %v1048 = vmul.f32 %v1016, %v810
      %v1049 = vmul.f32 %v1017, %v812
      %v1050 = vmul.f32 %v1018, %v814
      %v1051 = vmul.f32 %v1019, %v816
      %v1052 = vmul.f32 %v1020, %v818
      %v1053 = vmul.f32 %v1021, %v820
      %v1054 = vmul.f32 %v1022, %v822
      %v1055 = vmul.f32 %v1023, %v824
      %v1056 = vmul.f32 %v1024, %v826
      %v1057 = vmul.f32 %v1025, %v828
      %v1058 = vmul.f32 %v1026, %v830
      %v1059 = vmul.f32 %v1027, %v832
      %v1060 = vmul.f32 %v1028, %v834
      %v1061 = vmul.f32 %v1029, %v836
      %v1062 = vmul.f32 %v1030, %v838
      %v1063 = vadd.f32 %v1031, 0.2548296
      %v1064 = vadd.f32 %v1032, 0.2548296
      %v1065 = vadd.f32 %v1033, 0.2548296
      %v1066 = vadd.f32 %v1034, 0.2548296
      %v1067 = vadd.f32 %v1035, 0.2548296
      %v1068 = vadd.f32 %v1036, 0.2548296
      %v1069 = vadd.f32 %v1037, 0.2548296
      %v1070 = vadd.f32 %v1038, 0.2548296
      %v1071 = vadd.f32 %v1039, 0.2548296
      %v1072 = vadd.f32 %v1040, 0.2548296
      %v1073 = vadd.f32 %v1041, 0.2548296
      %v1074 = vadd.f32 %v1042, 0.2548296
      %v1075 = vadd.f32 %v1043, 0.2548296
      %v1076 = vadd.f32 %v1044, 0.2548296
      %v1077 = vadd.f32 %v1045, 0.2548296
      %v1078 = vadd.f32 %v1046, 0.2548296
      %v1079 = vadd.f32 %v1047, 0.2548296
      %v1080 = vadd.f32 %v1048, 0.2548296
      %v1081 = vadd.f32 %v1049, 0.2548296
      %v1082 = vadd.f32 %v1050, 0.2548296
      %v1083 = vadd.f32 %v1051, 0.2548296
      %v1084 = vadd.f32 %v1052, 0.2548296
      %v1085 = vadd.f32 %v1053, 0.2548296
      %v1086 = vadd.f32 %v1054, 0.2548296
      %v1087 = vadd.f32 %v1055, 0.2548296
      %v1088 = vadd.f32 %v1056, 0.2548296
      %v1089 = vadd.f32 %v1057, 0.2548296
      %v1090 = vadd.f32 %v1058, 0.2548296
      %v1091 = vadd.f32 %v1059, 0.2548296
      %v1092 = vadd.f32 %v1060, 0.2548296
      %v1093 = vadd.f32 %v1061, 0.2548296
      %v1094 = vadd.f32 %v1062, 0.2548296
      %v1095 = vmul.f32 %v1063, %v776
      %v1096 = vmul.f32 %v1064, %v778
      %v1097 = vmul.f32 %v1065, %v780
      %v1098 = vmul.f32 %v1066, %v782
      %v1099 = vmul.f32 %v1067, %v784
      %v1100 = vmul.f32 %v1068, %v786
      %v1101 = vmul.f32 %v1069, %v788
      %v1102 = vmul.f32 %v1070, %v790
      %v1103 = vmul.f32 %v1071, %v792
      %v1104 = vmul.f32 %v1072, %v794
      %v1105 = vmul.f32 %v1073, %v796
      %v1106 = vmul.f32 %v1074, %v798
      %v1107 = vmul.f32 %v1075, %v800
      %v1108 = vmul.f32 %v1076, %v802
      %v1109 = vmul.f32 %v1077, %v804
      %v1110 = vmul.f32 %v1078, %v806
      %v1111 = vmul.f32 %v1079, %v808
      %v1112 = vmul.f32 %v1080, %v810
      %v1113 = vmul.f32 %v1081, %v812
      %v1114 = vmul.f32 %v1082, %v814
      %v1115 = vmul.f32 %v1083, %v816
      %v1116 = vmul.f32 %v1084, %v818
      %v1117 = vmul.f32 %v1085, %v820
      %v1118 = vmul.f32 %v1086, %v822
      %v1119 = vmul.f32 %v1087, %v824
      %v1120 = vmul.f32 %v1088, %v826
      %v1121 = vmul.f32 %v1089, %v828
      %v1122 = vmul.f32 %v1090, %v830
      %v1123 = vmul.f32 %v1091, %v832
      %v1124 = vmul.f32 %v1092, %v834
      %v1125 = vmul.f32 %v1093, %v836
      %v1126 = vmul.f32 %v1094, %v838
      %v1127 = vsub.f32 0.0, %v679
      %v1128 = vsub.f32 0.0, %v680
      %v1129 = vsub.f32 0.0, %v681
      %v1130 = vsub.f32 0.0, %v682
      %v1131 = vsub.f32 0.0, %v683
      %v1132 = vsub.f32 0.0, %v684
      %v1133 = vsub.f32 0.0, %v685
      %v1134 = vsub.f32 0.0, %v686
      %v1135 = vsub.f32 0.0, %v687
      %v1136 = vsub.f32 0.0, %v688
      %v1137 = vsub.f32 0.0, %v689
      %v1138 = vsub.f32 0.0, %v690
      %v1139 = vsub.f32 0.0, %v691
      %v1140 = vsub.f32 0.0, %v692
      %v1141 = vsub.f32 0.0, %v693
      %v1142 = vsub.f32 0.0, %v694
      %v1143 = vsub.f32 0.0, %v695
      %v1144 = vsub.f32 0.0, %v696
      %v1145 = vsub.f32 0.0, %v697
      %v1146 = vsub.f32 0.0, %v698
      %v1147 = vsub.f32 0.0, %v699
      %v1148 = vsub.f32 0.0, %v700
      %v1149 = vsub.f32 0.0, %v701
      %v1150 = vsub.f32 0.0, %v702
      %v1151 = vsub.f32 0.0, %v703
      %v1152 = vsub.f32 0.0, %v704
      %v1153 = vsub.f32 0.0, %v705
      %v1154 = vsub.f32 0.0, %v706
      %v1155 = vsub.f32 0.0, %v707
      %v1156 = vsub.f32 0.0, %v708
      %v1157 = vsub.f32 0.0, %v709
      %v1158 = vsub.f32 0.0, %v710
      %v1159 = vmul.f32 %v1127, %v679
      %v1160 = vmul.f32 %v1128, %v680
      %v1161 = vmul.f32 %v1129, %v681
      %v1162 = vmul.f32 %v1130, %v682
      %v1163 = vmul.f32 %v1131, %v683
      %v1164 = vmul.f32 %v1132, %v684
      %v1165 = vmul.f32 %v1133, %v685
      %v1166 = vmul.f32 %v1134, %v686
      %v1167 = vmul.f32 %v1135, %v687
      %v1168 = vmul.f32 %v1136, %v688
      %v1169 = vmul.f32 %v1137, %v689
      %v1170 = vmul.f32 %v1138, %v690
      %v1171 = vmul.f32 %v1139, %v691
      %v1172 = vmul.f32 %v1140, %v692
      %v1173 = vmul.f32 %v1141, %v693
      %v1174 = vmul.f32 %v1142, %v694
      %v1175 = vmul.f32 %v1143, %v695
      %v1176 = vmul.f32 %v1144, %v696
      %v1177 = vmul.f32 %v1145, %v697
      %v1178 = vmul.f32 %v1146, %v698
      %v1179 = vmul.f32 %v1147, %v699
      %v1180 = vmul.f32 %v1148, %v700
      %v1181 = vmul.f32 %v1149, %v701
      %v1182 = vmul.f32 %v1150, %v702
      %v1183 = vmul.f32 %v1151, %v703
      %v1184 = vmul.f32 %v1152, %v704
      %v1185 = vmul.f32 %v1153, %v705
      %v1186 = vmul.f32 %v1154, %v706
      %v1187 = vmul.f32 %v1155, %v707
      %v1188 = vmul.f32 %v1156, %v708
      %v1189 = vmul.f32 %v1157, %v709
      %v1190 = vmul.f32 %v1158, %v710
      %v1191 = vmul.f32 %v1159, 1.442695
      %v1192 = vpow.pop %v1191
      %v1193 = vmul.f32 %v1160, 1.442695
      %v1194 = vpow.pop %v1193
      %v1195 = vmul.f32 %v1161, 1.442695
      %v1196 = vpow.pop %v1195
      %v1197 = vmul.f32 %v1162, 1.442695
      %v1198 = vpow.pop %v1197
      %v1199 = vmul.f32 %v1163, 1.442695
      %v1200 = vpow.pop %v1199
      %v1201 = vmul.f32 %v1164, 1.442695
      %v1202 = vpow.pop %v1201
      %v1203 = vmul.f32 %v1165, 1.442695
      %v1204 = vpow.pop %v1203
      %v1205 = vmul.f32 %v1166, 1.442695
      %v1206 = vpow.pop %v1205
      %v1207 = vmul.f32 %v1167, 1.442695
      %v1208 = vpow.pop %v1207
      %v1209 = vmul.f32 %v1168, 1.442695
      %v1210 = vpow.pop %v1209
      %v1211 = vmul.f32 %v1169, 1.442695
      %v1212 = vpow.pop %v1211
      %v1213 = vmul.f32 %v1170, 1.442695
      %v1214 = vpow.pop %v1213
      %v1215 = vmul.f32 %v1171, 1.442695
      %v1216 = vpow.pop %v1215
      %v1217 = vmul.f32 %v1172, 1.442695
      %v1218 = vpow.pop %v1217
      %v1219 = vmul.f32 %v1173, 1.442695
      %v1220 = vpow.pop %v1219
      %v1221 = vmul.f32 %v1174, 1.442695
      %v1222 = vpow.pop %v1221
      %v1223 = vmul.f32 %v1175, 1.442695
      %v1224 = vpow.pop %v1223
      %v1225 = vmul.f32 %v1176, 1.442695
      %v1226 = vpow.pop %v1225
      %v1227 = vmul.f32 %v1177, 1.442695
      %v1228 = vpow.pop %v1227
      %v1229 = vmul.f32 %v1178, 1.442695
      %v1230 = vpow.pop %v1229
      %v1231 = vmul.f32 %v1179, 1.442695
      %v1232 = vpow.pop %v1231
      %v1233 = vmul.f32 %v1180, 1.442695
      %v1234 = vpow.pop %v1233
      %v1235 = vmul.f32 %v1181, 1.442695
      %v1236 = vpow.pop %v1235
      %v1237 = vmul.f32 %v1182, 1.442695
      %v1238 = vpow.pop %v1237
      %v1239 = vmul.f32 %v1183, 1.442695
      %v1240 = vpow.pop %v1239
      %v1241 = vmul.f32 %v1184, 1.442695
      %v1242 = vpow.pop %v1241
      %v1243 = vmul.f32 %v1185, 1.442695
      %v1244 = vpow.pop %v1243
      %v1245 = vmul.f32 %v1186, 1.442695
      %v1246 = vpow.pop %v1245
      %v1247 = vmul.f32 %v1187, 1.442695
      %v1248 = vpow.pop %v1247
      %v1249 = vmul.f32 %v1188, 1.442695
      %v1250 = vpow.pop %v1249
      %v1251 = vmul.f32 %v1189, 1.442695
      %v1252 = vpow.pop %v1251
      %v1253 = vmul.f32 %v1190, 1.442695
      %v1254 = vpow.pop %v1253
      %v1255 = vmul.f32 %v1095, %v1192
      %v1256 = vmul.f32 %v1096, %v1194
      %v1257 = vmul.f32 %v1097, %v1196
      %v1258 = vmul.f32 %v1098, %v1198
      %v1259 = vmul.f32 %v1099, %v1200
      %v1260 = vmul.f32 %v1100, %v1202
      %v1261 = vmul.f32 %v1101, %v1204
      %v1262 = vmul.f32 %v1102, %v1206
      %v1263 = vmul.f32 %v1103, %v1208
      %v1264 = vmul.f32 %v1104, %v1210
      %v1265 = vmul.f32 %v1105, %v1212
      %v1266 = vmul.f32 %v1106, %v1214
      %v1267 = vmul.f32 %v1107, %v1216
      %v1268 = vmul.f32 %v1108, %v1218
      %v1269 = vmul.f32 %v1109, %v1220
      %v1270 = vmul.f32 %v1110, %v1222
      %v1271 = vmul.f32 %v1111, %v1224
      %v1272 = vmul.f32 %v1112, %v1226
      %v1273 = vmul.f32 %v1113, %v1228
      %v1274 = vmul.f32 %v1114, %v1230
      %v1275 = vmul.f32 %v1115, %v1232
      %v1276 = vmul.f32 %v1116, %v1234
      %v1277 = vmul.f32 %v1117, %v1236
      %v1278 = vmul.f32 %v1118, %v1238
      %v1279 = vmul.f32 %v1119, %v1240
      %v1280 = vmul.f32 %v1120, %v1242
      %v1281 = vmul.f32 %v1121, %v1244
      %v1282 = vmul.f32 %v1122, %v1246
      %v1283 = vmul.f32 %v1123, %v1248
      %v1284 = vmul.f32 %v1124, %v1250
      %v1285 = vmul.f32 %v1125, %v1252
      %v1286 = vmul.f32 %v1126, %v1254
      %v1287 = vsub.f32 1.0, %v1255
      %v1288 = vsub.f32 1.0, %v1256
      %v1289 = vsub.f32 1.0, %v1257
      %v1290 = vsub.f32 1.0, %v1258
      %v1291 = vsub.f32 1.0, %v1259
      %v1292 = vsub.f32 1.0, %v1260
      %v1293 = vsub.f32 1.0, %v1261
      %v1294 = vsub.f32 1.0, %v1262
      %v1295 = vsub.f32 1.0, %v1263
      %v1296 = vsub.f32 1.0, %v1264
      %v1297 = vsub.f32 1.0, %v1265
      %v1298 = vsub.f32 1.0, %v1266
      %v1299 = vsub.f32 1.0, %v1267
      %v1300 = vsub.f32 1.0, %v1268
      %v1301 = vsub.f32 1.0, %v1269
      %v1302 = vsub.f32 1.0, %v1270
      %v1303 = vsub.f32 1.0, %v1271
      %v1304 = vsub.f32 1.0, %v1272
      %v1305 = vsub.f32 1.0, %v1273
      %v1306 = vsub.f32 1.0, %v1274
      %v1307 = vsub.f32 1.0, %v1275
      %v1308 = vsub.f32 1.0, %v1276
      %v1309 = vsub.f32 1.0, %v1277
      %v1310 = vsub.f32 1.0, %v1278
      %v1311 = vsub.f32 1.0, %v1279
      %v1312 = vsub.f32 1.0, %v1280
      %v1313 = vsub.f32 1.0, %v1281
      %v1314 = vsub.f32 1.0, %v1282
      %v1315 = vsub.f32 1.0, %v1283
      %v1316 = vsub.f32 1.0, %v1284
      %v1317 = vsub.f32 1.0, %v1285
      %v1318 = vsub.f32 1.0, %v1286
      %v1319 = vmul.f32 %v647, %v1287
      %v1320 = vmul.f32 %v648, %v1288
      %v1321 = vmul.f32 %v649, %v1289
      %v1322 = vmul.f32 %v650, %v1290
      %v1323 = vmul.f32 %v651, %v1291
      %v1324 = vmul.f32 %v652, %v1292
      %v1325 = vmul.f32 %v653, %v1293
      %v1326 = vmul.f32 %v654, %v1294
      %v1327 = vmul.f32 %v655, %v1295
      %v1328 = vmul.f32 %v656, %v1296
      %v1329 = vmul.f32 %v657, %v1297
      %v1330 = vmul.f32 %v658, %v1298
      %v1331 = vmul.f32 %v659, %v1299
      %v1332 = vmul.f32 %v660, %v1300
      %v1333 = vmul.f32 %v661, %v1301
      %v1334 = vmul.f32 %v662, %v1302
      %v1335 = vmul.f32 %v663, %v1303
      %v1336 = vmul.f32 %v664, %v1304
      %v1337 = vmul.f32 %v665, %v1305
      %v1338 = vmul.f32 %v666, %v1306
      %v1339 = vmul.f32 %v667, %v1307
      %v1340 = vmul.f32 %v668, %v1308
      %v1341 = vmul.f32 %v669, %v1309
      %v1342 = vmul.f32 %v670, %v1310
      %v1343 = vmul.f32 %v671, %v1311
      %v1344 = vmul.f32 %v672, %v1312
      %v1345 = vmul.f32 %v673, %v1313
      %v1346 = vmul.f32 %v674, %v1314
      %v1347 = vmul.f32 %v675, %v1315
      %v1348 = vmul.f32 %v676, %v1316
      %v1349 = vmul.f32 %v677, %v1317
      %v1350 = vmul.f32 %v678, %v1318
      %v1351 = vadd.f32 %v1319, 1.0
      %v1352 = vadd.f32 %v1320, 1.0
      %v1353 = vadd.f32 %v1321, 1.0
      %v1354 = vadd.f32 %v1322, 1.0
      %v1355 = vadd.f32 %v1323, 1.0
      %v1356 = vadd.f32 %v1324, 1.0
      %v1357 = vadd.f32 %v1325, 1.0
      %v1358 = vadd.f32 %v1326, 1.0
      %v1359 = vadd.f32 %v1327, 1.0
      %v1360 = vadd.f32 %v1328, 1.0
      %v1361 = vadd.f32 %v1329, 1.0
      %v1362 = vadd.f32 %v1330, 1.0
      %v1363 = vadd.f32 %v1331, 1.0
      %v1364 = vadd.f32 %v1332, 1.0
      %v1365 = vadd.f32 %v1333, 1.0
      %v1366 = vadd.f32 %v1334, 1.0
      %v1367 = vadd.f32 %v1335, 1.0
      %v1368 = vadd.f32 %v1336, 1.0
      %v1369 = vadd.f32 %v1337, 1.0
      %v1370 = vadd.f32 %v1338, 1.0
      %v1371 = vadd.f32 %v1339, 1.0
      %v1372 = vadd.f32 %v1340, 1.0
      %v1373 = vadd.f32 %v1341, 1.0
      %v1374 = vadd.f32 %v1342, 1.0
      %v1375 = vadd.f32 %v1343, 1.0
      %v1376 = vadd.f32 %v1344, 1.0
      %v1377 = vadd.f32 %v1345, 1.0
      %v1378 = vadd.f32 %v1346, 1.0
      %v1379 = vadd.f32 %v1347, 1.0
      %v1380 = vadd.f32 %v1348, 1.0
      %v1381 = vadd.f32 %v1349, 1.0
      %v1382 = vadd.f32 %v1350, 1.0
      %v1383 = vmul.f32 %v551, %v1351
      %v1384 = vmul.f32 %v552, %v1352
      %v1385 = vmul.f32 %v553, %v1353
      %v1386 = vmul.f32 %v554, %v1354
      %v1387 = vmul.f32 %v555, %v1355
      %v1388 = vmul.f32 %v556, %v1356
      %v1389 = vmul.f32 %v557, %v1357
      %v1390 = vmul.f32 %v558, %v1358
      %v1391 = vmul.f32 %v559, %v1359
      %v1392 = vmul.f32 %v560, %v1360
      %v1393 = vmul.f32 %v561, %v1361
      %v1394 = vmul.f32 %v562, %v1362
      %v1395 = vmul.f32 %v563, %v1363
      %v1396 = vmul.f32 %v564, %v1364
      %v1397 = vmul.f32 %v565, %v1365
      %v1398 = vmul.f32 %v566, %v1366
      %v1399 = vmul.f32 %v567, %v1367
      %v1400 = vmul.f32 %v568, %v1368
      %v1401 = vmul.f32 %v569, %v1369
      %v1402 = vmul.f32 %v570, %v1370
      %v1403 = vmul.f32 %v571, %v1371
      %v1404 = vmul.f32 %v572, %v1372
      %v1405 = vmul.f32 %v573, %v1373
      %v1406 = vmul.f32 %v574, %v1374
      %v1407 = vmul.f32 %v575, %v1375
      %v1408 = vmul.f32 %v576, %v1376
      %v1409 = vmul.f32 %v577, %v1377
      %v1410 = vmul.f32 %v578, %v1378
      %v1411 = vmul.f32 %v579, %v1379
      %v1412 = vmul.f32 %v580, %v1380
      %v1413 = vmul.f32 %v581, %v1381
      %v1414 = vmul.f32 %v582, %v1382
      %v1415 = vld [vmem:[%s3] sm:$0x1]
      %v1416 = vld [vmem:[#allocation2] sm:$0x1]
      %1418 = vset.pattern.permute.xlu0 0
      %1419 = vperm.xlu0 %1418, %v1416
      %v1420 = vpop.permute.xlu0 %1419
      %v1422 = vlaneseq
      %v1423 = vshrl.u32 %v1422, 7
      %v1424 = vsub.s32 0, %v1423
      %v1425 = vrot.slane %v1420, %v1424
      %1426 = vmatprep.subr.mxu0 %v1384
      %1427 = vmatpush1.msra.mxu0 %v1383
      %1428 = vmatprep.subr.mxu0 %v1386
      %1429 = vmatpush1.msra.mxu0 %v1385
      %1430 = vmatprep.subr.mxu0 %v1388
      %1431 = vmatpush1.msra.mxu0 %v1387
      %1432 = vmatprep.subr.mxu0 %v1390
      %1433 = vmatpush1.msra.mxu0 %v1389
      %1434 = vmatprep.subr.mxu0 %v1392
      %1435 = vmatpush1.msra.mxu0 %v1391
      %1436 = vmatprep.subr.mxu0 %v1394
      %1437 = vmatpush1.msra.mxu0 %v1393
      %1438 = vmatprep.subr.mxu0 %v1396
      %1439 = vmatpush1.msra.mxu0 %v1395
      %1440 = vmatprep.subr.mxu0 %v1398
      %1441 = vmatpush1.msra.mxu0 %v1397
      %1442 = vmatprep.subr.mxu0 %v1400
      %1443 = vmatpush1.msra.mxu0 %v1399
      %1444 = vmatprep.subr.mxu0 %v1402
      %1445 = vmatpush1.msra.mxu0 %v1401
      %1446 = vmatprep.subr.mxu0 %v1404
      %1447 = vmatpush1.msra.mxu0 %v1403
      %1448 = vmatprep.subr.mxu0 %v1406
      %1449 = vmatpush1.msra.mxu0 %v1405
      %1450 = vmatprep.subr.mxu0 %v1408
      %1451 = vmatpush1.msra.mxu0 %v1407
      %1452 = vmatprep.subr.mxu0 %v1410
      %1453 = vmatpush1.msra.mxu0 %v1409
      %1454 = vmatprep.subr.mxu0 %v1412
      %1455 = vmatpush1.msra.mxu0 %v1411
      %1456 = vmatprep.subr.mxu0 %v1414
      %1457 = vmatpush1.msra.mxu0 %v1413
      %1458 = vmatprep.subr.mxu0 0.0
      %1459 = vmatpush1.msra.mxu0 0.0
      %1460 = vmatprep.subr.mxu0 0.0
      %1461 = vmatpush1.msra.mxu0 0.0
      %1462 = vmatprep.subr.mxu0 0.0
      %1463 = vmatpush1.msra.mxu0 0.0
      %1464 = vmatprep.subr.mxu0 0.0
      %1465 = vmatpush1.msra.mxu0 0.0
      %1466 = vmatprep.subr.mxu0 0.0
      %1467 = vmatpush1.msra.mxu0 0.0
      %1468 = vmatprep.subr.mxu0 0.0
      %1469 = vmatpush1.msra.mxu0 0.0
      %1470 = vmatprep.subr.mxu0 0.0
      %1471 = vmatpush1.msra.mxu0 0.0
      %1472 = vmatprep.subr.mxu0 0.0
      %1473 = vmatpush1.msra.mxu0 0.0
      %1474 = vmatprep.subr.mxu0 0.0
      %1475 = vmatpush1.msra.mxu0 0.0
      %1476 = vmatprep.subr.mxu0 0.0
      %1477 = vmatpush1.msra.mxu0 0.0
      %1478 = vmatprep.subr.mxu0 0.0
      %1479 = vmatpush1.msra.mxu0 0.0
      %1480 = vmatprep.subr.mxu0 0.0
      %1481 = vmatpush1.msra.mxu0 0.0
      %1482 = vmatprep.subr.mxu0 0.0
      %1483 = vmatpush1.msra.mxu0 0.0
      %1484 = vmatprep.subr.mxu0 0.0
      %1485 = vmatpush1.msra.mxu0 0.0
      %1486 = vmatprep.subr.mxu0 0.0
      %1487 = vmatpush1.msra.mxu0 0.0
      %1488 = vmatprep.subr.mxu0 0.0
      %1489 = vmatpush1.msra.mxu0 0.0
      %1490 = vmatprep.mubr.f32.mxu0 0.0
      %1491 = vmatmul.mubr.f32.gmra.mrb[0].mxu0 %v1415
      %v1492 = vpop.f32.mrb[0].mxu0
      %v1493 = vadd.f32 %v1425, %v1492
      %v1494 = vpop.f32.mrb[0].mxu0
      %v1495 = vadd.f32 %v1425, %v1494
      %1496 = vdwg.mxu0
      %v1499 = vcombine.low %v1493, %v1495
      %v1501 = vunpack.c.l.s4 1966171168
      %v1502 = vunpack.c.0.s8 %v1501
      %v1503 = vlaneseq
      %v1504 = vshrl.u32 %v1503, 7
      %v1505 = vsub.s32 %v1502, %v1504
      %v1506 = vrot.slane %v1499, %v1505
      %v1508 = vunpack.c.l.s4 1966171168
      %v1509 = vunpack.c.0.s8 %v1508
      %v1510 = vlaneseq
      %v1511 = vshrl.u32 %v1510, 7
      %v1512 = vsub.s32 %v1509, %v1511
      %v1513 = vrot.slane %v1506, %v1512
      %v1515 = vlaneseq
      %vm1516 = vcmp.ge.s32.totalorder %v1515, 0
      %vm1517 = vcmp.lt.s32.totalorder %v1515, 256
      %vm1518 = vmand %vm1516, %vm1517
      %1519 = vst.msk [vmem:[%s224] sm:$0x3] %vm1518, %v1513
      %p1520 = scmp.lt.s32.totalorder %s18, 1
      %s1521 = scalar_select %p1520, %s18, 1
      %s1522 = smul.addr %s1521, 2
      %s1523 = scalar_lea.vmem %s5, %s1522
      // Predicated region
      $region41: #{_lambda_.19} parent=39 // pred_check
        %p1524 = pneg %p146
      $region42: #{_lambda_.19} parent=39 // pred_check_branch
        %1526 = sbr.rel (%p1524) target = $region44
      $region43: #{_lambda_.19} parent=39 // pred_region
        _
      $region44: #{_lambda_.19} parent=39 // pred_fallthru
        _
    $region40: #{_lambda_.19} parent=5 // pred_fallthru
      _
    %p1527 = scmp.le.s32.totalorder 2, %s13
    // Predicated region
    $region45: #{_lambda_.19} parent=5 // pred_check
      %p1528 = pneg %p1527
    $region46: #{_lambda_.19} parent=5 // pred_check_branch
      %1530 = sbr.rel (%p1528) target = $region48
    $region47: #{_lambda_.19} parent=5 // pred_region
      %s1531 = ssub.s32 %s13, 2
      // Predicated region
      $region49: #{_lambda_.19} parent=47 // pred_check
        %p1532 = pneg %p152
      $region50: #{_lambda_.19} parent=47 // pred_check_branch
        %1534 = sbr.rel (%p1532) target = $region52
      $region51: #{_lambda_.19} parent=47 // pred_region
        %p1535 = scmp.lt.s32.totalorder %s19, 1
        %s1536 = scalar_select %p1535, %s19, 1
        %s1537 = smul.addr %s1536, 2
        %s1538 = scalar_lea.vmem %s5, %s1537
      $region52: #{_lambda_.19} parent=47 // pred_fallthru
        _
    $region48: #{_lambda_.19} parent=5 // pred_fallthru
      _
  $region6: #{_lambda_.19} parent=0 // loop_footer
    %s17 = sadd.s32 1, %s13
  $region7: #{_lambda_.19} parent=0 // loop_footer_branch
    %12 = sbr.rel target = $region3
  $region8: #{_lambda_.19} parent=0 // loop_exit
    _

</llo_original>
